<compile_context>
chip_gen: v7x
topology: tpu7x:2x2x1
jax: 0.10.0
libtpu: 0.0.40
codegen_flags: <defaults>
</compile_context>

<pallas_src>
import functools
import math

import jax
import jax.numpy as jnp
import numpy as np
from jax.experimental import pallas as pl
from jax.experimental.pallas import tpu as pltpu


# ---------------------------------------------------------------------------
# Tiling helper
# ---------------------------------------------------------------------------
def _tile(dim, pref):
    """Full dim if it fits, else `pref` (multiple of 8/128) when it divides evenly."""
    if dim <= pref:
        return dim
    return pref if dim % pref == 0 else dim  # TODO(synk): pad for non-divisible large dims


# ---------------------------------------------------------------------------
# Tiled matmul (+ bias, optional ReLU)  — used for QKV / Q / KV projections
# ---------------------------------------------------------------------------
def _matmul_bias_kernel(x_ref, w_ref, b_ref, o_ref, acc_ref, *, relu):
    k = pl.program_id(2)

    @pl.when(k == 0)
    def _():
        acc_ref[...] = jnp.zeros_like(acc_ref)

    acc_ref[...] += jnp.dot(x_ref[...], w_ref[...], preferred_element_type=jnp.float32)

    @pl.when(k == pl.num_programs(2) - 1)
    def _():
        r = acc_ref[...] + b_ref[...]
        if relu:
            r = jnp.maximum(r, 0.0)
        o_ref[...] = r.astype(o_ref.dtype)


def matmul_bias(x, w, b, relu=False, tm=256, tn=256, tk=512):
    """x: [M, K] @ w: [K, N] + b: [N] -> [M, N]."""
    M, K = x.shape
    N = w.shape[1]
    bm, bn, bk = _tile(M, tm), _tile(N, tn), _tile(K, tk)
    return pl.pallas_call(
        functools.partial(_matmul_bias_kernel, relu=relu),
        out_shape=jax.ShapeDtypeStruct((M, N), x.dtype),
        grid=(M // bm, N // bn, K // bk),
        in_specs=[
            pl.BlockSpec((bm, bk), lambda m, n, k: (m, k)),
            pl.BlockSpec((bk, bn), lambda m, n, k: (k, n)),
            pl.BlockSpec((1, bn), lambda m, n, k: (0, n)),
        ],
        out_specs=pl.BlockSpec((bm, bn), lambda m, n, k: (m, n)),
        scratch_shapes=[pltpu.VMEM((bm, bn), jnp.float32)],
        compiler_params=pltpu.CompilerParams(
            dimension_semantics=("parallel", "parallel", "arbitrary")),
    )(x, w, b.reshape(1, N))


# ---------------------------------------------------------------------------
# Attention core (runs on one batch tile inside the kernel)
# ---------------------------------------------------------------------------
def _attn_core(q, k, v, add_mask, num_heads, scale):
    """q: [Sq, D], k/v: [Sk, D], add_mask: [Sq, Sk] additive (0 / -1e9)."""
    d_model = q.shape[-1]
    dh = d_model // num_heads
    outs = []
    for h in range(num_heads):           # static unroll over heads (in-kernel head split)
        lo = h * dh
        qh = q[:, lo:lo + dh]
        kh = k[:, lo:lo + dh]
        vh = v[:, lo:lo + dh]
        # contract over head dim of both operands (no explicit K transpose)
        s = jax.lax.dot_general(qh, kh, (((1,), (1,)), ((), ())),
                                preferred_element_type=jnp.float32) * scale
        s = s + add_mask
        s = s - jnp.max(s, axis=-1, keepdims=True)
        p = jnp.exp(s)
        denom = jnp.sum(p, axis=-1, keepdims=True)
        p = p * pl.reciprocal(denom, approx=True)       # EUP slot
        outs.append(jnp.dot(p, vh, preferred_element_type=jnp.float32))
    return jnp.concatenate(outs, axis=-1)                # lane-dense [Sq, D]


def _self_attn_kernel(qkv_ref, mask_ref, o_ref, *, num_heads, d_model, scale):
    qkv = qkv_ref[0]                                     # [S, 3D]
    q = qkv[:, :d_model]
    k = qkv[:, d_model:2 * d_model]
    v = qkv[:, 2 * d_model:]
    o_ref[0] = _attn_core(q, k, v, mask_ref[...], num_heads, scale).astype(o_ref.dtype)


def _cross_attn_kernel(q_ref, kv_ref, mask_ref, o_ref, *, num_heads, d_model, scale):
    q = q_ref[0]                                         # [Sq, D]
    kv = kv_ref[0]                                       # [Sk, 2D]
    k = kv[:, :d_model]
    v = kv[:, d_model:]
    o_ref[0] = _attn_core(q, k, v, mask_ref[...], num_heads, scale).astype(o_ref.dtype)


def self_attention(qkv, add_mask, num_heads):
    """qkv: [B, S, 3D] (fused Q|K|V projection), add_mask: [S, S] -> [B, S, D]."""
    B, S, D3 = qkv.shape
    D = D3 // 3
    return pl.pallas_call(
        functools.partial(_self_attn_kernel, num_heads=num_heads, d_model=D,
                          scale=1.0 / math.sqrt(D // num_heads)),
        out_shape=jax.ShapeDtypeStruct((B, S, D), qkv.dtype),
        grid=(B,),
        in_specs=[
            pl.BlockSpec((1, S, D3), lambda b: (b, 0, 0)),
            pl.BlockSpec((S, S), lambda b: (0, 0)),
        ],
        out_specs=pl.BlockSpec((1, S, D), lambda b: (b, 0, 0)),
        compiler_params=pltpu.CompilerParams(dimension_semantics=("parallel",)),
    )(qkv, add_mask)


def cross_attention(q, kv, add_mask, num_heads):
    """q: [B, Sq, D], kv: [B, Sk, 2D] (fused K|V projection), add_mask: [Sq, Sk]."""
    B, Sq, D = q.shape
    Sk = kv.shape[1]
    return pl.pallas_call(
        functools.partial(_cross_attn_kernel, num_heads=num_heads, d_model=D,
                          scale=1.0 / math.sqrt(D // num_heads)),
        out_shape=jax.ShapeDtypeStruct((B, Sq, D), q.dtype),
        grid=(B,),
        in_specs=[
            pl.BlockSpec((1, Sq, D), lambda b: (b, 0, 0)),
            pl.BlockSpec((1, Sk, 2 * D), lambda b: (b, 0, 0)),
            pl.BlockSpec((Sq, Sk), lambda b: (0, 0)),
        ],
        out_specs=pl.BlockSpec((1, Sq, D), lambda b: (b, 0, 0)),
        compiler_params=pltpu.CompilerParams(dimension_semantics=("parallel",)),
    )(q, kv, add_mask)


# ---------------------------------------------------------------------------
# Fused output projection + residual add + LayerNorm
# ---------------------------------------------------------------------------
def _proj_residual_ln_kernel(a_ref, w_ref, b_ref, res_ref, g_ref, be_ref, o_ref, *, eps):
    y = jnp.dot(a_ref[...], w_ref[...], preferred_element_type=jnp.float32)
    h = y + b_ref[...] + res_ref[...]
    mean = jnp.mean(h, axis=-1, keepdims=True)
    c = h - mean
    var = jnp.mean(c * c, axis=-1, keepdims=True)
    o_ref[...] = (c * jax.lax.rsqrt(var + eps) * g_ref[...] + be_ref[...]).astype(o_ref.dtype)


def proj_residual_ln(a, w, b, res, gamma, beta, eps=1e-5, tm=256):
    """LayerNorm(res + (a @ w + b)).  a/res: [M, D], w: [D, D]."""
    M, K = a.shape
    N = w.shape[1]
    bm = _tile(M, tm)
    return pl.pallas_call(
        functools.partial(_proj_residual_ln_kernel, eps=eps),
        out_shape=jax.ShapeDtypeStruct((M, N), a.dtype),
        grid=(M // bm,),
        in_specs=[
            pl.BlockSpec((bm, K), lambda m: (m, 0)),
            pl.BlockSpec((K, N), lambda m: (0, 0)),
            pl.BlockSpec((1, N), lambda m: (0, 0)),
            pl.BlockSpec((bm, N), lambda m: (m, 0)),
            pl.BlockSpec((1, N), lambda m: (0, 0)),
            pl.BlockSpec((1, N), lambda m: (0, 0)),
        ],
        out_specs=pl.BlockSpec((bm, N), lambda m: (m, 0)),
        compiler_params=pltpu.CompilerParams(dimension_semantics=("parallel",)),
    )(a, w, b.reshape(1, N), res, gamma.reshape(1, N), beta.reshape(1, N))


# ---------------------------------------------------------------------------
# Fused FFN (Linear -> ReLU -> Linear) + residual add + LayerNorm
# ---------------------------------------------------------------------------
def _ffn_residual_ln_kernel(x_ref, w1_ref, b1_ref, w2_ref, b2_ref, g_ref, be_ref,
                            o_ref, acc_ref, *, eps):
    f = pl.program_id(1)

    @pl.when(f == 0)
    def _():
        acc_ref[...] = jnp.zeros_like(acc_ref)

    # [tm, d_ff_chunk] intermediate stays in VMEM/vregs — never touches HBM
    h = jnp.dot(x_ref[...], w1_ref[...], preferred_element_type=jnp.float32) + b1_ref[...]
    h = jnp.maximum(h, 0.0)
    acc_ref[...] += jnp.dot(h, w2_ref[...], preferred_element_type=jnp.float32)

    @pl.when(f == pl.num_programs(1) - 1)
    def _():
        y = acc_ref[...] + b2_ref[...] + x_ref[...]      # bias + residual
        mean = jnp.mean(y, axis=-1, keepdims=True)
        c = y - mean
        var = jnp.mean(c * c, axis=-1, keepdims=True)
        o_ref[...] = (c * jax.lax.rsqrt(var + eps) * g_ref[...] + be_ref[...]).astype(o_ref.dtype)


def ffn_residual_ln(x, w1, b1, w2, b2, gamma, beta, eps=1e-5, tm=256, tf=512):
    """LayerNorm(x + relu(x@w1 + b1) @ w2 + b2).  x: [M, D]."""
    M, D = x.shape
    F = w1.shape[1]
    bm, bf = _tile(M, tm), _tile(F, tf)
    return pl.pallas_call(
        functools.partial(_ffn_residual_ln_kernel, eps=eps),
        out_shape=jax.ShapeDtypeStruct((M, D), x.dtype),
        grid=(M // bm, F // bf),
        in_specs=[
            pl.BlockSpec((bm, D), lambda m, f: (m, 0)),
            pl.BlockSpec((D, bf), lambda m, f: (0, f)),
            pl.BlockSpec((1, bf), lambda m, f: (0, f)),
            pl.BlockSpec((bf, D), lambda m, f: (f, 0)),
            pl.BlockSpec((1, D), lambda m, f: (0, 0)),
            pl.BlockSpec((1, D), lambda m, f: (0, 0)),
            pl.BlockSpec((1, D), lambda m, f: (0, 0)),
        ],
        out_specs=pl.BlockSpec((bm, D), lambda m, f: (m, 0)),
        scratch_shapes=[pltpu.VMEM((bm, D), jnp.float32)],
        compiler_params=pltpu.CompilerParams(
            dimension_semantics=("parallel", "arbitrary")),
    )(x, w1, b1.reshape(1, F), w2, b2.reshape(1, D),
      gamma.reshape(1, D), beta.reshape(1, D))


# ---------------------------------------------------------------------------
# DecoderLayer forward
# ---------------------------------------------------------------------------
def _additive_mask(mask, sq, sk, dtype=jnp.float32):
    """Convert a 0/1 mask into an additive 0/-1e9 mask (None -> no masking)."""
    if mask is None:
        return jnp.zeros((sq, sk), dtype)
    return jnp.where(mask == 0, jnp.asarray(-1e9, dtype), jnp.asarray(0.0, dtype))


def decoder_layer(x, enc_out, src_mask, tgt_mask, params, num_heads):
    B, S, D = x.shape
    Se = enc_out.shape[1]
    M = B * S

    sp, ep = params["self_mha"], params["enc_mha"]
    tgt_add = _additive_mask(tgt_mask, S, S, x.dtype)
    src_add = _additive_mask(src_mask, S, Se, x.dtype)

    # 1) masked self-attention (fused QKV projection) + residual + LN
    wqkv = jnp.concatenate([sp["wq"], sp["wk"], sp["wv"]], axis=1)        # [D, 3D]
    bqkv = jnp.concatenate([sp["bq"], sp["bk"], sp["bv"]])
    qkv = matmul_bias(x.reshape(M, D), wqkv, bqkv)                        # [M, 3D]
    attn = self_attention(qkv.reshape(B, S, 3 * D), tgt_add, num_heads)   # [B, S, D]
    x = proj_residual_ln(attn.reshape(M, D), sp["wo"], sp["bo"],
                         x.reshape(M, D), params["ln1_g"], params["ln1_b"]).reshape(B, S, D)

    # 2) encoder-decoder attention (fused KV projection) + residual + LN
    q = matmul_bias(x.reshape(M, D), ep["wq"], ep["bq"])                  # [M, D]
    wkv = jnp.concatenate([ep["wk"], ep["wv"]], axis=1)                   # [D, 2D]
    bkv = jnp.concatenate([ep["bk"], ep["bv"]])
    kv = matmul_bias(enc_out.reshape(B * Se, D), wkv, bkv)                # [B*Se, 2D]
    attn = cross_attention(q.reshape(B, S, D), kv.reshape(B, Se, 2 * D), src_add, num_heads)
    x = proj_residual_ln(attn.reshape(M, D), ep["wo"], ep["bo"],
                         x.reshape(M, D), params["ln2_g"], params["ln2_b"]).reshape(B, S, D)

    # 3) fused feed-forward + residual + LN
    x = ffn_residual_ln(x.reshape(M, D), params["ff_w1"], params["ff_b1"],
                        params["ff_w2"], params["ff_b2"],
                        params["ln3_g"], params["ln3_b"]).reshape(B, S, D)
    return x


# ---------------------------------------------------------------------------
# Pure-JAX reference (for correctness check)
# ---------------------------------------------------------------------------
def ref_mha(x_q, x_k, x_v, mask, p, num_heads):
    B, Sq, D = x_q.shape
    Sk = x_k.shape[1]
    dh = D // num_heads
    q = (x_q @ p["wq"] + p["bq"]).reshape(B, Sq, num_heads, dh).transpose(0, 2, 1, 3)
    k = (x_k @ p["wk"] + p["bk"]).reshape(B, Sk, num_heads, dh).transpose(0, 2, 1, 3)
    v = (x_v @ p["wv"] + p["bv"]).reshape(B, Sk, num_heads, dh).transpose(0, 2, 1, 3)
    s = jnp.einsum("bhqd,bhkd->bhqk", q, k) / math.sqrt(dh)
    s = jnp.where(mask[None, None] == 0.0, -1e9, s)
    p_attn = jax.nn.softmax(s, axis=-1)
    o = jnp.einsum("bhqk,bhkd->bhqd", p_attn, v)
    o = o.transpose(0, 2, 1, 3).reshape(B, Sq, D)
    return o @ p["wo"] + p["bo"]


def ref_ln(h, g, b, eps=1e-5):
    m = jnp.mean(h, axis=-1, keepdims=True)
    v = jnp.mean((h - m) ** 2, axis=-1, keepdims=True)
    return (h - m) * jax.lax.rsqrt(v + eps) * g + b


def ref_decoder_layer(x, enc, src_mask, tgt_mask, P, H):
    x = ref_ln(x + ref_mha(x, x, x, tgt_mask, P["self_mha"], H), P["ln1_g"], P["ln1_b"])
    x = ref_ln(x + ref_mha(x, enc, enc, src_mask, P["enc_mha"], H), P["ln2_g"], P["ln2_b"])
    f = jnp.maximum(x @ P["ff_w1"] + P["ff_b1"], 0.0) @ P["ff_w2"] + P["ff_b2"]
    return ref_ln(x + f, P["ln3_g"], P["ln3_b"])


# ---------------------------------------------------------------------------
# Deterministic parameter init
# ---------------------------------------------------------------------------
def init_params(key, d_model, d_ff):
    def dense(k, fan_in, fan_out):
        kw, kb = jax.random.split(k)
        scale = 1.0 / math.sqrt(fan_in)
        w = jax.random.uniform(kw, (fan_in, fan_out), jnp.float32, -scale, scale)
        b = jax.random.uniform(kb, (fan_out,), jnp.float32, -scale, scale)
        return w, b

    keys = jax.random.split(key, 12)

    def mha_params(ks):
        wq, bq = dense(ks[0], d_model, d_model)
        wk, bk = dense(ks[1], d_model, d_model)
        wv, bv = dense(ks[2], d_model, d_model)
        wo, bo = dense(ks[3], d_model, d_model)
        return dict(wq=wq, bq=bq, wk=wk, bk=bk, wv=wv, bv=bv, wo=wo, bo=bo)

    ff_w1, ff_b1 = dense(keys[8], d_model, d_ff)
    ff_w2, ff_b2 = dense(keys[9], d_ff, d_model)

    return dict(
        self_mha=mha_params(keys[0:4]),
        enc_mha=mha_params(keys[4:8]),
        ff_w1=ff_w1, ff_b1=ff_b1, ff_w2=ff_w2, ff_b2=ff_b2,
        ln1_g=jnp.ones((d_model,), jnp.float32), ln1_b=jnp.zeros((d_model,), jnp.float32),
        ln2_g=jnp.ones((d_model,), jnp.float32), ln2_b=jnp.zeros((d_model,), jnp.float32),
        ln3_g=jnp.ones((d_model,), jnp.float32), ln3_b=jnp.zeros((d_model,), jnp.float32),
    )


if __name__ == "__main__":
    B, S, D, H, DFF = 2, 8, 32, 4, 64

    key = jax.random.PRNGKey(0)
    k_x, k_enc, k_p = jax.random.split(key, 3)
    x = jax.random.normal(k_x, (B, S, D), jnp.float32)
    enc_out = jax.random.normal(k_enc, (B, S, D), jnp.float32)
    params = init_params(k_p, D, DFF)

    # tgt_mask: causal lower-triangular; src_mask: all-ones (no masking)
    tgt_mask = jnp.tril(jnp.ones((S, S), jnp.float32))
    src_mask = jnp.ones((S, S), jnp.float32)

    fwd = jax.jit(decoder_layer, static_argnums=(5,))
    out = fwd(x, enc_out, src_mask, tgt_mask, params, H)
    out = jax.block_until_ready(out)

    ref = ref_decoder_layer(x, enc_out, src_mask, tgt_mask, params, H)
    # tolerance loosened slightly because the softmax normalizer uses the
    # approximate EUP reciprocal (pl.reciprocal(approx=True)).
    np.testing.assert_allclose(np.asarray(out), np.asarray(ref), rtol=5e-3, atol=5e-3)

    print("KERNEL_OK")
</pallas_src>

<mosaic_0001>
module attributes {stable_mosaic.version = 11 : i64} {
  func.func @_matmul_bias_kernel(%arg0: i32, %arg1: i32, %arg2: i32, %arg3: memref<16x32xf32, #tpu.memory_space<vmem>>, %arg4: memref<32x64xf32, #tpu.memory_space<vmem>>, %arg5: memref<1x64xf32, #tpu.memory_space<vmem>>, %arg6: memref<16x64xf32, #tpu.memory_space<vmem>>, %arg7: memref<16x64xf32, #tpu.memory_space<vmem>>) attributes {dimension_semantics = [#tpu.dimension_semantics<parallel>, #tpu.dimension_semantics<parallel>, #tpu.dimension_semantics<arbitrary>], iteration_bounds = array<i64: 1, 1, 1>, scalar_prefetch = 0 : i64, scratch_operands = 1 : i64, tpu.core_type = #tpu.core_type<tc>, window_params = [{transform_indices = @transform_0, window_bounds = array<i64: 16, 32>}, {transform_indices = @transform_1, window_bounds = array<i64: 32, 64>}, {transform_indices = @transform_2, window_bounds = array<i64: 1, 64>}, {transform_indices = @transform_3, window_bounds = array<i64: 16, 64>}]} {
    %c0_i32 = arith.constant 0 : i32
    %0 = arith.cmpi eq, %arg2, %c0_i32 : i32
    %1 = arith.extui %0 : i1 to i32
    %c0_i32_0 = arith.constant 0 : i32
    %2 = arith.cmpi ne, %1, %c0_i32_0 : i32
    scf.if %2 {
      %cst_10 = arith.constant 0.000000e+00 : f32
      %12 = vector.broadcast %cst_10 : f32 to vector<16x64xf32>
      %c0_11 = arith.constant 0 : index
      %c0_12 = arith.constant 0 : index
      %13 = vector.load %arg7[%c0_11, %c0_12] : memref<16x64xf32, #tpu.memory_space<vmem>>, vector<16x64xf32>
      tpu.vector_store %arg7[%c0_11, %c0_12], %12 {strides = array<i32>} : memref<16x64xf32, #tpu.memory_space<vmem>>, vector<16x64xf32>,
    } else {
    }
    %c0 = arith.constant 0 : index
    %c0_1 = arith.constant 0 : index
    %3 = vector.load %arg7[%c0, %c0_1] : memref<16x64xf32, #tpu.memory_space<vmem>>, vector<16x64xf32>
    %c0_2 = arith.constant 0 : index
    %c0_3 = arith.constant 0 : index
    %4 = vector.load %arg3[%c0_2, %c0_3] : memref<16x32xf32, #tpu.memory_space<vmem>>, vector<16x32xf32>
    %c0_4 = arith.constant 0 : index
    %c0_5 = arith.constant 0 : index
    %5 = vector.load %arg4[%c0_4, %c0_5] : memref<32x64xf32, #tpu.memory_space<vmem>>, vector<32x64xf32>
    %cst = arith.constant dense<0.000000e+00> : vector<16x64xf32>
    %6 = tpu.matmul %4, %5, %cst {dimension_numbers = #tpu.dot_dimension_numbers<[1], [0], [0], [1], [0, 0, 1, 1], [], []>} : vector<16x32xf32>, vector<32x64xf32>, vector<16x64xf32> -> vector<16x64xf32>
    %7 = arith.addf %3, %6 : vector<16x64xf32>
    %c0_6 = arith.constant 0 : index
    %c0_7 = arith.constant 0 : index
    %8 = vector.load %arg7[%c0_6, %c0_7] : memref<16x64xf32, #tpu.memory_space<vmem>>, vector<16x64xf32>
    tpu.vector_store %arg7[%c0_6, %c0_7], %7 {strides = array<i32>} : memref<16x64xf32, #tpu.memory_space<vmem>>, vector<16x64xf32>,
    %c0_i32_8 = arith.constant 0 : i32
    %9 = arith.cmpi eq, %arg2, %c0_i32_8 : i32
    %10 = arith.extui %9 : i1 to i32
    %c0_i32_9 = arith.constant 0 : i32
    %11 = arith.cmpi ne, %10, %c0_i32_9 : i32
    scf.if %11 {
      %c0_10 = arith.constant 0 : index
      %c0_11 = arith.constant 0 : index
      %12 = vector.load %arg7[%c0_10, %c0_11] : memref<16x64xf32, #tpu.memory_space<vmem>>, vector<16x64xf32>
      %c0_12 = arith.constant 0 : index
      %c0_13 = arith.constant 0 : index
      %13 = vector.load %arg5[%c0_12, %c0_13] : memref<1x64xf32, #tpu.memory_space<vmem>>, vector<1x64xf32>
      %14 = vector.broadcast %13 : vector<1x64xf32> to vector<16x64xf32>
      %15 = arith.addf %12, %14 : vector<16x64xf32>
      %c0_14 = arith.constant 0 : index
      %c0_15 = arith.constant 0 : index
      %16 = vector.load %arg6[%c0_14, %c0_15] : memref<16x64xf32, #tpu.memory_space<vmem>>, vector<16x64xf32>
      tpu.vector_store %arg6[%c0_14, %c0_15], %15 {strides = array<i32>} : memref<16x64xf32, #tpu.memory_space<vmem>>, vector<16x64xf32>,
    } else {
    }
    return
  }
  func.func @transform_0(%arg0: i32, %arg1: i32, %arg2: i32) -> (i32, i32) {
    %c0_i32 = arith.constant 0 : i32
    return %arg0, %arg2 : i32, i32
  }
  func.func @transform_1(%arg0: i32, %arg1: i32, %arg2: i32) -> (i32, i32) {
    %c0_i32 = arith.constant 0 : i32
    return %arg2, %arg1 : i32, i32
  }
  func.func @transform_2(%arg0: i32, %arg1: i32, %arg2: i32) -> (i32, i32) {
    %c0_i32 = arith.constant 0 : i32
    %c0_i32_0 = arith.constant 0 : i32
    return %c0_i32, %arg1 : i32, i32
  }
  func.func @transform_3(%arg0: i32, %arg1: i32, %arg2: i32) -> (i32, i32) {
    %c0_i32 = arith.constant 0 : i32
    return %arg0, %arg1 : i32, i32
  }
}

module attributes {stable_mosaic.version = 11 : i64} {
  func.func @_matmul_bias_kernel(%arg0: i32, %arg1: i32, %arg2: i32, %arg3: memref<16x32xf32, #tpu.memory_space<vmem>>, %arg4: memref<32x96xf32, #tpu.memory_space<vmem>>, %arg5: memref<1x96xf32, #tpu.memory_space<vmem>>, %arg6: memref<16x96xf32, #tpu.memory_space<vmem>>, %arg7: memref<16x96xf32, #tpu.memory_space<vmem>>) attributes {dimension_semantics = [#tpu.dimension_semantics<parallel>, #tpu.dimension_semantics<parallel>, #tpu.dimension_semantics<arbitrary>], iteration_bounds = array<i64: 1, 1, 1>, scalar_prefetch = 0 : i64, scratch_operands = 1 : i64, tpu.core_type = #tpu.core_type<tc>, window_params = [{transform_indices = @transform_0, window_bounds = array<i64: 16, 32>}, {transform_indices = @transform_1, window_bounds = array<i64: 32, 96>}, {transform_indices = @transform_2, window_bounds = array<i64: 1, 96>}, {transform_indices = @transform_3, window_bounds = array<i64: 16, 96>}]} {
    %c0_i32 = arith.constant 0 : i32
    %0 = arith.cmpi eq, %arg2, %c0_i32 : i32
    %1 = arith.extui %0 : i1 to i32
    %c0_i32_0 = arith.constant 0 : i32
    %2 = arith.cmpi ne, %1, %c0_i32_0 : i32
    scf.if %2 {
      %cst_10 = arith.constant 0.000000e+00 : f32
      %12 = vector.broadcast %cst_10 : f32 to vector<16x96xf32>
      %c0_11 = arith.constant 0 : index
      %c0_12 = arith.constant 0 : index
      %13 = vector.load %arg7[%c0_11, %c0_12] : memref<16x96xf32, #tpu.memory_space<vmem>>, vector<16x96xf32>
      tpu.vector_store %arg7[%c0_11, %c0_12], %12 {strides = array<i32>} : memref<16x96xf32, #tpu.memory_space<vmem>>, vector<16x96xf32>,
    } else {
    }
    %c0 = arith.constant 0 : index
    %c0_1 = arith.constant 0 : index
    %3 = vector.load %arg7[%c0, %c0_1] : memref<16x96xf32, #tpu.memory_space<vmem>>, vector<16x96xf32>
    %c0_2 = arith.constant 0 : index
    %c0_3 = arith.constant 0 : index
    %4 = vector.load %arg3[%c0_2, %c0_3] : memref<16x32xf32, #tpu.memory_space<vmem>>, vector<16x32xf32>
    %c0_4 = arith.constant 0 : index
    %c0_5 = arith.constant 0 : index
    %5 = vector.load %arg4[%c0_4, %c0_5] : memref<32x96xf32, #tpu.memory_space<vmem>>, vector<32x96xf32>
    %cst = arith.constant dense<0.000000e+00> : vector<16x96xf32>
    %6 = tpu.matmul %4, %5, %cst {dimension_numbers = #tpu.dot_dimension_numbers<[1], [0], [0], [1], [0, 0, 1, 1], [], []>} : vector<16x32xf32>, vector<32x96xf32>, vector<16x96xf32> -> vector<16x96xf32>
    %7 = arith.addf %3, %6 : vector<16x96xf32>
    %c0_6 = arith.constant 0 : index
    %c0_7 = arith.constant 0 : index
    %8 = vector.load %arg7[%c0_6, %c0_7] : memref<16x96xf32, #tpu.memory_space<vmem>>, vector<16x96xf32>
    tpu.vector_store %arg7[%c0_6, %c0_7], %7 {strides = array<i32>} : memref<16x96xf32, #tpu.memory_space<vmem>>, vector<16x96xf32>,
    %c0_i32_8 = arith.constant 0 : i32
    %9 = arith.cmpi eq, %arg2, %c0_i32_8 : i32
    %10 = arith.extui %9 : i1 to i32
    %c0_i32_9 = arith.constant 0 : i32
    %11 = arith.cmpi ne, %10, %c0_i32_9 : i32
    scf.if %11 {
      %c0_10 = arith.constant 0 : index
      %c0_11 = arith.constant 0 : index
      %12 = vector.load %arg7[%c0_10, %c0_11] : memref<16x96xf32, #tpu.memory_space<vmem>>, vector<16x96xf32>
      %c0_12 = arith.constant 0 : index
      %c0_13 = arith.constant 0 : index
      %13 = vector.load %arg5[%c0_12, %c0_13] : memref<1x96xf32, #tpu.memory_space<vmem>>, vector<1x96xf32>
      %14 = vector.broadcast %13 : vector<1x96xf32> to vector<16x96xf32>
      %15 = arith.addf %12, %14 : vector<16x96xf32>
      %c0_14 = arith.constant 0 : index
      %c0_15 = arith.constant 0 : index
      %16 = vector.load %arg6[%c0_14, %c0_15] : memref<16x96xf32, #tpu.memory_space<vmem>>, vector<16x96xf32>
      tpu.vector_store %arg6[%c0_14, %c0_15], %15 {strides = array<i32>} : memref<16x96xf32, #tpu.memory_space<vmem>>, vector<16x96xf32>,
    } else {
    }
    return
  }
  func.func @transform_0(%arg0: i32, %arg1: i32, %arg2: i32) -> (i32, i32) {
    %c0_i32 = arith.constant 0 : i32
    return %arg0, %arg2 : i32, i32
  }
  func.func @transform_1(%arg0: i32, %arg1: i32, %arg2: i32) -> (i32, i32) {
    %c0_i32 = arith.constant 0 : i32
    return %arg2, %arg1 : i32, i32
  }
  func.func @transform_2(%arg0: i32, %arg1: i32, %arg2: i32) -> (i32, i32) {
    %c0_i32 = arith.constant 0 : i32
    %c0_i32_0 = arith.constant 0 : i32
    return %c0_i32, %arg1 : i32, i32
  }
  func.func @transform_3(%arg0: i32, %arg1: i32, %arg2: i32) -> (i32, i32) {
    %c0_i32 = arith.constant 0 : i32
    return %arg0, %arg1 : i32, i32
  }
}

module attributes {stable_mosaic.version = 11 : i64} {
  func.func @_self_attn_kernel(%arg0: i32, %arg1: memref<1x8x96xf32, #tpu.memory_space<vmem>>, %arg2: memref<8x8xf32, #tpu.memory_space<vmem>>, %arg3: memref<1x8x32xf32, #tpu.memory_space<vmem>>) attributes {dimension_semantics = [#tpu.dimension_semantics<parallel>], iteration_bounds = array<i64: 2>, scalar_prefetch = 0 : i64, scratch_operands = 0 : i64, tpu.core_type = #tpu.core_type<tc>, window_params = [{transform_indices = @transform_0, window_bounds = array<i64: 1, 8, 96>}, {pipeline_mode = #tpu.pipeline_mode<synchronous>, transform_indices = @transform_1, window_bounds = array<i64: 8, 8>}, {transform_indices = @transform_2, window_bounds = array<i64: 1, 8, 32>}]} {
    %c0 = arith.constant 0 : index
    %c0_0 = arith.constant 0 : index
    %c0_1 = arith.constant 0 : index
    %0 = vector.load %arg1[%c0, %c0_0, %c0_1] : memref<1x8x96xf32, #tpu.memory_space<vmem>>, vector<1x8x96xf32>
    %1 = vector.shape_cast %0 : vector<1x8x96xf32> to vector<8x96xf32>
    %2 = vector.extract_strided_slice %1 {offsets = [0, 0], sizes = [8, 32], strides = [1, 1]} : vector<8x96xf32> to vector<8x32xf32>
    %3 = vector.extract_strided_slice %1 {offsets = [0, 32], sizes = [8, 32], strides = [1, 1]} : vector<8x96xf32> to vector<8x32xf32>
    %4 = vector.extract_strided_slice %1 {offsets = [0, 64], sizes = [8, 32], strides = [1, 1]} : vector<8x96xf32> to vector<8x32xf32>
    %c0_2 = arith.constant 0 : index
    %c0_3 = arith.constant 0 : index
    %5 = vector.load %arg2[%c0_2, %c0_3] : memref<8x8xf32, #tpu.memory_space<vmem>>, vector<8x8xf32>
    %6 = vector.extract_strided_slice %2 {offsets = [0, 0], sizes = [8, 8], strides = [1, 1]} : vector<8x32xf32> to vector<8x8xf32>
    %7 = vector.extract_strided_slice %3 {offsets = [0, 0], sizes = [8, 8], strides = [1, 1]} : vector<8x32xf32> to vector<8x8xf32>
    %8 = vector.extract_strided_slice %4 {offsets = [0, 0], sizes = [8, 8], strides = [1, 1]} : vector<8x32xf32> to vector<8x8xf32>
    %cst = arith.constant dense<0.000000e+00> : vector<8x8xf32>
    %9 = tpu.matmul %6, %7, %cst {dimension_numbers = #tpu.dot_dimension_numbers<[1], [1], [0], [0], [0, 0, 1, 0], [], []>} : vector<8x8xf32>, vector<8x8xf32>, vector<8x8xf32> -> vector<8x8xf32>
    %cst_4 = arith.constant 0.353553385 : f32
    %10 = vector.broadcast %cst_4 : f32 to vector<8x8xf32>
    %11 = arith.mulf %9, %10 : vector<8x8xf32>
    %12 = arith.addf %11, %5 : vector<8x8xf32>
    %cst_5 = arith.constant dense<0xFF800000> : vector<8xf32>
    %13 = vector.multi_reduction <maximumf>, %12, %cst_5 [1] : vector<8x8xf32> to vector<8xf32>
    %14 = vector.shape_cast %13 : vector<8xf32> to vector<8x1xf32>
    %15 = vector.broadcast %14 : vector<8x1xf32> to vector<8x8xf32>
    %16 = arith.subf %12, %15 : vector<8x8xf32>
    %17 = math.exp %16 : vector<8x8xf32>
    %cst_6 = arith.constant dense<0.000000e+00> : vector<8xf32>
    %18 = vector.multi_reduction <add>, %17, %cst_6 [1] : vector<8x8xf32> to vector<8xf32>
    %19 = vector.shape_cast %18 : vector<8xf32> to vector<8x1xf32>
    %20 = tpu.reciprocal %19 {approx = true} : vector<8x1xf32> -> vector<8x1xf32>
    %21 = vector.broadcast %20 : vector<8x1xf32> to vector<8x8xf32>
    %22 = arith.mulf %17, %21 : vector<8x8xf32>
    %cst_7 = arith.constant dense<0.000000e+00> : vector<8x8xf32>
    %23 = tpu.matmul %22, %8, %cst_7 {dimension_numbers = #tpu.dot_dimension_numbers<[1], [0], [0], [1], [0, 0, 1, 1], [], []>} : vector<8x8xf32>, vector<8x8xf32>, vector<8x8xf32> -> vector<8x8xf32>
    %24 = vector.extract_strided_slice %2 {offsets = [0, 8], sizes = [8, 8], strides = [1, 1]} : vector<8x32xf32> to vector<8x8xf32>
    %25 = vector.extract_strided_slice %3 {offsets = [0, 8], sizes = [8, 8], strides = [1, 1]} : vector<8x32xf32> to vector<8x8xf32>
    %26 = vector.extract_strided_slice %4 {offsets = [0, 8], sizes = [8, 8], strides = [1, 1]} : vector<8x32xf32> to vector<8x8xf32>
    %cst_8 = arith.constant dense<0.000000e+00> : vector<8x8xf32>
    %27 = tpu.matmul %24, %25, %cst_8 {dimension_numbers = #tpu.dot_dimension_numbers<[1], [1], [0], [0], [0, 0, 1, 0], [], []>} : vector<8x8xf32>, vector<8x8xf32>, vector<8x8xf32> -> vector<8x8xf32>
    %cst_9 = arith.constant 0.353553385 : f32
    %28 = vector.broadcast %cst_9 : f32 to vector<8x8xf32>
    %29 = arith.mulf %27, %28 : vector<8x8xf32>
    %30 = arith.addf %29, %5 : vector<8x8xf32>
    %cst_10 = arith.constant dense<0xFF800000> : vector<8xf32>
    %31 = vector.multi_reduction <maximumf>, %30, %cst_10 [1] : vector<8x8xf32> to vector<8xf32>
    %32 = vector.shape_cast %31 : vector<8xf32> to vector<8x1xf32>
    %33 = vector.broadcast %32 : vector<8x1xf32> to vector<8x8xf32>
    %34 = arith.subf %30, %33 : vector<8x8xf32>
    %35 = math.exp %34 : vector<8x8xf32>
    %cst_11 = arith.constant dense<0.000000e+00> : vector<8xf32>
    %36 = vector.multi_reduction <add>, %35, %cst_11 [1] : vector<8x8xf32> to vector<8xf32>
    %37 = vector.shape_cast %36 : vector<8xf32> to vector<8x1xf32>
    %38 = tpu.reciprocal %37 {approx = true} : vector<8x1xf32> -> vector<8x1xf32>
    %39 = vector.broadcast %38 : vector<8x1xf32> to vector<8x8xf32>
    %40 = arith.mulf %35, %39 : vector<8x8xf32>
    %cst_12 = arith.constant dense<0.000000e+00> : vector<8x8xf32>
    %41 = tpu.matmul %40, %26, %cst_12 {dimension_numbers = #tpu.dot_dimension_numbers<[1], [0], [0], [1], [0, 0, 1, 1], [], []>} : vector<8x8xf32>, vector<8x8xf32>, vector<8x8xf32> -> vector<8x8xf32>
    %42 = vector.extract_strided_slice %2 {offsets = [0, 16], sizes = [8, 8], strides = [1, 1]} : vector<8x32xf32> to vector<8x8xf32>
    %43 = vector.extract_strided_slice %3 {offsets = [0, 16], sizes = [8, 8], strides = [1, 1]} : vector<8x32xf32> to vector<8x8xf32>
    %44 = vector.extract_strided_slice %4 {offsets = [0, 16], sizes = [8, 8], strides = [1, 1]} : vector<8x32xf32> to vector<8x8xf32>
    %cst_13 = arith.constant dense<0.000000e+00> : vector<8x8xf32>
    %45 = tpu.matmul %42, %43, %cst_13 {dimension_numbers = #tpu.dot_dimension_numbers<[1], [1], [0], [0], [0, 0, 1, 0], [], []>} : vector<8x8xf32>, vector<8x8xf32>, vector<8x8xf32> -> vector<8x8xf32>
    %cst_14 = arith.constant 0.353553385 : f32
    %46 = vector.broadcast %cst_14 : f32 to vector<8x8xf32>
    %47 = arith.mulf %45, %46 : vector<8x8xf32>
    %48 = arith.addf %47, %5 : vector<8x8xf32>
    %cst_15 = arith.constant dense<0xFF800000> : vector<8xf32>
    %49 = vector.multi_reduction <maximumf>, %48, %cst_15 [1] : vector<8x8xf32> to vector<8xf32>
    %50 = vector.shape_cast %49 : vector<8xf32> to vector<8x1xf32>
    %51 = vector.broadcast %50 : vector<8x1xf32> to vector<8x8xf32>
    %52 = arith.subf %48, %51 : vector<8x8xf32>
    %53 = math.exp %52 : vector<8x8xf32>
    %cst_16 = arith.constant dense<0.000000e+00> : vector<8xf32>
    %54 = vector.multi_reduction <add>, %53, %cst_16 [1] : vector<8x8xf32> to vector<8xf32>
    %55 = vector.shape_cast %54 : vector<8xf32> to vector<8x1xf32>
    %56 = tpu.reciprocal %55 {approx = true} : vector<8x1xf32> -> vector<8x1xf32>
    %57 = vector.broadcast %56 : vector<8x1xf32> to vector<8x8xf32>
    %58 = arith.mulf %53, %57 : vector<8x8xf32>
    %cst_17 = arith.constant dense<0.000000e+00> : vector<8x8xf32>
    %59 = tpu.matmul %58, %44, %cst_17 {dimension_numbers = #tpu.dot_dimension_numbers<[1], [0], [0], [1], [0, 0, 1, 1], [], []>} : vector<8x8xf32>, vector<8x8xf32>, vector<8x8xf32> -> vector<8x8xf32>
    %60 = vector.extract_strided_slice %2 {offsets = [0, 24], sizes = [8, 8], strides = [1, 1]} : vector<8x32xf32> to vector<8x8xf32>
    %61 = vector.extract_strided_slice %3 {offsets = [0, 24], sizes = [8, 8], strides = [1, 1]} : vector<8x32xf32> to vector<8x8xf32>
    %62 = vector.extract_strided_slice %4 {offsets = [0, 24], sizes = [8, 8], strides = [1, 1]} : vector<8x32xf32> to vector<8x8xf32>
    %cst_18 = arith.constant dense<0.000000e+00> : vector<8x8xf32>
    %63 = tpu.matmul %60, %61, %cst_18 {dimension_numbers = #tpu.dot_dimension_numbers<[1], [1], [0], [0], [0, 0, 1, 0], [], []>} : vector<8x8xf32>, vector<8x8xf32>, vector<8x8xf32> -> vector<8x8xf32>
    %cst_19 = arith.constant 0.353553385 : f32
    %64 = vector.broadcast %cst_19 : f32 to vector<8x8xf32>
    %65 = arith.mulf %63, %64 : vector<8x8xf32>
    %66 = arith.addf %65, %5 : vector<8x8xf32>
    %cst_20 = arith.constant dense<0xFF800000> : vector<8xf32>
    %67 = vector.multi_reduction <maximumf>, %66, %cst_20 [1] : vector<8x8xf32> to vector<8xf32>
    %68 = vector.shape_cast %67 : vector<8xf32> to vector<8x1xf32>
    %69 = vector.broadcast %68 : vector<8x1xf32> to vector<8x8xf32>
    %70 = arith.subf %66, %69 : vector<8x8xf32>
    %71 = math.exp %70 : vector<8x8xf32>
    %cst_21 = arith.constant dense<0.000000e+00> : vector<8xf32>
    %72 = vector.multi_reduction <add>, %71, %cst_21 [1] : vector<8x8xf32> to vector<8xf32>
    %73 = vector.shape_cast %72 : vector<8xf32> to vector<8x1xf32>
    %74 = tpu.reciprocal %73 {approx = true} : vector<8x1xf32> -> vector<8x1xf32>
    %75 = vector.broadcast %74 : vector<8x1xf32> to vector<8x8xf32>
    %76 = arith.mulf %71, %75 : vector<8x8xf32>
    %cst_22 = arith.constant dense<0.000000e+00> : vector<8x8xf32>
    %77 = tpu.matmul %76, %62, %cst_22 {dimension_numbers = #tpu.dot_dimension_numbers<[1], [0], [0], [1], [0, 0, 1, 1], [], []>} : vector<8x8xf32>, vector<8x8xf32>, vector<8x8xf32> -> vector<8x8xf32>
    %78 = tpu.concatenate %23, %41, %59, %77 in 1 : vector<8x8xf32>, vector<8x8xf32>, vector<8x8xf32>, vector<8x8xf32> -> vector<8x32xf32>
    %c0_23 = arith.constant 0 : index
    %c0_24 = arith.constant 0 : index
    %c0_25 = arith.constant 0 : index
    %79 = vector.load %arg3[%c0_23, %c0_24, %c0_25] : memref<1x8x32xf32, #tpu.memory_space<vmem>>, vector<1x8x32xf32>
    %80 = vector.shape_cast %79 : vector<1x8x32xf32> to vector<8x32xf32>
    %81 = vector.shape_cast %78 : vector<8x32xf32> to vector<1x8x32xf32>
    tpu.vector_store %arg3[%c0_23, %c0_24, %c0_25], %81 {strides = array<i32>} : memref<1x8x32xf32, #tpu.memory_space<vmem>>, vector<1x8x32xf32>,
    return
  }
  func.func @transform_0(%arg0: i32) -> (i32, i32, i32) {
    %c0_i32 = arith.constant 0 : i32
    %c0_i32_0 = arith.constant 0 : i32
    %c0_i32_1 = arith.constant 0 : i32
    return %arg0, %c0_i32, %c0_i32_0 : i32, i32, i32
  }
  func.func @transform_1(%arg0: i32) -> (i32, i32) {
    %c0_i32 = arith.constant 0 : i32
    %c0_i32_0 = arith.constant 0 : i32
    %c0_i32_1 = arith.constant 0 : i32
    return %c0_i32, %c0_i32_0 : i32, i32
  }
  func.func @transform_2(%arg0: i32) -> (i32, i32, i32) {
    %c0_i32 = arith.constant 0 : i32
    %c0_i32_0 = arith.constant 0 : i32
    %c0_i32_1 = arith.constant 0 : i32
    return %arg0, %c0_i32, %c0_i32_0 : i32, i32, i32
  }
}

module attributes {stable_mosaic.version = 11 : i64} {
  func.func @_proj_residual_ln_kernel(%arg0: i32, %arg1: memref<16x32xf32, #tpu.memory_space<vmem>>, %arg2: memref<32x32xf32, #tpu.memory_space<vmem>>, %arg3: memref<1x32xf32, #tpu.memory_space<vmem>>, %arg4: memref<16x32xf32, #tpu.memory_space<vmem>>, %arg5: memref<1x32xf32, #tpu.memory_space<vmem>>, %arg6: memref<1x32xf32, #tpu.memory_space<vmem>>, %arg7: memref<16x32xf32, #tpu.memory_space<vmem>>) attributes {dimension_semantics = [#tpu.dimension_semantics<parallel>], iteration_bounds = array<i64: 1>, scalar_prefetch = 0 : i64, scratch_operands = 0 : i64, tpu.core_type = #tpu.core_type<tc>, window_params = [{transform_indices = @transform_0, window_bounds = array<i64: 16, 32>}, {pipeline_mode = #tpu.pipeline_mode<synchronous>, transform_indices = @transform_1, window_bounds = array<i64: 32, 32>}, {pipeline_mode = #tpu.pipeline_mode<synchronous>, transform_indices = @transform_2, window_bounds = array<i64: 1, 32>}, {transform_indices = @transform_3, window_bounds = array<i64: 16, 32>}, {pipeline_mode = #tpu.pipeline_mode<synchronous>, transform_indices = @transform_4, window_bounds = array<i64: 1, 32>}, {pipeline_mode = #tpu.pipeline_mode<synchronous>, transform_indices = @transform_5, window_bounds = array<i64: 1, 32>}, {transform_indices = @transform_6, window_bounds = array<i64: 16, 32>}]} {
    %c0 = arith.constant 0 : index
    %c0_0 = arith.constant 0 : index
    %0 = vector.load %arg1[%c0, %c0_0] : memref<16x32xf32, #tpu.memory_space<vmem>>, vector<16x32xf32>
    %c0_1 = arith.constant 0 : index
    %c0_2 = arith.constant 0 : index
    %1 = vector.load %arg2[%c0_1, %c0_2] : memref<32x32xf32, #tpu.memory_space<vmem>>, vector<32x32xf32>
    %cst = arith.constant dense<0.000000e+00> : vector<16x32xf32>
    %2 = tpu.matmul %0, %1, %cst {dimension_numbers = #tpu.dot_dimension_numbers<[1], [0], [0], [1], [0, 0, 1, 1], [], []>} : vector<16x32xf32>, vector<32x32xf32>, vector<16x32xf32> -> vector<16x32xf32>
    %c0_3 = arith.constant 0 : index
    %c0_4 = arith.constant 0 : index
    %3 = vector.load %arg3[%c0_3, %c0_4] : memref<1x32xf32, #tpu.memory_space<vmem>>, vector<1x32xf32>
    %4 = vector.broadcast %3 : vector<1x32xf32> to vector<16x32xf32>
    %5 = arith.addf %2, %4 : vector<16x32xf32>
    %c0_5 = arith.constant 0 : index
    %c0_6 = arith.constant 0 : index
    %6 = vector.load %arg4[%c0_5, %c0_6] : memref<16x32xf32, #tpu.memory_space<vmem>>, vector<16x32xf32>
    %7 = arith.addf %5, %6 : vector<16x32xf32>
    %cst_7 = arith.constant dense<0.000000e+00> : vector<16xf32>
    %8 = vector.multi_reduction <add>, %7, %cst_7 [1] : vector<16x32xf32> to vector<16xf32>
    %9 = vector.shape_cast %8 : vector<16xf32> to vector<16x1xf32>
    %cst_8 = arith.constant 3.200000e+01 : f32
    %10 = vector.broadcast %cst_8 : f32 to vector<16x1xf32>
    %11 = arith.divf %9, %10 : vector<16x1xf32>
    %12 = vector.broadcast %11 : vector<16x1xf32> to vector<16x32xf32>
    %13 = arith.subf %7, %12 : vector<16x32xf32>
    %14 = arith.mulf %13, %13 : vector<16x32xf32>
    %cst_9 = arith.constant dense<0.000000e+00> : vector<16xf32>
    %15 = vector.multi_reduction <add>, %14, %cst_9 [1] : vector<16x32xf32> to vector<16xf32>
    %16 = vector.shape_cast %15 : vector<16xf32> to vector<16x1xf32>
    %cst_10 = arith.constant 3.200000e+01 : f32
    %17 = vector.broadcast %cst_10 : f32 to vector<16x1xf32>
    %18 = arith.divf %16, %17 : vector<16x1xf32>
    %cst_11 = arith.constant 9.99999974E-6 : f32
    %19 = vector.broadcast %cst_11 : f32 to vector<16x1xf32>
    %20 = arith.addf %18, %19 : vector<16x1xf32>
    %21 = math.rsqrt %20 : vector<16x1xf32>
    %22 = vector.broadcast %21 : vector<16x1xf32> to vector<16x32xf32>
    %23 = arith.mulf %13, %22 : vector<16x32xf32>
    %c0_12 = arith.constant 0 : index
    %c0_13 = arith.constant 0 : index
    %24 = vector.load %arg5[%c0_12, %c0_13] : memref<1x32xf32, #tpu.memory_space<vmem>>, vector<1x32xf32>
    %25 = vector.broadcast %24 : vector<1x32xf32> to vector<16x32xf32>
    %26 = arith.mulf %23, %25 : vector<16x32xf32>
    %c0_14 = arith.constant 0 : index
    %c0_15 = arith.constant 0 : index
    %27 = vector.load %arg6[%c0_14, %c0_15] : memref<1x32xf32, #tpu.memory_space<vmem>>, vector<1x32xf32>
    %28 = vector.broadcast %27 : vector<1x32xf32> to vector<16x32xf32>
    %29 = arith.addf %26, %28 : vector<16x32xf32>
    %c0_16 = arith.constant 0 : index
    %c0_17 = arith.constant 0 : index
    %30 = vector.load %arg7[%c0_16, %c0_17] : memref<16x32xf32, #tpu.memory_space<vmem>>, vector<16x32xf32>
    tpu.vector_store %arg7[%c0_16, %c0_17], %29 {strides = array<i32>} : memref<16x32xf32, #tpu.memory_space<vmem>>, vector<16x32xf32>,
    return
  }
  func.func @transform_0(%arg0: i32) -> (i32, i32) {
    %c0_i32 = arith.constant 0 : i32
    %c0_i32_0 = arith.constant 0 : i32
    return %arg0, %c0_i32 : i32, i32
  }
  func.func @transform_1(%arg0: i32) -> (i32, i32) {
    %c0_i32 = arith.constant 0 : i32
    %c0_i32_0 = arith.constant 0 : i32
    %c0_i32_1 = arith.constant 0 : i32
    return %c0_i32, %c0_i32_0 : i32, i32
  }
  func.func @transform_2(%arg0: i32) -> (i32, i32) {
    %c0_i32 = arith.constant 0 : i32
    %c0_i32_0 = arith.constant 0 : i32
    %c0_i32_1 = arith.constant 0 : i32
    return %c0_i32, %c0_i32_0 : i32, i32
  }
  func.func @transform_3(%arg0: i32) -> (i32, i32) {
    %c0_i32 = arith.constant 0 : i32
    %c0_i32_0 = arith.constant 0 : i32
    return %arg0, %c0_i32 : i32, i32
  }
  func.func @transform_4(%arg0: i32) -> (i32, i32) {
    %c0_i32 = arith.constant 0 : i32
    %c0_i32_0 = arith.constant 0 : i32
    %c0_i32_1 = arith.constant 0 : i32
    return %c0_i32, %c0_i32_0 : i32, i32
  }
  func.func @transform_5(%arg0: i32) -> (i32, i32) {
    %c0_i32 = arith.constant 0 : i32
    %c0_i32_0 = arith.constant 0 : i32
    %c0_i32_1 = arith.constant 0 : i32
    return %c0_i32, %c0_i32_0 : i32, i32
  }
  func.func @transform_6(%arg0: i32) -> (i32, i32) {
    %c0_i32 = arith.constant 0 : i32
    %c0_i32_0 = arith.constant 0 : i32
    return %arg0, %c0_i32 : i32, i32
  }
}

module attributes {stable_mosaic.version = 11 : i64} {
  func.func @_matmul_bias_kernel(%arg0: i32, %arg1: i32, %arg2: i32, %arg3: memref<16x32xf32, #tpu.memory_space<vmem>>, %arg4: memref<32x32xf32, #tpu.memory_space<vmem>>, %arg5: memref<1x32xf32, #tpu.memory_space<vmem>>, %arg6: memref<16x32xf32, #tpu.memory_space<vmem>>, %arg7: memref<16x32xf32, #tpu.memory_space<vmem>>) attributes {dimension_semantics = [#tpu.dimension_semantics<parallel>, #tpu.dimension_semantics<parallel>, #tpu.dimension_semantics<arbitrary>], iteration_bounds = array<i64: 1, 1, 1>, scalar_prefetch = 0 : i64, scratch_operands = 1 : i64, tpu.core_type = #tpu.core_type<tc>, window_params = [{transform_indices = @transform_0, window_bounds = array<i64: 16, 32>}, {transform_indices = @transform_1, window_bounds = array<i64: 32, 32>}, {transform_indices = @transform_2, window_bounds = array<i64: 1, 32>}, {transform_indices = @transform_3, window_bounds = array<i64: 16, 32>}]} {
    %c0_i32 = arith.constant 0 : i32
    %0 = arith.cmpi eq, %arg2, %c0_i32 : i32
    %1 = arith.extui %0 : i1 to i32
    %c0_i32_0 = arith.constant 0 : i32
    %2 = arith.cmpi ne, %1, %c0_i32_0 : i32
    scf.if %2 {
      %cst_10 = arith.constant 0.000000e+00 : f32
      %12 = vector.broadcast %cst_10 : f32 to vector<16x32xf32>
      %c0_11 = arith.constant 0 : index
      %c0_12 = arith.constant 0 : index
      %13 = vector.load %arg7[%c0_11, %c0_12] : memref<16x32xf32, #tpu.memory_space<vmem>>, vector<16x32xf32>
      tpu.vector_store %arg7[%c0_11, %c0_12], %12 {strides = array<i32>} : memref<16x32xf32, #tpu.memory_space<vmem>>, vector<16x32xf32>,
    } else {
    }
    %c0 = arith.constant 0 : index
    %c0_1 = arith.constant 0 : index
    %3 = vector.load %arg7[%c0, %c0_1] : memref<16x32xf32, #tpu.memory_space<vmem>>, vector<16x32xf32>
    %c0_2 = arith.constant 0 : index
    %c0_3 = arith.constant 0 : index
    %4 = vector.load %arg3[%c0_2, %c0_3] : memref<16x32xf32, #tpu.memory_space<vmem>>, vector<16x32xf32>
    %c0_4 = arith.constant 0 : index
    %c0_5 = arith.constant 0 : index
    %5 = vector.load %arg4[%c0_4, %c0_5] : memref<32x32xf32, #tpu.memory_space<vmem>>, vector<32x32xf32>
    %cst = arith.constant dense<0.000000e+00> : vector<16x32xf32>
    %6 = tpu.matmul %4, %5, %cst {dimension_numbers = #tpu.dot_dimension_numbers<[1], [0], [0], [1], [0, 0, 1, 1], [], []>} : vector<16x32xf32>, vector<32x32xf32>, vector<16x32xf32> -> vector<16x32xf32>
    %7 = arith.addf %3, %6 : vector<16x32xf32>
    %c0_6 = arith.constant 0 : index
    %c0_7 = arith.constant 0 : index
    %8 = vector.load %arg7[%c0_6, %c0_7] : memref<16x32xf32, #tpu.memory_space<vmem>>, vector<16x32xf32>
    tpu.vector_store %arg7[%c0_6, %c0_7], %7 {strides = array<i32>} : memref<16x32xf32, #tpu.memory_space<vmem>>, vector<16x32xf32>,
    %c0_i32_8 = arith.constant 0 : i32
    %9 = arith.cmpi eq, %arg2, %c0_i32_8 : i32
    %10 = arith.extui %9 : i1 to i32
    %c0_i32_9 = arith.constant 0 : i32
    %11 = arith.cmpi ne, %10, %c0_i32_9 : i32
    scf.if %11 {
      %c0_10 = arith.constant 0 : index
      %c0_11 = arith.constant 0 : index
      %12 = vector.load %arg7[%c0_10, %c0_11] : memref<16x32xf32, #tpu.memory_space<vmem>>, vector<16x32xf32>
      %c0_12 = arith.constant 0 : index
      %c0_13 = arith.constant 0 : index
      %13 = vector.load %arg5[%c0_12, %c0_13] : memref<1x32xf32, #tpu.memory_space<vmem>>, vector<1x32xf32>
      %14 = vector.broadcast %13 : vector<1x32xf32> to vector<16x32xf32>
      %15 = arith.addf %12, %14 : vector<16x32xf32>
      %c0_14 = arith.constant 0 : index
      %c0_15 = arith.constant 0 : index
      %16 = vector.load %arg6[%c0_14, %c0_15] : memref<16x32xf32, #tpu.memory_space<vmem>>, vector<16x32xf32>
      tpu.vector_store %arg6[%c0_14, %c0_15], %15 {strides = array<i32>} : memref<16x32xf32, #tpu.memory_space<vmem>>, vector<16x32xf32>,
    } else {
    }
    return
  }
  func.func @transform_0(%arg0: i32, %arg1: i32, %arg2: i32) -> (i32, i32) {
    %c0_i32 = arith.constant 0 : i32
    return %arg0, %arg2 : i32, i32
  }
  func.func @transform_1(%arg0: i32, %arg1: i32, %arg2: i32) -> (i32, i32) {
    %c0_i32 = arith.constant 0 : i32
    return %arg2, %arg1 : i32, i32
  }
  func.func @transform_2(%arg0: i32, %arg1: i32, %arg2: i32) -> (i32, i32) {
    %c0_i32 = arith.constant 0 : i32
    %c0_i32_0 = arith.constant 0 : i32
    return %c0_i32, %arg1 : i32, i32
  }
  func.func @transform_3(%arg0: i32, %arg1: i32, %arg2: i32) -> (i32, i32) {
    %c0_i32 = arith.constant 0 : i32
    return %arg0, %arg1 : i32, i32
  }
}

module attributes {stable_mosaic.version = 11 : i64} {
  func.func @_cross_attn_kernel(%arg0: i32, %arg1: memref<1x8x32xf32, #tpu.memory_space<vmem>>, %arg2: memref<1x8x64xf32, #tpu.memory_space<vmem>>, %arg3: memref<8x8xf32, #tpu.memory_space<vmem>>, %arg4: memref<1x8x32xf32, #tpu.memory_space<vmem>>) attributes {dimension_semantics = [#tpu.dimension_semantics<parallel>], iteration_bounds = array<i64: 2>, scalar_prefetch = 0 : i64, scratch_operands = 0 : i64, tpu.core_type = #tpu.core_type<tc>, window_params = [{transform_indices = @transform_0, window_bounds = array<i64: 1, 8, 32>}, {transform_indices = @transform_1, window_bounds = array<i64: 1, 8, 64>}, {pipeline_mode = #tpu.pipeline_mode<synchronous>, transform_indices = @transform_2, window_bounds = array<i64: 8, 8>}, {transform_indices = @transform_3, window_bounds = array<i64: 1, 8, 32>}]} {
    %c0 = arith.constant 0 : index
    %c0_0 = arith.constant 0 : index
    %c0_1 = arith.constant 0 : index
    %0 = vector.load %arg1[%c0, %c0_0, %c0_1] : memref<1x8x32xf32, #tpu.memory_space<vmem>>, vector<1x8x32xf32>
    %1 = vector.shape_cast %0 : vector<1x8x32xf32> to vector<8x32xf32>
    %c0_2 = arith.constant 0 : index
    %c0_3 = arith.constant 0 : index
    %c0_4 = arith.constant 0 : index
    %2 = vector.load %arg2[%c0_2, %c0_3, %c0_4] : memref<1x8x64xf32, #tpu.memory_space<vmem>>, vector<1x8x64xf32>
    %3 = vector.shape_cast %2 : vector<1x8x64xf32> to vector<8x64xf32>
    %4 = vector.extract_strided_slice %3 {offsets = [0, 0], sizes = [8, 32], strides = [1, 1]} : vector<8x64xf32> to vector<8x32xf32>
    %5 = vector.extract_strided_slice %3 {offsets = [0, 32], sizes = [8, 32], strides = [1, 1]} : vector<8x64xf32> to vector<8x32xf32>
    %c0_5 = arith.constant 0 : index
    %c0_6 = arith.constant 0 : index
    %6 = vector.load %arg3[%c0_5, %c0_6] : memref<8x8xf32, #tpu.memory_space<vmem>>, vector<8x8xf32>
    %7 = vector.extract_strided_slice %1 {offsets = [0, 0], sizes = [8, 8], strides = [1, 1]} : vector<8x32xf32> to vector<8x8xf32>
    %8 = vector.extract_strided_slice %4 {offsets = [0, 0], sizes = [8, 8], strides = [1, 1]} : vector<8x32xf32> to vector<8x8xf32>
    %9 = vector.extract_strided_slice %5 {offsets = [0, 0], sizes = [8, 8], strides = [1, 1]} : vector<8x32xf32> to vector<8x8xf32>
    %cst = arith.constant dense<0.000000e+00> : vector<8x8xf32>
    %10 = tpu.matmul %7, %8, %cst {dimension_numbers = #tpu.dot_dimension_numbers<[1], [1], [0], [0], [0, 0, 1, 0], [], []>} : vector<8x8xf32>, vector<8x8xf32>, vector<8x8xf32> -> vector<8x8xf32>
    %cst_7 = arith.constant 0.353553385 : f32
    %11 = vector.broadcast %cst_7 : f32 to vector<8x8xf32>
    %12 = arith.mulf %10, %11 : vector<8x8xf32>
    %13 = arith.addf %12, %6 : vector<8x8xf32>
    %cst_8 = arith.constant dense<0xFF800000> : vector<8xf32>
    %14 = vector.multi_reduction <maximumf>, %13, %cst_8 [1] : vector<8x8xf32> to vector<8xf32>
    %15 = vector.shape_cast %14 : vector<8xf32> to vector<8x1xf32>
    %16 = vector.broadcast %15 : vector<8x1xf32> to vector<8x8xf32>
    %17 = arith.subf %13, %16 : vector<8x8xf32>
    %18 = math.exp %17 : vector<8x8xf32>
    %cst_9 = arith.constant dense<0.000000e+00> : vector<8xf32>
    %19 = vector.multi_reduction <add>, %18, %cst_9 [1] : vector<8x8xf32> to vector<8xf32>
    %20 = vector.shape_cast %19 : vector<8xf32> to vector<8x1xf32>
    %21 = tpu.reciprocal %20 {approx = true} : vector<8x1xf32> -> vector<8x1xf32>
    %22 = vector.broadcast %21 : vector<8x1xf32> to vector<8x8xf32>
    %23 = arith.mulf %18, %22 : vector<8x8xf32>
    %cst_10 = arith.constant dense<0.000000e+00> : vector<8x8xf32>
    %24 = tpu.matmul %23, %9, %cst_10 {dimension_numbers = #tpu.dot_dimension_numbers<[1], [0], [0], [1], [0, 0, 1, 1], [], []>} : vector<8x8xf32>, vector<8x8xf32>, vector<8x8xf32> -> vector<8x8xf32>
    %25 = vector.extract_strided_slice %1 {offsets = [0, 8], sizes = [8, 8], strides = [1, 1]} : vector<8x32xf32> to vector<8x8xf32>
    %26 = vector.extract_strided_slice %4 {offsets = [0, 8], sizes = [8, 8], strides = [1, 1]} : vector<8x32xf32> to vector<8x8xf32>
    %27 = vector.extract_strided_slice %5 {offsets = [0, 8], sizes = [8, 8], strides = [1, 1]} : vector<8x32xf32> to vector<8x8xf32>
    %cst_11 = arith.constant dense<0.000000e+00> : vector<8x8xf32>
    %28 = tpu.matmul %25, %26, %cst_11 {dimension_numbers = #tpu.dot_dimension_numbers<[1], [1], [0], [0], [0, 0, 1, 0], [], []>} : vector<8x8xf32>, vector<8x8xf32>, vector<8x8xf32> -> vector<8x8xf32>
    %cst_12 = arith.constant 0.353553385 : f32
    %29 = vector.broadcast %cst_12 : f32 to vector<8x8xf32>
    %30 = arith.mulf %28, %29 : vector<8x8xf32>
    %31 = arith.addf %30, %6 : vector<8x8xf32>
    %cst_13 = arith.constant dense<0xFF800000> : vector<8xf32>
    %32 = vector.multi_reduction <maximumf>, %31, %cst_13 [1] : vector<8x8xf32> to vector<8xf32>
    %33 = vector.shape_cast %32 : vector<8xf32> to vector<8x1xf32>
    %34 = vector.broadcast %33 : vector<8x1xf32> to vector<8x8xf32>
    %35 = arith.subf %31, %34 : vector<8x8xf32>
    %36 = math.exp %35 : vector<8x8xf32>
    %cst_14 = arith.constant dense<0.000000e+00> : vector<8xf32>
    %37 = vector.multi_reduction <add>, %36, %cst_14 [1] : vector<8x8xf32> to vector<8xf32>
    %38 = vector.shape_cast %37 : vector<8xf32> to vector<8x1xf32>
    %39 = tpu.reciprocal %38 {approx = true} : vector<8x1xf32> -> vector<8x1xf32>
    %40 = vector.broadcast %39 : vector<8x1xf32> to vector<8x8xf32>
    %41 = arith.mulf %36, %40 : vector<8x8xf32>
    %cst_15 = arith.constant dense<0.000000e+00> : vector<8x8xf32>
    %42 = tpu.matmul %41, %27, %cst_15 {dimension_numbers = #tpu.dot_dimension_numbers<[1], [0], [0], [1], [0, 0, 1, 1], [], []>} : vector<8x8xf32>, vector<8x8xf32>, vector<8x8xf32> -> vector<8x8xf32>
    %43 = vector.extract_strided_slice %1 {offsets = [0, 16], sizes = [8, 8], strides = [1, 1]} : vector<8x32xf32> to vector<8x8xf32>
    %44 = vector.extract_strided_slice %4 {offsets = [0, 16], sizes = [8, 8], strides = [1, 1]} : vector<8x32xf32> to vector<8x8xf32>
    %45 = vector.extract_strided_slice %5 {offsets = [0, 16], sizes = [8, 8], strides = [1, 1]} : vector<8x32xf32> to vector<8x8xf32>
    %cst_16 = arith.constant dense<0.000000e+00> : vector<8x8xf32>
    %46 = tpu.matmul %43, %44, %cst_16 {dimension_numbers = #tpu.dot_dimension_numbers<[1], [1], [0], [0], [0, 0, 1, 0], [], []>} : vector<8x8xf32>, vector<8x8xf32>, vector<8x8xf32> -> vector<8x8xf32>
    %cst_17 = arith.constant 0.353553385 : f32
    %47 = vector.broadcast %cst_17 : f32 to vector<8x8xf32>
    %48 = arith.mulf %46, %47 : vector<8x8xf32>
    %49 = arith.addf %48, %6 : vector<8x8xf32>
    %cst_18 = arith.constant dense<0xFF800000> : vector<8xf32>
    %50 = vector.multi_reduction <maximumf>, %49, %cst_18 [1] : vector<8x8xf32> to vector<8xf32>
    %51 = vector.shape_cast %50 : vector<8xf32> to vector<8x1xf32>
    %52 = vector.broadcast %51 : vector<8x1xf32> to vector<8x8xf32>
    %53 = arith.subf %49, %52 : vector<8x8xf32>
    %54 = math.exp %53 : vector<8x8xf32>
    %cst_19 = arith.constant dense<0.000000e+00> : vector<8xf32>
    %55 = vector.multi_reduction <add>, %54, %cst_19 [1] : vector<8x8xf32> to vector<8xf32>
    %56 = vector.shape_cast %55 : vector<8xf32> to vector<8x1xf32>
    %57 = tpu.reciprocal %56 {approx = true} : vector<8x1xf32> -> vector<8x1xf32>
    %58 = vector.broadcast %57 : vector<8x1xf32> to vector<8x8xf32>
    %59 = arith.mulf %54, %58 : vector<8x8xf32>
    %cst_20 = arith.constant dense<0.000000e+00> : vector<8x8xf32>
    %60 = tpu.matmul %59, %45, %cst_20 {dimension_numbers = #tpu.dot_dimension_numbers<[1], [0], [0], [1], [0, 0, 1, 1], [], []>} : vector<8x8xf32>, vector<8x8xf32>, vector<8x8xf32> -> vector<8x8xf32>
    %61 = vector.extract_strided_slice %1 {offsets = [0, 24], sizes = [8, 8], strides = [1, 1]} : vector<8x32xf32> to vector<8x8xf32>
    %62 = vector.extract_strided_slice %4 {offsets = [0, 24], sizes = [8, 8], strides = [1, 1]} : vector<8x32xf32> to vector<8x8xf32>
    %63 = vector.extract_strided_slice %5 {offsets = [0, 24], sizes = [8, 8], strides = [1, 1]} : vector<8x32xf32> to vector<8x8xf32>
    %cst_21 = arith.constant dense<0.000000e+00> : vector<8x8xf32>
    %64 = tpu.matmul %61, %62, %cst_21 {dimension_numbers = #tpu.dot_dimension_numbers<[1], [1], [0], [0], [0, 0, 1, 0], [], []>} : vector<8x8xf32>, vector<8x8xf32>, vector<8x8xf32> -> vector<8x8xf32>
    %cst_22 = arith.constant 0.353553385 : f32
    %65 = vector.broadcast %cst_22 : f32 to vector<8x8xf32>
    %66 = arith.mulf %64, %65 : vector<8x8xf32>
    %67 = arith.addf %66, %6 : vector<8x8xf32>
    %cst_23 = arith.constant dense<0xFF800000> : vector<8xf32>
    %68 = vector.multi_reduction <maximumf>, %67, %cst_23 [1] : vector<8x8xf32> to vector<8xf32>
    %69 = vector.shape_cast %68 : vector<8xf32> to vector<8x1xf32>
    %70 = vector.broadcast %69 : vector<8x1xf32> to vector<8x8xf32>
    %71 = arith.subf %67, %70 : vector<8x8xf32>
    %72 = math.exp %71 : vector<8x8xf32>
    %cst_24 = arith.constant dense<0.000000e+00> : vector<8xf32>
    %73 = vector.multi_reduction <add>, %72, %cst_24 [1] : vector<8x8xf32> to vector<8xf32>
    %74 = vector.shape_cast %73 : vector<8xf32> to vector<8x1xf32>
    %75 = tpu.reciprocal %74 {approx = true} : vector<8x1xf32> -> vector<8x1xf32>
    %76 = vector.broadcast %75 : vector<8x1xf32> to vector<8x8xf32>
    %77 = arith.mulf %72, %76 : vector<8x8xf32>
    %cst_25 = arith.constant dense<0.000000e+00> : vector<8x8xf32>
    %78 = tpu.matmul %77, %63, %cst_25 {dimension_numbers = #tpu.dot_dimension_numbers<[1], [0], [0], [1], [0, 0, 1, 1], [], []>} : vector<8x8xf32>, vector<8x8xf32>, vector<8x8xf32> -> vector<8x8xf32>
    %79 = tpu.concatenate %24, %42, %60, %78 in 1 : vector<8x8xf32>, vector<8x8xf32>, vector<8x8xf32>, vector<8x8xf32> -> vector<8x32xf32>
    %c0_26 = arith.constant 0 : index
    %c0_27 = arith.constant 0 : index
    %c0_28 = arith.constant 0 : index
    %80 = vector.load %arg4[%c0_26, %c0_27, %c0_28] : memref<1x8x32xf32, #tpu.memory_space<vmem>>, vector<1x8x32xf32>
    %81 = vector.shape_cast %80 : vector<1x8x32xf32> to vector<8x32xf32>
    %82 = vector.shape_cast %79 : vector<8x32xf32> to vector<1x8x32xf32>
    tpu.vector_store %arg4[%c0_26, %c0_27, %c0_28], %82 {strides = array<i32>} : memref<1x8x32xf32, #tpu.memory_space<vmem>>, vector<1x8x32xf32>,
    return
  }
  func.func @transform_0(%arg0: i32) -> (i32, i32, i32) {
    %c0_i32 = arith.constant 0 : i32
    %c0_i32_0 = arith.constant 0 : i32
    %c0_i32_1 = arith.constant 0 : i32
    return %arg0, %c0_i32, %c0_i32_0 : i32, i32, i32
  }
  func.func @transform_1(%arg0: i32) -> (i32, i32, i32) {
    %c0_i32 = arith.constant 0 : i32
    %c0_i32_0 = arith.constant 0 : i32
    %c0_i32_1 = arith.constant 0 : i32
    return %arg0, %c0_i32, %c0_i32_0 : i32, i32, i32
  }
  func.func @transform_2(%arg0: i32) -> (i32, i32) {
    %c0_i32 = arith.constant 0 : i32
    %c0_i32_0 = arith.constant 0 : i32
    %c0_i32_1 = arith.constant 0 : i32
    return %c0_i32, %c0_i32_0 : i32, i32
  }
  func.func @transform_3(%arg0: i32) -> (i32, i32, i32) {
    %c0_i32 = arith.constant 0 : i32
    %c0_i32_0 = arith.constant 0 : i32
    %c0_i32_1 = arith.constant 0 : i32
    return %arg0, %c0_i32, %c0_i32_0 : i32, i32, i32
  }
}

module attributes {stable_mosaic.version = 11 : i64} {
  func.func @_ffn_residual_ln_kernel(%arg0: i32, %arg1: i32, %arg2: memref<16x32xf32, #tpu.memory_space<vmem>>, %arg3: memref<32x64xf32, #tpu.memory_space<vmem>>, %arg4: memref<1x64xf32, #tpu.memory_space<vmem>>, %arg5: memref<64x32xf32, #tpu.memory_space<vmem>>, %arg6: memref<1x32xf32, #tpu.memory_space<vmem>>, %arg7: memref<1x32xf32, #tpu.memory_space<vmem>>, %arg8: memref<1x32xf32, #tpu.memory_space<vmem>>, %arg9: memref<16x32xf32, #tpu.memory_space<vmem>>, %arg10: memref<16x32xf32, #tpu.memory_space<vmem>>) attributes {dimension_semantics = [#tpu.dimension_semantics<parallel>, #tpu.dimension_semantics<arbitrary>], iteration_bounds = array<i64: 1, 1>, scalar_prefetch = 0 : i64, scratch_operands = 1 : i64, tpu.core_type = #tpu.core_type<tc>, window_params = [{transform_indices = @transform_0, window_bounds = array<i64: 16, 32>}, {transform_indices = @transform_1, window_bounds = array<i64: 32, 64>}, {transform_indices = @transform_2, window_bounds = array<i64: 1, 64>}, {transform_indices = @transform_3, window_bounds = array<i64: 64, 32>}, {pipeline_mode = #tpu.pipeline_mode<synchronous>, transform_indices = @transform_4, window_bounds = array<i64: 1, 32>}, {pipeline_mode = #tpu.pipeline_mode<synchronous>, transform_indices = @transform_5, window_bounds = array<i64: 1, 32>}, {pipeline_mode = #tpu.pipeline_mode<synchronous>, transform_indices = @transform_6, window_bounds = array<i64: 1, 32>}, {transform_indices = @transform_7, window_bounds = array<i64: 16, 32>}]} {
    %c0_i32 = arith.constant 0 : i32
    %0 = arith.cmpi eq, %arg1, %c0_i32 : i32
    %1 = arith.extui %0 : i1 to i32
    %c0_i32_0 = arith.constant 0 : i32
    %2 = arith.cmpi ne, %1, %c0_i32_0 : i32
    scf.if %2 {
      %cst_16 = arith.constant 0.000000e+00 : f32
      %19 = vector.broadcast %cst_16 : f32 to vector<16x32xf32>
      %c0_17 = arith.constant 0 : index
      %c0_18 = arith.constant 0 : index
      %20 = vector.load %arg10[%c0_17, %c0_18] : memref<16x32xf32, #tpu.memory_space<vmem>>, vector<16x32xf32>
      tpu.vector_store %arg10[%c0_17, %c0_18], %19 {strides = array<i32>} : memref<16x32xf32, #tpu.memory_space<vmem>>, vector<16x32xf32>,
    } else {
    }
    %c0 = arith.constant 0 : index
    %c0_1 = arith.constant 0 : index
    %3 = vector.load %arg2[%c0, %c0_1] : memref<16x32xf32, #tpu.memory_space<vmem>>, vector<16x32xf32>
    %c0_2 = arith.constant 0 : index
    %c0_3 = arith.constant 0 : index
    %4 = vector.load %arg3[%c0_2, %c0_3] : memref<32x64xf32, #tpu.memory_space<vmem>>, vector<32x64xf32>
    %cst = arith.constant dense<0.000000e+00> : vector<16x64xf32>
    %5 = tpu.matmul %3, %4, %cst {dimension_numbers = #tpu.dot_dimension_numbers<[1], [0], [0], [1], [0, 0, 1, 1], [], []>} : vector<16x32xf32>, vector<32x64xf32>, vector<16x64xf32> -> vector<16x64xf32>
    %c0_4 = arith.constant 0 : index
    %c0_5 = arith.constant 0 : index
    %6 = vector.load %arg4[%c0_4, %c0_5] : memref<1x64xf32, #tpu.memory_space<vmem>>, vector<1x64xf32>
    %7 = vector.broadcast %6 : vector<1x64xf32> to vector<16x64xf32>
    %8 = arith.addf %5, %7 : vector<16x64xf32>
    %cst_6 = arith.constant 0.000000e+00 : f32
    %9 = vector.broadcast %cst_6 : f32 to vector<16x64xf32>
    %10 = arith.maximumf %8, %9 : vector<16x64xf32>
    %c0_7 = arith.constant 0 : index
    %c0_8 = arith.constant 0 : index
    %11 = vector.load %arg10[%c0_7, %c0_8] : memref<16x32xf32, #tpu.memory_space<vmem>>, vector<16x32xf32>
    %c0_9 = arith.constant 0 : index
    %c0_10 = arith.constant 0 : index
    %12 = vector.load %arg5[%c0_9, %c0_10] : memref<64x32xf32, #tpu.memory_space<vmem>>, vector<64x32xf32>
    %cst_11 = arith.constant dense<0.000000e+00> : vector<16x32xf32>
    %13 = tpu.matmul %10, %12, %cst_11 {dimension_numbers = #tpu.dot_dimension_numbers<[1], [0], [0], [1], [0, 0, 1, 1], [], []>} : vector<16x64xf32>, vector<64x32xf32>, vector<16x32xf32> -> vector<16x32xf32>
    %14 = arith.addf %11, %13 : vector<16x32xf32>
    %c0_12 = arith.constant 0 : index
    %c0_13 = arith.constant 0 : index
    %15 = vector.load %arg10[%c0_12, %c0_13] : memref<16x32xf32, #tpu.memory_space<vmem>>, vector<16x32xf32>
    tpu.vector_store %arg10[%c0_12, %c0_13], %14 {strides = array<i32>} : memref<16x32xf32, #tpu.memory_space<vmem>>, vector<16x32xf32>,
    %c0_i32_14 = arith.constant 0 : i32
    %16 = arith.cmpi eq, %arg1, %c0_i32_14 : i32
    %17 = arith.extui %16 : i1 to i32
    %c0_i32_15 = arith.constant 0 : i32
    %18 = arith.cmpi ne, %17, %c0_i32_15 : i32
    scf.if %18 {
      %c0_16 = arith.constant 0 : index
      %c0_17 = arith.constant 0 : index
      %19 = vector.load %arg10[%c0_16, %c0_17] : memref<16x32xf32, #tpu.memory_space<vmem>>, vector<16x32xf32>
      %c0_18 = arith.constant 0 : index
      %c0_19 = arith.constant 0 : index
      %20 = vector.load %arg6[%c0_18, %c0_19] : memref<1x32xf32, #tpu.memory_space<vmem>>, vector<1x32xf32>
      %21 = vector.broadcast %20 : vector<1x32xf32> to vector<16x32xf32>
      %22 = arith.addf %19, %21 : vector<16x32xf32>
      %c0_20 = arith.constant 0 : index
      %c0_21 = arith.constant 0 : index
      %23 = vector.load %arg2[%c0_20, %c0_21] : memref<16x32xf32, #tpu.memory_space<vmem>>, vector<16x32xf32>
      %24 = arith.addf %22, %23 : vector<16x32xf32>
      %cst_22 = arith.constant dense<0.000000e+00> : vector<16xf32>
      %25 = vector.multi_reduction <add>, %24, %cst_22 [1] : vector<16x32xf32> to vector<16xf32>
      %26 = vector.shape_cast %25 : vector<16xf32> to vector<16x1xf32>
      %cst_23 = arith.constant 3.200000e+01 : f32
      %27 = vector.broadcast %cst_23 : f32 to vector<16x1xf32>
      %28 = arith.divf %26, %27 : vector<16x1xf32>
      %29 = vector.broadcast %28 : vector<16x1xf32> to vector<16x32xf32>
      %30 = arith.subf %24, %29 : vector<16x32xf32>
      %31 = arith.mulf %30, %30 : vector<16x32xf32>
      %cst_24 = arith.constant dense<0.000000e+00> : vector<16xf32>
      %32 = vector.multi_reduction <add>, %31, %cst_24 [1] : vector<16x32xf32> to vector<16xf32>
      %33 = vector.shape_cast %32 : vector<16xf32> to vector<16x1xf32>
      %cst_25 = arith.constant 3.200000e+01 : f32
      %34 = vector.broadcast %cst_25 : f32 to vector<16x1xf32>
      %35 = arith.divf %33, %34 : vector<16x1xf32>
      %cst_26 = arith.constant 9.99999974E-6 : f32
      %36 = vector.broadcast %cst_26 : f32 to vector<16x1xf32>
      %37 = arith.addf %35, %36 : vector<16x1xf32>
      %38 = math.rsqrt %37 : vector<16x1xf32>
      %39 = vector.broadcast %38 : vector<16x1xf32> to vector<16x32xf32>
      %40 = arith.mulf %30, %39 : vector<16x32xf32>
      %c0_27 = arith.constant 0 : index
      %c0_28 = arith.constant 0 : index
      %41 = vector.load %arg7[%c0_27, %c0_28] : memref<1x32xf32, #tpu.memory_space<vmem>>, vector<1x32xf32>
      %42 = vector.broadcast %41 : vector<1x32xf32> to vector<16x32xf32>
      %43 = arith.mulf %40, %42 : vector<16x32xf32>
      %c0_29 = arith.constant 0 : index
      %c0_30 = arith.constant 0 : index
      %44 = vector.load %arg8[%c0_29, %c0_30] : memref<1x32xf32, #tpu.memory_space<vmem>>, vector<1x32xf32>
      %45 = vector.broadcast %44 : vector<1x32xf32> to vector<16x32xf32>
      %46 = arith.addf %43, %45 : vector<16x32xf32>
      %c0_31 = arith.constant 0 : index
      %c0_32 = arith.constant 0 : index
      %47 = vector.load %arg9[%c0_31, %c0_32] : memref<16x32xf32, #tpu.memory_space<vmem>>, vector<16x32xf32>
      tpu.vector_store %arg9[%c0_31, %c0_32], %46 {strides = array<i32>} : memref<16x32xf32, #tpu.memory_space<vmem>>, vector<16x32xf32>,
    } else {
    }
    return
  }
  func.func @transform_0(%arg0: i32, %arg1: i32) -> (i32, i32) {
    %c0_i32 = arith.constant 0 : i32
    %c0_i32_0 = arith.constant 0 : i32
    return %arg0, %c0_i32 : i32, i32
  }
  func.func @transform_1(%arg0: i32, %arg1: i32) -> (i32, i32) {
    %c0_i32 = arith.constant 0 : i32
    %c0_i32_0 = arith.constant 0 : i32
    return %c0_i32, %arg1 : i32, i32
  }
  func.func @transform_2(%arg0: i32, %arg1: i32) -> (i32, i32) {
    %c0_i32 = arith.constant 0 : i32
    %c0_i32_0 = arith.constant 0 : i32
    return %c0_i32, %arg1 : i32, i32
  }
  func.func @transform_3(%arg0: i32, %arg1: i32) -> (i32, i32) {
    %c0_i32 = arith.constant 0 : i32
    %c0_i32_0 = arith.constant 0 : i32
    return %arg1, %c0_i32 : i32, i32
  }
  func.func @transform_4(%arg0: i32, %arg1: i32) -> (i32, i32) {
    %c0_i32 = arith.constant 0 : i32
    %c0_i32_0 = arith.constant 0 : i32
    %c0_i32_1 = arith.constant 0 : i32
    return %c0_i32, %c0_i32_0 : i32, i32
  }
  func.func @transform_5(%arg0: i32, %arg1: i32) -> (i32, i32) {
    %c0_i32 = arith.constant 0 : i32
    %c0_i32_0 = arith.constant 0 : i32
    %c0_i32_1 = arith.constant 0 : i32
    return %c0_i32, %c0_i32_0 : i32, i32
  }
  func.func @transform_6(%arg0: i32, %arg1: i32) -> (i32, i32) {
    %c0_i32 = arith.constant 0 : i32
    %c0_i32_0 = arith.constant 0 : i32
    %c0_i32_1 = arith.constant 0 : i32
    return %c0_i32, %c0_i32_0 : i32, i32
  }
  func.func @transform_7(%arg0: i32, %arg1: i32) -> (i32, i32) {
    %c0_i32 = arith.constant 0 : i32
    %c0_i32_0 = arith.constant 0 : i32
    return %arg0, %c0_i32 : i32, i32
  }
}

</mosaic_0001>

<llo_original>
// kernel: decoder_layer.10
$region0: #{decoder_layer.10}
  #allocation0 [shape = 'u32[]', space=smem, size = 0x4, offset = 0x4, fixed_abs, tag = 'smem constant byte address 0x4 - core index']
  #allocation1 [shape = 'u32[144,128]{1,0:T(1,128)}', space=vmem, size = 0x12000, scoped, tag = 'internal scratch']
  %s0 = inlined_call_operand.vmem [shape: f32[16,32], index: 0, kind: input, shape index: {}]
  %s1 = inlined_call_operand.vmem [shape: f32[32,32], index: 1, kind: input, shape index: {}]
  %s2 = inlined_call_operand.vmem [shape: f32[1,32], index: 2, kind: input, shape index: {}]
  %s3 = inlined_call_operand.vmem [shape: f32[16,32], index: 3, kind: input, shape index: {}]
  %s4 = inlined_call_operand.vmem [shape: f32[1,32], index: 4, kind: input, shape index: {}]
  %s5 = inlined_call_operand.vmem [shape: f32[1,32], index: 5, kind: input, shape index: {}]
  %s6 = inlined_call_operand.vmem [shape: f32[16,32], index: 6, kind: output, shape index: {}]
  %s7 = sld [smem:[#allocation0]]
  $region34: #{decoder_layer.10} parent=0
    _
  %s9 = ssub.s32 1, %s7
  %s10 = scalar_select 0, %s9, %s7
  // Predicated region
  $region2: #{decoder_layer.10} parent=0 // pred_check
    _
  $region3: #{decoder_layer.10} parent=0 // pred_check_branch
    %12 = sbr.rel (0) target = $region5
  $region4: #{decoder_layer.10} parent=0 // pred_region
    _
  $region5: #{decoder_layer.10} parent=0 // pred_fallthru
    _
  // Predicated region
  $region6: #{decoder_layer.10} parent=0 // pred_check
    _
  $region7: #{decoder_layer.10} parent=0 // pred_check_branch
    %14 = sbr.rel (0) target = $region9
  $region8: #{decoder_layer.10} parent=0 // pred_region
    _
  $region9: #{decoder_layer.10} parent=0 // pred_fallthru
    _
  // Predicated region
  $region10: #{decoder_layer.10} parent=0 // pred_check
    _
  $region11: #{decoder_layer.10} parent=0 // pred_check_branch
    %16 = sbr.rel (0) target = $region13
  $region12: #{decoder_layer.10} parent=0 // pred_region
    _
  $region13: #{decoder_layer.10} parent=0 // pred_fallthru
    _
  // Predicated region
  $region14: #{decoder_layer.10} parent=0 // pred_check
    _
  $region15: #{decoder_layer.10} parent=0 // pred_check_branch
    %18 = sbr.rel (0) target = $region17
  $region16: #{decoder_layer.10} parent=0 // pred_region
    _
  $region17: #{decoder_layer.10} parent=0 // pred_fallthru
    _
  // Predicated region
  $region18: #{decoder_layer.10} parent=0 // pred_check
    _
  $region19: #{decoder_layer.10} parent=0 // pred_check_branch
    %20 = sbr.rel (0) target = $region21
  $region20: #{decoder_layer.10} parent=0 // pred_region
    _
  $region21: #{decoder_layer.10} parent=0 // pred_fallthru
    _
  // Predicated region
  $region22: #{decoder_layer.10} parent=0 // pred_check
    _
  $region23: #{decoder_layer.10} parent=0 // pred_check_branch
    %22 = sbr.rel (0) target = $region25
  $region24: #{decoder_layer.10} parent=0 // pred_region
    _
  $region25: #{decoder_layer.10} parent=0 // pred_fallthru
    _
  %v23 = vld [vmem:[%s0] sm:$0xff]
  %v24 = vld [vmem:[%s0 + $0x8] sm:$0xff]
  %v25 = vld [vmem:[%s1] sm:$0xff]
  %v26 = vld [vmem:[%s1 + $0x8] sm:$0xff]
  %v27 = vld [vmem:[%s1 + $0x10] sm:$0xff]
  %v28 = vld [vmem:[%s1 + $0x18] sm:$0xff]
  %v29 = vld [vmem:[%s2] sm:$0x1]
  %v31 = vlaneseq
  %v32 = vshrl.u32 %v31, 7
  %v33 = vsub.s32 0, %v32
  %v34 = vrot.slane %v29, %v33
  %vm36 = vcmask 261120
  %v38 = vsel %vm36, %v23, 0
  %v41 = vsel %vm36, %v24, 0
  %43 = vmatprep.subr.mxu0 0.0
  %44 = vmatpush1.msra.mxu0 %v25
  %45 = vmatprep.subr.mxu0 0.0
  %46 = vmatpush1.msra.mxu0 %v26
  %47 = vmatprep.subr.mxu0 0.0
  %48 = vmatpush1.msra.mxu0 %v27
  %49 = vmatprep.subr.mxu0 0.0
  %50 = vmatpush1.msra.mxu0 %v28
  %51 = vmatprep.subr.mxu0 0.0
  %52 = vmatpush1.msra.mxu0 0.0
  %53 = vmatprep.subr.mxu0 0.0
  %54 = vmatpush1.msra.mxu0 0.0
  %55 = vmatprep.subr.mxu0 0.0
  %56 = vmatpush1.msra.mxu0 0.0
  %57 = vmatprep.subr.mxu0 0.0
  %58 = vmatpush1.msra.mxu0 0.0
  %59 = vmatprep.subr.mxu0 0.0
  %60 = vmatpush1.msra.mxu0 0.0
  %61 = vmatprep.subr.mxu0 0.0
  %62 = vmatpush1.msra.mxu0 0.0
  %63 = vmatprep.subr.mxu0 0.0
  %64 = vmatpush1.msra.mxu0 0.0
  %65 = vmatprep.subr.mxu0 0.0
  %66 = vmatpush1.msra.mxu0 0.0
  %67 = vmatprep.subr.mxu0 0.0
  %68 = vmatpush1.msra.mxu0 0.0
  %69 = vmatprep.subr.mxu0 0.0
  %70 = vmatpush1.msra.mxu0 0.0
  %71 = vmatprep.subr.mxu0 0.0
  %72 = vmatpush1.msra.mxu0 0.0
  %73 = vmatprep.subr.mxu0 0.0
  %74 = vmatpush1.msra.mxu0 0.0
  %75 = vmatprep.subr.mxu0 0.0
  %76 = vmatpush1.msra.mxu0 0.0
  %77 = vmatprep.subr.mxu0 0.0
  %78 = vmatpush1.msra.mxu0 0.0
  %79 = vmatprep.subr.mxu0 0.0
  %80 = vmatpush1.msra.mxu0 0.0
  %81 = vmatprep.subr.mxu0 0.0
  %82 = vmatpush1.msra.mxu0 0.0
  %83 = vmatprep.subr.mxu0 0.0
  %84 = vmatpush1.msra.mxu0 0.0
  %85 = vmatprep.subr.mxu0 0.0
  %86 = vmatpush1.msra.mxu0 0.0
  %87 = vmatprep.subr.mxu0 0.0
  %88 = vmatpush1.msra.mxu0 0.0
  %89 = vmatprep.subr.mxu0 0.0
  %90 = vmatpush1.msra.mxu0 0.0
  %91 = vmatprep.subr.mxu0 0.0
  %92 = vmatpush1.msra.mxu0 0.0
  %93 = vmatprep.subr.mxu0 0.0
  %94 = vmatpush1.msra.mxu0 0.0
  %95 = vmatprep.subr.mxu0 0.0
  %96 = vmatpush1.msra.mxu0 0.0
  %97 = vmatprep.subr.mxu0 0.0
  %98 = vmatpush1.msra.mxu0 0.0
  %99 = vmatprep.subr.mxu0 0.0
  %100 = vmatpush1.msra.mxu0 0.0
  %101 = vmatprep.subr.mxu0 0.0
  %102 = vmatpush1.msra.mxu0 0.0
  %103 = vmatprep.subr.mxu0 0.0
  %104 = vmatpush1.msra.mxu0 0.0
  %105 = vmatprep.subr.mxu0 0.0
  %106 = vmatpush1.msra.mxu0 0.0
  %107 = vmatprep.mubr.f32.mxu0 0.0
  %108 = vmatmul.mubr.f32.gmra.mrb[0].mxu0 %v38
  %v109 = vpop.f32.mrb[0].mxu0
  %v110 = vadd.f32 %v34, %v109
  %v111 = vpop.f32.mrb[0].mxu0
  %112 = vmatprep.mubr.f32.mxu0 0.0
  %113 = vmatmul.mubr.f32.gmra.mrb[0].mxu0 %v41
  %v114 = vpop.f32.mrb[0].mxu0
  %v115 = vadd.f32 %v34, %v114
  %v116 = vpop.f32.mrb[0].mxu0
  %117 = vdwg.mxu0
  %v118 = vld [vmem:[%s3] sm:$0xff]
  %v119 = vld [vmem:[%s3 + $0x8] sm:$0xff]
  %v120 = vadd.f32 %v110, %v118
  %v121 = vadd.f32 %v115, %v119
  %v122 = vsel %vm36, %v120, 0.0
  %123 = vadd.xlane.f32.xlu0 %v122
  %v124 = vpop.xlane.xlu0 %123
  %v125 = vsel %vm36, %v121, 0.0
  %126 = vadd.xlane.f32.xlu0 %v125
  %v127 = vpop.xlane.xlu0 %126
  %v128 = vrcp.pop 32.0
  %v129 = vmul.f32 %v124, %v128
  %v130 = vmul.f32 %v127, %v128
  %v131 = vsub.f32 %v120, %v129
  %v132 = vsub.f32 %v121, %v130
  %v133 = vmul.f32 %v131, %v131
  %v134 = vmul.f32 %v132, %v132
  %v135 = vsel %vm36, %v133, 0.0
  %136 = vadd.xlane.f32.xlu0 %v135
  %v137 = vpop.xlane.xlu0 %136
  %v138 = vsel %vm36, %v134, 0.0
  %139 = vadd.xlane.f32.xlu0 %v138
  %v140 = vpop.xlane.xlu0 %139
  %v141 = vmul.f32 %v137, %v128
  %v142 = vmul.f32 %v140, %v128
  %v143 = vadd.f32 %v141, 1e-05
  %v144 = vadd.f32 %v142, 1e-05
  %v145 = vrsqrt.pop %v143
  %v146 = vrsqrt.pop %v144
  %v147 = vmul.f32 %v131, %v145
  %v148 = vmul.f32 %v132, %v146
  %v149 = vld [vmem:[%s4] sm:$0x1]
  %v151 = vlaneseq
  %v152 = vshrl.u32 %v151, 7
  %v153 = vsub.s32 0, %v152
  %v154 = vrot.slane %v149, %v153
  %v156 = vmul.f32 %v147, %v154
  %v157 = vmul.f32 %v148, %v154
  %v158 = vld [vmem:[%s5] sm:$0x1]
  %v160 = vlaneseq
  %v161 = vshrl.u32 %v160, 7
  %v162 = vsub.s32 0, %v161
  %v163 = vrot.slane %v158, %v162
  %v165 = vadd.f32 %v156, %v163
  %v166 = vadd.f32 %v157, %v163
  %167 = vst.msk [vmem:[%s6] sm:$0xff] %vm36, %v165
  %168 = vst.msk [vmem:[%s6 + $0x8] sm:$0xff] %vm36, %v166
  // Predicated region
  $region26: #{decoder_layer.10} parent=0 // pred_check
    _
  $region27: #{decoder_layer.10} parent=0 // pred_check_branch
    %170 = sbr.rel (0) target = $region29
  $region28: #{decoder_layer.10} parent=0 // pred_region
    _
  $region29: #{decoder_layer.10} parent=0 // pred_fallthru
    _
  // Predicated region
  $region30: #{decoder_layer.10} parent=0 // pred_check
    _
  $region31: #{decoder_layer.10} parent=0 // pred_check_branch
    %172 = sbr.rel (0) target = $region33
  $region32: #{decoder_layer.10} parent=0 // pred_region
    _
  $region33: #{decoder_layer.10} parent=0 // pred_fallthru
    _

// kernel: decoder_layer.8
$region0: #{decoder_layer.8}
  #allocation0 [shape = 'u32[]', space=smem, size = 0x4, offset = 0x4, fixed_abs, tag = 'smem constant byte address 0x4 - core index']
  #allocation1 [shape = 'u32[144,128]{1,0:T(1,128)}', space=vmem, size = 0x12000, scoped, tag = 'internal scratch']
  #allocation2 [shape = 'f32[16,96]{1,0:T(8,128)}', space=vmem, size = 0x2000, scoped, tag = 'scratch operand']
  %s0 = inlined_call_operand.vmem [shape: f32[16,32], index: 0, kind: input, shape index: {}]
  %s1 = inlined_call_operand.vmem [shape: f32[32,96], index: 1, kind: input, shape index: {}]
  %s2 = inlined_call_operand.vmem [shape: f32[1,96], index: 2, kind: input, shape index: {}]
  %s3 = inlined_call_operand.vmem [shape: f32[16,96], index: 3, kind: output, shape index: {}]
  %s4 = sld [smem:[#allocation0]]
  $region30: #{decoder_layer.8} parent=0
    _
  %s6 = ssub.s32 1, %s4
  %s7 = scalar_select 0, %s6, %s4
  // Predicated region
  $region2: #{decoder_layer.8} parent=0 // pred_check
    _
  $region3: #{decoder_layer.8} parent=0 // pred_check_branch
    %9 = sbr.rel (0) target = $region5
  $region4: #{decoder_layer.8} parent=0 // pred_region
    _
  $region5: #{decoder_layer.8} parent=0 // pred_fallthru
    _
  // Predicated region
  $region6: #{decoder_layer.8} parent=0 // pred_check
    _
  $region7: #{decoder_layer.8} parent=0 // pred_check_branch
    %11 = sbr.rel (0) target = $region9
  $region8: #{decoder_layer.8} parent=0 // pred_region
    _
  $region9: #{decoder_layer.8} parent=0 // pred_fallthru
    _
  // Predicated region
  $region10: #{decoder_layer.8} parent=0 // pred_check
    _
  $region11: #{decoder_layer.8} parent=0 // pred_check_branch
    %13 = sbr.rel (0) target = $region13
  $region12: #{decoder_layer.8} parent=0 // pred_region
    _
  $region13: #{decoder_layer.8} parent=0 // pred_fallthru
    _
  %p14 = scmp.eq.s32.totalorder 0, 0
  // Predicated region
  $region14: #{decoder_layer.8} parent=0 // pred_check
    %p15 = pneg %p14
  $region15: #{decoder_layer.8} parent=0 // pred_check_branch
    %17 = sbr.rel (%p15) target = $region17
  $region16: #{decoder_layer.8} parent=0 // pred_region
    %vm18 = vcmask 785408
    %19 = vst.msk [vmem:[#allocation2] sm:$0xff] %vm18, 0.0
    %20 = vst.msk [vmem:[#allocation2 + $0x8] sm:$0xff] %vm18, 0.0
  $region17: #{decoder_layer.8} parent=0 // pred_fallthru
    _
  %v21 = vld [vmem:[#allocation2] sm:$0xff]
  %v22 = vld [vmem:[#allocation2 + $0x8] sm:$0xff]
  %v23 = vld [vmem:[%s0] sm:$0xff]
  %v24 = vld [vmem:[%s0 + $0x8] sm:$0xff]
  %v25 = vld [vmem:[%s1] sm:$0xff]
  %v26 = vld [vmem:[%s1 + $0x8] sm:$0xff]
  %v27 = vld [vmem:[%s1 + $0x10] sm:$0xff]
  %v28 = vld [vmem:[%s1 + $0x18] sm:$0xff]
  %vm29 = vcmask 261120
  %v31 = vsel %vm29, %v23, 0
  %v34 = vsel %vm29, %v24, 0
  %36 = vmatprep.subr.mxu0 0.0
  %37 = vmatpush1.msra.mxu0 %v25
  %38 = vmatprep.subr.mxu0 0.0
  %39 = vmatpush1.msra.mxu0 %v26
  %40 = vmatprep.subr.mxu0 0.0
  %41 = vmatpush1.msra.mxu0 %v27
  %42 = vmatprep.subr.mxu0 0.0
  %43 = vmatpush1.msra.mxu0 %v28
  %44 = vmatprep.subr.mxu0 0.0
  %45 = vmatpush1.msra.mxu0 0.0
  %46 = vmatprep.subr.mxu0 0.0
  %47 = vmatpush1.msra.mxu0 0.0
  %48 = vmatprep.subr.mxu0 0.0
  %49 = vmatpush1.msra.mxu0 0.0
  %50 = vmatprep.subr.mxu0 0.0
  %51 = vmatpush1.msra.mxu0 0.0
  %52 = vmatprep.subr.mxu0 0.0
  %53 = vmatpush1.msra.mxu0 0.0
  %54 = vmatprep.subr.mxu0 0.0
  %55 = vmatpush1.msra.mxu0 0.0
  %56 = vmatprep.subr.mxu0 0.0
  %57 = vmatpush1.msra.mxu0 0.0
  %58 = vmatprep.subr.mxu0 0.0
  %59 = vmatpush1.msra.mxu0 0.0
  %60 = vmatprep.subr.mxu0 0.0
  %61 = vmatpush1.msra.mxu0 0.0
  %62 = vmatprep.subr.mxu0 0.0
  %63 = vmatpush1.msra.mxu0 0.0
  %64 = vmatprep.subr.mxu0 0.0
  %65 = vmatpush1.msra.mxu0 0.0
  %66 = vmatprep.subr.mxu0 0.0
  %67 = vmatpush1.msra.mxu0 0.0
  %68 = vmatprep.subr.mxu0 0.0
  %69 = vmatpush1.msra.mxu0 0.0
  %70 = vmatprep.subr.mxu0 0.0
  %71 = vmatpush1.msra.mxu0 0.0
  %72 = vmatprep.subr.mxu0 0.0
  %73 = vmatpush1.msra.mxu0 0.0
  %74 = vmatprep.subr.mxu0 0.0
  %75 = vmatpush1.msra.mxu0 0.0
  %76 = vmatprep.subr.mxu0 0.0
  %77 = vmatpush1.msra.mxu0 0.0
  %78 = vmatprep.subr.mxu0 0.0
  %79 = vmatpush1.msra.mxu0 0.0
  %80 = vmatprep.subr.mxu0 0.0
  %81 = vmatpush1.msra.mxu0 0.0
  %82 = vmatprep.subr.mxu0 0.0
  %83 = vmatpush1.msra.mxu0 0.0
  %84 = vmatprep.subr.mxu0 0.0
  %85 = vmatpush1.msra.mxu0 0.0
  %86 = vmatprep.subr.mxu0 0.0
  %87 = vmatpush1.msra.mxu0 0.0
  %88 = vmatprep.subr.mxu0 0.0
  %89 = vmatpush1.msra.mxu0 0.0
  %90 = vmatprep.subr.mxu0 0.0
  %91 = vmatpush1.msra.mxu0 0.0
  %92 = vmatprep.subr.mxu0 0.0
  %93 = vmatpush1.msra.mxu0 0.0
  %94 = vmatprep.subr.mxu0 0.0
  %95 = vmatpush1.msra.mxu0 0.0
  %96 = vmatprep.subr.mxu0 0.0
  %97 = vmatpush1.msra.mxu0 0.0
  %98 = vmatprep.subr.mxu0 0.0
  %99 = vmatpush1.msra.mxu0 0.0
  %100 = vmatprep.mubr.f32.mxu0 0.0
  %101 = vmatmul.mubr.f32.gmra.mrb[0].mxu0 %v31
  %v102 = vpop.f32.mrb[0].mxu0
  %v103 = vadd.f32 0.0, %v102
  %v104 = vpop.f32.mrb[0].mxu0
  %105 = vmatprep.mubr.f32.mxu0 0.0
  %106 = vmatmul.mubr.f32.gmra.mrb[0].mxu0 %v34
  %v107 = vpop.f32.mrb[0].mxu0
  %v108 = vadd.f32 0.0, %v107
  %v109 = vpop.f32.mrb[0].mxu0
  %110 = vdwg.mxu0
  %v111 = vadd.f32 %v21, %v103
  %v112 = vadd.f32 %v22, %v108
  %vm113 = vcmask 785408
  %114 = vst.msk [vmem:[#allocation2] sm:$0xff] %vm113, %v111
  %115 = vst.msk [vmem:[#allocation2 + $0x8] sm:$0xff] %vm113, %v112
  // Predicated region
  $region18: #{decoder_layer.8} parent=0 // pred_check
    %p116 = pneg %p14
  $region19: #{decoder_layer.8} parent=0 // pred_check_branch
    %118 = sbr.rel (%p116) target = $region21
  $region20: #{decoder_layer.8} parent=0 // pred_region
    %v119 = vld [vmem:[#allocation2] sm:$0xff]
    %v120 = vld [vmem:[#allocation2 + $0x8] sm:$0xff]
    %v121 = vld [vmem:[%s2] sm:$0x1]
    %v123 = vlaneseq
    %v124 = vshrl.u32 %v123, 7
    %v125 = vsub.s32 0, %v124
    %v126 = vrot.slane %v121, %v125
    %v128 = vadd.f32 %v119, %v126
    %v129 = vadd.f32 %v120, %v126
    %130 = vst.msk [vmem:[%s3] sm:$0xff] %vm113, %v128
    %131 = vst.msk [vmem:[%s3 + $0x8] sm:$0xff] %vm113, %v129
  $region21: #{decoder_layer.8} parent=0 // pred_fallthru
    _
  // Predicated region
  $region22: #{decoder_layer.8} parent=0 // pred_check
    _
  $region23: #{decoder_layer.8} parent=0 // pred_check_branch
    %133 = sbr.rel (0) target = $region25
  $region24: #{decoder_layer.8} parent=0 // pred_region
    _
  $region25: #{decoder_layer.8} parent=0 // pred_fallthru
    _
  // Predicated region
  $region26: #{decoder_layer.8} parent=0 // pred_check
    _
  $region27: #{decoder_layer.8} parent=0 // pred_check_branch
    %135 = sbr.rel (0) target = $region29
  $region28: #{decoder_layer.8} parent=0 // pred_region
    _
  $region29: #{decoder_layer.8} parent=0 // pred_fallthru
    _

// kernel: decoder_layer.12
$region0: #{decoder_layer.12}
  #allocation0 [shape = 'u32[]', space=smem, size = 0x4, offset = 0x4, fixed_abs, tag = 'smem constant byte address 0x4 - core index']
  #allocation1 [shape = 'u32[144,128]{1,0:T(1,128)}', space=vmem, size = 0x12000, scoped, tag = 'internal scratch']
  #allocation2 [shape = 'f32[16,64]{1,0:T(8,128)}', space=vmem, size = 0x2000, scoped, tag = 'scratch operand']
  %s0 = inlined_call_operand.vmem [shape: f32[16,32], index: 0, kind: input, shape index: {}]
  %s1 = inlined_call_operand.vmem [shape: f32[32,64], index: 1, kind: input, shape index: {}]
  %s2 = inlined_call_operand.vmem [shape: f32[1,64], index: 2, kind: input, shape index: {}]
  %s3 = inlined_call_operand.vmem [shape: f32[16,64], index: 3, kind: output, shape index: {}]
  %s4 = sld [smem:[#allocation0]]
  $region30: #{decoder_layer.12} parent=0
    _
  %s6 = ssub.s32 1, %s4
  %s7 = scalar_select 0, %s6, %s4
  // Predicated region
  $region2: #{decoder_layer.12} parent=0 // pred_check
    _
  $region3: #{decoder_layer.12} parent=0 // pred_check_branch
    %9 = sbr.rel (0) target = $region5
  $region4: #{decoder_layer.12} parent=0 // pred_region
    _
  $region5: #{decoder_layer.12} parent=0 // pred_fallthru
    _
  // Predicated region
  $region6: #{decoder_layer.12} parent=0 // pred_check
    _
  $region7: #{decoder_layer.12} parent=0 // pred_check_branch
    %11 = sbr.rel (0) target = $region9
  $region8: #{decoder_layer.12} parent=0 // pred_region
    _
  $region9: #{decoder_layer.12} parent=0 // pred_fallthru
    _
  // Predicated region
  $region10: #{decoder_layer.12} parent=0 // pred_check
    _
  $region11: #{decoder_layer.12} parent=0 // pred_check_branch
    %13 = sbr.rel (0) target = $region13
  $region12: #{decoder_layer.12} parent=0 // pred_region
    _
  $region13: #{decoder_layer.12} parent=0 // pred_fallthru
    _
  %p14 = scmp.eq.s32.totalorder 0, 0
  // Predicated region
  $region14: #{decoder_layer.12} parent=0 // pred_check
    %p15 = pneg %p14
  $region15: #{decoder_layer.12} parent=0 // pred_check_branch
    %17 = sbr.rel (%p15) target = $region17
  $region16: #{decoder_layer.12} parent=0 // pred_region
    %vm18 = vcmask 523264
    %19 = vst.msk [vmem:[#allocation2] sm:$0xff] %vm18, 0.0
    %20 = vst.msk [vmem:[#allocation2 + $0x8] sm:$0xff] %vm18, 0.0
  $region17: #{decoder_layer.12} parent=0 // pred_fallthru
    _
  %v21 = vld [vmem:[#allocation2] sm:$0xff]
  %v22 = vld [vmem:[#allocation2 + $0x8] sm:$0xff]
  %v23 = vld [vmem:[%s0] sm:$0xff]
  %v24 = vld [vmem:[%s0 + $0x8] sm:$0xff]
  %v25 = vld [vmem:[%s1] sm:$0xff]
  %v26 = vld [vmem:[%s1 + $0x8] sm:$0xff]
  %v27 = vld [vmem:[%s1 + $0x10] sm:$0xff]
  %v28 = vld [vmem:[%s1 + $0x18] sm:$0xff]
  %vm29 = vcmask 261120
  %v31 = vsel %vm29, %v23, 0
  %v34 = vsel %vm29, %v24, 0
  %36 = vmatprep.subr.mxu0 0.0
  %37 = vmatpush1.msra.mxu0 %v25
  %38 = vmatprep.subr.mxu0 0.0
  %39 = vmatpush1.msra.mxu0 %v26
  %40 = vmatprep.subr.mxu0 0.0
  %41 = vmatpush1.msra.mxu0 %v27
  %42 = vmatprep.subr.mxu0 0.0
  %43 = vmatpush1.msra.mxu0 %v28
  %44 = vmatprep.subr.mxu0 0.0
  %45 = vmatpush1.msra.mxu0 0.0
  %46 = vmatprep.subr.mxu0 0.0
  %47 = vmatpush1.msra.mxu0 0.0
  %48 = vmatprep.subr.mxu0 0.0
  %49 = vmatpush1.msra.mxu0 0.0
  %50 = vmatprep.subr.mxu0 0.0
  %51 = vmatpush1.msra.mxu0 0.0
  %52 = vmatprep.subr.mxu0 0.0
  %53 = vmatpush1.msra.mxu0 0.0
  %54 = vmatprep.subr.mxu0 0.0
  %55 = vmatpush1.msra.mxu0 0.0
  %56 = vmatprep.subr.mxu0 0.0
  %57 = vmatpush1.msra.mxu0 0.0
  %58 = vmatprep.subr.mxu0 0.0
  %59 = vmatpush1.msra.mxu0 0.0
  %60 = vmatprep.subr.mxu0 0.0
  %61 = vmatpush1.msra.mxu0 0.0
  %62 = vmatprep.subr.mxu0 0.0
  %63 = vmatpush1.msra.mxu0 0.0
  %64 = vmatprep.subr.mxu0 0.0
  %65 = vmatpush1.msra.mxu0 0.0
  %66 = vmatprep.subr.mxu0 0.0
  %67 = vmatpush1.msra.mxu0 0.0
  %68 = vmatprep.subr.mxu0 0.0
  %69 = vmatpush1.msra.mxu0 0.0
  %70 = vmatprep.subr.mxu0 0.0
  %71 = vmatpush1.msra.mxu0 0.0
  %72 = vmatprep.subr.mxu0 0.0
  %73 = vmatpush1.msra.mxu0 0.0
  %74 = vmatprep.subr.mxu0 0.0
  %75 = vmatpush1.msra.mxu0 0.0
  %76 = vmatprep.subr.mxu0 0.0
  %77 = vmatpush1.msra.mxu0 0.0
  %78 = vmatprep.subr.mxu0 0.0
  %79 = vmatpush1.msra.mxu0 0.0
  %80 = vmatprep.subr.mxu0 0.0
  %81 = vmatpush1.msra.mxu0 0.0
  %82 = vmatprep.subr.mxu0 0.0
  %83 = vmatpush1.msra.mxu0 0.0
  %84 = vmatprep.subr.mxu0 0.0
  %85 = vmatpush1.msra.mxu0 0.0
  %86 = vmatprep.subr.mxu0 0.0
  %87 = vmatpush1.msra.mxu0 0.0
  %88 = vmatprep.subr.mxu0 0.0
  %89 = vmatpush1.msra.mxu0 0.0
  %90 = vmatprep.subr.mxu0 0.0
  %91 = vmatpush1.msra.mxu0 0.0
  %92 = vmatprep.subr.mxu0 0.0
  %93 = vmatpush1.msra.mxu0 0.0
  %94 = vmatprep.subr.mxu0 0.0
  %95 = vmatpush1.msra.mxu0 0.0
  %96 = vmatprep.subr.mxu0 0.0
  %97 = vmatpush1.msra.mxu0 0.0
  %98 = vmatprep.subr.mxu0 0.0
  %99 = vmatpush1.msra.mxu0 0.0
  %100 = vmatprep.mubr.f32.mxu0 0.0
  %101 = vmatmul.mubr.f32.gmra.mrb[0].mxu0 %v31
  %v102 = vpop.f32.mrb[0].mxu0
  %v103 = vadd.f32 0.0, %v102
  %v104 = vpop.f32.mrb[0].mxu0
  %105 = vmatprep.mubr.f32.mxu0 0.0
  %106 = vmatmul.mubr.f32.gmra.mrb[0].mxu0 %v34
  %v107 = vpop.f32.mrb[0].mxu0
  %v108 = vadd.f32 0.0, %v107
  %v109 = vpop.f32.mrb[0].mxu0
  %110 = vdwg.mxu0
  %v111 = vadd.f32 %v21, %v103
  %v112 = vadd.f32 %v22, %v108
  %vm113 = vcmask 523264
  %114 = vst.msk [vmem:[#allocation2] sm:$0xff] %vm113, %v111
  %115 = vst.msk [vmem:[#allocation2 + $0x8] sm:$0xff] %vm113, %v112
  // Predicated region
  $region18: #{decoder_layer.12} parent=0 // pred_check
    %p116 = pneg %p14
  $region19: #{decoder_layer.12} parent=0 // pred_check_branch
    %118 = sbr.rel (%p116) target = $region21
  $region20: #{decoder_layer.12} parent=0 // pred_region
    %v119 = vld [vmem:[#allocation2] sm:$0xff]
    %v120 = vld [vmem:[#allocation2 + $0x8] sm:$0xff]
    %v121 = vld [vmem:[%s2] sm:$0x1]
    %v123 = vlaneseq
    %v124 = vshrl.u32 %v123, 7
    %v125 = vsub.s32 0, %v124
    %v126 = vrot.slane %v121, %v125
    %v128 = vadd.f32 %v119, %v126
    %v129 = vadd.f32 %v120, %v126
    %130 = vst.msk [vmem:[%s3] sm:$0xff] %vm113, %v128
    %131 = vst.msk [vmem:[%s3 + $0x8] sm:$0xff] %vm113, %v129
  $region21: #{decoder_layer.12} parent=0 // pred_fallthru
    _
  // Predicated region
  $region22: #{decoder_layer.12} parent=0 // pred_check
    _
  $region23: #{decoder_layer.12} parent=0 // pred_check_branch
    %133 = sbr.rel (0) target = $region25
  $region24: #{decoder_layer.12} parent=0 // pred_region
    _
  $region25: #{decoder_layer.12} parent=0 // pred_fallthru
    _
  // Predicated region
  $region26: #{decoder_layer.12} parent=0 // pred_check
    _
  $region27: #{decoder_layer.12} parent=0 // pred_check_branch
    %135 = sbr.rel (0) target = $region29
  $region28: #{decoder_layer.12} parent=0 // pred_region
    _
  $region29: #{decoder_layer.12} parent=0 // pred_fallthru
    _

// kernel: decoder_layer.9
$region0: #{decoder_layer.9}
  #allocation0 [shape = 'u32[]', space=smem, size = 0x4, offset = 0x4, fixed_abs, tag = 'smem constant byte address 0x4 - core index']
  #allocation1 [shape = 'u32[144,128]{1,0:T(1,128)}', space=vmem, size = 0x12000, scoped, tag = 'internal scratch']
  %s0 = inlined_call_operand.vmem [shape: f32[2,8,96], index: 0, kind: input, shape index: {}]
  %s1 = inlined_call_operand.vmem [shape: f32[8,8], index: 1, kind: input, shape index: {}]
  %s2 = inlined_call_operand.vmem [shape: f32[2,8,32], index: 2, kind: output, shape index: {}]
  %s3 = sld [smem:[#allocation0]]
  $region41: #{decoder_layer.9} parent=0
    _
  %s5 = ssub.s32 1, %s3
  %s6 = scalar_select 0, %s5, %s3
  loop: start=0, step=1, limit=4
  $region2: #{decoder_layer.9} parent=0 // loop_pre_header
    _
  $region3: #{decoder_layer.9} parent=0 // loop_header
    %s8 = sphi 0, %s12
    %p9 = scmp.ge.s32.totalorder %s8, 4
    %s18 = sphi 0, %s20
    %s21 = sphi 0, %s18
    %s22 = sphi 0, %s21
    %s38 = sphi 0, %s22
    %s42 = sphi 0, %s42
    %s44 = sphi 0, %s42
    %s45 = sphi 0, %s44
    %s59 = sphi 0, %s45
    %s65 = sphi 0, %s67
    %s68 = sphi 0, %s65
    %s69 = sphi 0, %s68
    %s85 = sphi 0, %s69
  $region4: #{decoder_layer.9} parent=0 // loop_header_branch
    %11 = sbr.rel (%p9) target = $region8
  $region5: #{decoder_layer.9} parent=0 // loop_body
    %s13 = ssub.s32 %s8, 1
    %s14 = ssub.s32 %s8, 2
    %s15 = sadd.s32 %s8, 1
    %s16 = ssub.s32 %s8, %s15
    %p17 = scmp.eq.s32.totalorder %s16, 0
    %s19 = sadd.s32 %s18, 1
    %s20 = scalar_select %p17, %s18, %s19
    %p23 = pneg %p17
    %p24 = scmp.eq.s32.totalorder %s8, 1
    %p25 = por %p23, %p24
    %p26 = scmp.ne.s32.totalorder %s18, %s21
    %p27 = scmp.eq.s32.totalorder %s8, 0
    %p28 = por %p26, %p27
    %p29 = scmp.ne.s32.totalorder %s18, %s21
    %p30 = scmp.eq.s32.totalorder %s13, 1
    %p31 = por %p29, %p30
    %p32 = scmp.ne.s32.totalorder %s21, %s22
    %p33 = scmp.eq.s32.totalorder %s13, 0
    %p34 = por %p32, %p33
    %p35 = scmp.ne.s32.totalorder %s21, %s22
    %p36 = scmp.eq.s32.totalorder %s14, 1
    %p37 = por %p35, %p36
    %p39 = scmp.ne.s32.totalorder %s22, %s38
    %p40 = scmp.eq.s32.totalorder %s14, 0
    %p41 = por %p39, %p40
    %s43 = sadd.s32 %s42, 1
    %p46 = scmp.eq.s32.totalorder %s8, 1
    %p47 = scmp.ne.s32.totalorder %s42, %s44
    %p48 = scmp.eq.s32.totalorder %s8, 0
    %p49 = por %p47, %p48
    %p50 = scmp.ne.s32.totalorder %s42, %s44
    %p51 = scmp.eq.s32.totalorder %s13, 1
    %p52 = por %p50, %p51
    %p53 = scmp.ne.s32.totalorder %s44, %s45
    %p54 = scmp.eq.s32.totalorder %s13, 0
    %p55 = por %p53, %p54
    %p56 = scmp.ne.s32.totalorder %s44, %s45
    %p57 = scmp.eq.s32.totalorder %s14, 1
    %p58 = por %p56, %p57
    %p60 = scmp.ne.s32.totalorder %s45, %s59
    %p61 = scmp.eq.s32.totalorder %s14, 0
    %p62 = por %p60, %p61
    %s63 = ssub.s32 %s8, %s15
    %p64 = scmp.eq.s32.totalorder %s63, 0
    %s66 = sadd.s32 %s65, 1
    %s67 = scalar_select %p64, %s65, %s66
    %p70 = pneg %p64
    %p71 = scmp.eq.s32.totalorder %s8, 1
    %p72 = por %p70, %p71
    %p73 = scmp.ne.s32.totalorder %s65, %s68
    %p74 = scmp.eq.s32.totalorder %s8, 0
    %p75 = por %p73, %p74
    %p76 = scmp.ne.s32.totalorder %s65, %s68
    %p77 = scmp.eq.s32.totalorder %s13, 1
    %p78 = por %p76, %p77
    %p79 = scmp.ne.s32.totalorder %s68, %s69
    %p80 = scmp.eq.s32.totalorder %s13, 0
    %p81 = por %p79, %p80
    %p82 = scmp.ne.s32.totalorder %s68, %s69
    %p83 = scmp.eq.s32.totalorder %s14, 1
    %p84 = por %p82, %p83
    %p86 = scmp.ne.s32.totalorder %s69, %s85
    %p87 = scmp.eq.s32.totalorder %s14, 0
    %p88 = por %p86, %p87
    %p89 = scmp.le.s32.totalorder 1, %s8
    %p90 = scmp.lt.s32.totalorder %s8, 3
    %p91 = pnand %p89, %p90
    %p92 = pneg %p91
    // Predicated region
    $region9: #{decoder_layer.9} parent=5 // pred_check
      _
    $region10: #{decoder_layer.9} parent=5 // pred_check_branch
      %94 = sbr.rel (%p91) target = $region12
    $region11: #{decoder_layer.9} parent=5 // pred_region
      %s95 = ssub.s32 %s8, 1
      // Predicated region
      $region13: #{decoder_layer.9} parent=11 // pred_check
        %p96 = pneg %p55
      $region14: #{decoder_layer.9} parent=11 // pred_check_branch
        %98 = sbr.rel (%p96) target = $region16
      $region15: #{decoder_layer.9} parent=11 // pred_region
        _
      $region16: #{decoder_layer.9} parent=11 // pred_fallthru
        _
    $region12: #{decoder_layer.9} parent=5 // pred_fallthru
      _
    %p99 = scmp.lt.s32.totalorder %s8, 2
    // Predicated region
    $region17: #{decoder_layer.9} parent=5 // pred_check
      %p100 = pneg %p99
    $region18: #{decoder_layer.9} parent=5 // pred_check_branch
      %102 = sbr.rel (%p100) target = $region20
    $region19: #{decoder_layer.9} parent=5 // pred_region
      // Predicated region
      $region21: #{decoder_layer.9} parent=19 // pred_check
        %p103 = pneg %p28
      $region22: #{decoder_layer.9} parent=19 // pred_check_branch
        %105 = sbr.rel (%p103) target = $region24
      $region23: #{decoder_layer.9} parent=19 // pred_region
        %p106 = scmp.lt.s32.totalorder %s8, 1
        %s107 = scalar_select %p106, %s8, 1
        %s108 = smul.addr %s107, 8
        %s109 = scalar_lea.vmem %s0, %s108
      $region24: #{decoder_layer.9} parent=19 // pred_fallthru
        _
    $region20: #{decoder_layer.9} parent=5 // pred_fallthru
      _
    %p110 = scmp.le.s32.totalorder 1, %s8
    %p111 = scmp.lt.s32.totalorder %s8, 3
    %p112 = pnand %p110, %p111
    %p113 = pneg %p112
    // Predicated region
    $region25: #{decoder_layer.9} parent=5 // pred_check
      _
    $region26: #{decoder_layer.9} parent=5 // pred_check_branch
      %115 = sbr.rel (%p112) target = $region28
    $region27: #{decoder_layer.9} parent=5 // pred_region
      %s116 = ssub.s32 %s8, 1
      %p117 = scmp.lt.s32.totalorder %s13, 1
      %s118 = scalar_select %p117, %s13, 1
      %s119 = smul.addr %s118, 8
      %s120 = scalar_lea.vmem %s0, %s119
      %p121 = pneg %p34
      %p122 = pneg %p31
      %p123 = pneg %p55
      %p124 = pneg %p52
      %p125 = pneg %p81
      %p126 = pneg %p78
      %p127 = scmp.lt.s32.totalorder %s13, 1
      %s128 = scalar_select %p127, %s13, 1
      %s129 = smul.addr %s128, 8
      %s130 = scalar_lea.vmem %s2, %s129
      %p131 = scmp.lt.s32.totalorder %s13, 1
      %s132 = scalar_select %p131, %s13, 1
      %s133 = smul.addr %s132, 8
      %s134 = scalar_lea.vmem %s0, %s133
      %p135 = scmp.lt.s32.totalorder %s13, 1
      %s136 = scalar_select %p135, %s13, 1
      %s137 = smul.addr %s136, 8
      %s138 = scalar_lea.vmem %s2, %s137
      %v139 = vld [vmem:[%s134] sm:$0xff]
      %v140 = vld [vmem:[%s1] sm:$0xff]
      %142 = vrot.lane.b32.xlu0 %v139, 96
      %v143 = vpop.permute.xlu0 %142
      %vm144 = vcmask 64512
      %v145 = vsel %vm144, %v139, 0
      %v147 = vsel %vm144, %v143, 0
      %149 = vmatprep.subr.mxu0 0.0
      %150 = vmatpush1.xpose.msra.mxu0 %v147
      %151 = vmatprep.subr.mxu0 0.0
      %152 = vmatpush1.xpose.msra.mxu0 0.0
      %153 = vmatprep.subr.mxu0 0.0
      %154 = vmatpush1.xpose.msra.mxu0 0.0
      %155 = vmatprep.subr.mxu0 0.0
      %156 = vmatpush1.xpose.msra.mxu0 0.0
      %157 = vmatprep.subr.mxu0 0.0
      %158 = vmatpush1.xpose.msra.mxu0 0.0
      %159 = vmatprep.subr.mxu0 0.0
      %160 = vmatpush1.xpose.msra.mxu0 0.0
      %161 = vmatprep.subr.mxu0 0.0
      %162 = vmatpush1.xpose.msra.mxu0 0.0
      %163 = vmatprep.subr.mxu0 0.0
      %164 = vmatpush1.xpose.msra.mxu0 0.0
      %165 = vmatprep.subr.mxu0 0.0
      %166 = vmatpush1.xpose.msra.mxu0 0.0
      %167 = vmatprep.subr.mxu0 0.0
      %168 = vmatpush1.xpose.msra.mxu0 0.0
      %169 = vmatprep.subr.mxu0 0.0
      %170 = vmatpush1.xpose.msra.mxu0 0.0
      %171 = vmatprep.subr.mxu0 0.0
      %172 = vmatpush1.xpose.msra.mxu0 0.0
      %173 = vmatprep.subr.mxu0 0.0
      %174 = vmatpush1.xpose.msra.mxu0 0.0
      %175 = vmatprep.subr.mxu0 0.0
      %176 = vmatpush1.xpose.msra.mxu0 0.0
      %177 = vmatprep.subr.mxu0 0.0
      %178 = vmatpush1.xpose.msra.mxu0 0.0
      %179 = vmatprep.subr.mxu0 0.0
      %180 = vmatpush1.xpose.msra.mxu0 0.0
      %181 = vmatprep.subr.mxu0 0.0
      %182 = vmatpush1.xpose.msra.mxu0 0.0
      %183 = vmatprep.subr.mxu0 0.0
      %184 = vmatpush1.xpose.msra.mxu0 0.0
      %185 = vmatprep.subr.mxu0 0.0
      %186 = vmatpush1.xpose.msra.mxu0 0.0
      %187 = vmatprep.subr.mxu0 0.0
      %188 = vmatpush1.xpose.msra.mxu0 0.0
      %189 = vmatprep.subr.mxu0 0.0
      %190 = vmatpush1.xpose.msra.mxu0 0.0
      %191 = vmatprep.subr.mxu0 0.0
      %192 = vmatpush1.xpose.msra.mxu0 0.0
      %193 = vmatprep.subr.mxu0 0.0
      %194 = vmatpush1.xpose.msra.mxu0 0.0
      %195 = vmatprep.subr.mxu0 0.0
      %196 = vmatpush1.xpose.msra.mxu0 0.0
      %197 = vmatprep.subr.mxu0 0.0
      %198 = vmatpush1.xpose.msra.mxu0 0.0
      %199 = vmatprep.subr.mxu0 0.0
      %200 = vmatpush1.xpose.msra.mxu0 0.0
      %201 = vmatprep.subr.mxu0 0.0
      %202 = vmatpush1.xpose.msra.mxu0 0.0
      %203 = vmatprep.subr.mxu0 0.0
      %204 = vmatpush1.xpose.msra.mxu0 0.0
      %205 = vmatprep.subr.mxu0 0.0
      %206 = vmatpush1.xpose.msra.mxu0 0.0
      %207 = vmatprep.subr.mxu0 0.0
      %208 = vmatpush1.xpose.msra.mxu0 0.0
      %209 = vmatprep.subr.mxu0 0.0
      %210 = vmatpush1.xpose.msra.mxu0 0.0
      %211 = vmatprep.subr.mxu0 0.0
      %212 = vmatpush1.xpose.msra.mxu0 0.0
      %213 = vmatprep.mubr.f32.mxu0 0.0
      %214 = vmatmul.mubr.f32.gmra.mrb[0].mxu0 %v145
      %v215 = vpop.f32.mrb[0].mxu0
      %v216 = vadd.f32 0.0, %v215
      %v217 = vpop.f32.mrb[0].mxu0
      %218 = vdwg.mxu0
      %v219 = vmul.f32 %v216, 0.35355338
      %v220 = vadd.f32 %v219, %v140
      %v221 = vsel %vm144, %v220, -inf
      %222 = vmax.xlane.f32.xlu0 %v221
      %v223 = vpop.xlane.xlu0 %222
      %v224 = vsub.f32 %v220, %v223
      %v225 = vmul.f32 %v224, 1.442695
      %v226 = vpow.pop %v225
      %v227 = vsel %vm144, %v226, 0.0
      %228 = vadd.xlane.f32.xlu0 %v227
      %v229 = vpop.xlane.xlu0 %228
      %v230 = vrcp.pop %v229
      %v231 = vmul.f32 %v226, %v230
      %232 = vrot.lane.b32.xlu0 %v139, 64
      %v233 = vpop.permute.xlu0 %232
      %v236 = vsel %vm144, %v231, 0
      %238 = vmatprep.subr.mxu0 0.0
      %239 = vmatpush1.msra.mxu0 %v233
      %240 = vmatprep.subr.mxu0 0.0
      %241 = vmatpush1.msra.mxu0 0.0
      %242 = vmatprep.subr.mxu0 0.0
      %243 = vmatpush1.msra.mxu0 0.0
      %244 = vmatprep.subr.mxu0 0.0
      %245 = vmatpush1.msra.mxu0 0.0
      %246 = vmatprep.subr.mxu0 0.0
      %247 = vmatpush1.msra.mxu0 0.0
      %248 = vmatprep.subr.mxu0 0.0
      %249 = vmatpush1.msra.mxu0 0.0
      %250 = vmatprep.subr.mxu0 0.0
      %251 = vmatpush1.msra.mxu0 0.0
      %252 = vmatprep.subr.mxu0 0.0
      %253 = vmatpush1.msra.mxu0 0.0
      %254 = vmatprep.subr.mxu0 0.0
      %255 = vmatpush1.msra.mxu0 0.0
      %256 = vmatprep.subr.mxu0 0.0
      %257 = vmatpush1.msra.mxu0 0.0
      %258 = vmatprep.subr.mxu0 0.0
      %259 = vmatpush1.msra.mxu0 0.0
      %260 = vmatprep.subr.mxu0 0.0
      %261 = vmatpush1.msra.mxu0 0.0
      %262 = vmatprep.subr.mxu0 0.0
      %263 = vmatpush1.msra.mxu0 0.0
      %264 = vmatprep.subr.mxu0 0.0
      %265 = vmatpush1.msra.mxu0 0.0
      %266 = vmatprep.subr.mxu0 0.0
      %267 = vmatpush1.msra.mxu0 0.0
      %268 = vmatprep.subr.mxu0 0.0
      %269 = vmatpush1.msra.mxu0 0.0
      %270 = vmatprep.subr.mxu0 0.0
      %271 = vmatpush1.msra.mxu0 0.0
      %272 = vmatprep.subr.mxu0 0.0
      %273 = vmatpush1.msra.mxu0 0.0
      %274 = vmatprep.subr.mxu0 0.0
      %275 = vmatpush1.msra.mxu0 0.0
      %276 = vmatprep.subr.mxu0 0.0
      %277 = vmatpush1.msra.mxu0 0.0
      %278 = vmatprep.subr.mxu0 0.0
      %279 = vmatpush1.msra.mxu0 0.0
      %280 = vmatprep.subr.mxu0 0.0
      %281 = vmatpush1.msra.mxu0 0.0
      %282 = vmatprep.subr.mxu0 0.0
      %283 = vmatpush1.msra.mxu0 0.0
      %284 = vmatprep.subr.mxu0 0.0
      %285 = vmatpush1.msra.mxu0 0.0
      %286 = vmatprep.subr.mxu0 0.0
      %287 = vmatpush1.msra.mxu0 0.0
      %288 = vmatprep.subr.mxu0 0.0
      %289 = vmatpush1.msra.mxu0 0.0
      %290 = vmatprep.subr.mxu0 0.0
      %291 = vmatpush1.msra.mxu0 0.0
      %292 = vmatprep.subr.mxu0 0.0
      %293 = vmatpush1.msra.mxu0 0.0
      %294 = vmatprep.subr.mxu0 0.0
      %295 = vmatpush1.msra.mxu0 0.0
      %296 = vmatprep.subr.mxu0 0.0
      %297 = vmatpush1.msra.mxu0 0.0
      %298 = vmatprep.subr.mxu0 0.0
      %299 = vmatpush1.msra.mxu0 0.0
      %300 = vmatprep.subr.mxu0 0.0
      %301 = vmatpush1.msra.mxu0 0.0
      %302 = vmatprep.mubr.f32.mxu0 0.0
      %303 = vmatmul.mubr.f32.gmra.mrb[0].mxu0 %v236
      %v304 = vpop.f32.mrb[0].mxu0
      %v305 = vadd.f32 0.0, %v304
      %v306 = vpop.f32.mrb[0].mxu0
      %307 = vdwg.mxu0
      %308 = vrot.lane.b32.xlu0 %v139, 120
      %v309 = vpop.permute.xlu0 %308
      %310 = vrot.lane.b32.xlu0 %v139, 88
      %v311 = vpop.permute.xlu0 %310
      %v312 = vsel %vm144, %v309, 0
      %v314 = vsel %vm144, %v311, 0
      %316 = vmatprep.subr.mxu0 0.0
      %317 = vmatpush1.xpose.msra.mxu0 %v314
      %318 = vmatprep.subr.mxu0 0.0
      %319 = vmatpush1.xpose.msra.mxu0 0.0
      %320 = vmatprep.subr.mxu0 0.0
      %321 = vmatpush1.xpose.msra.mxu0 0.0
      %322 = vmatprep.subr.mxu0 0.0
      %323 = vmatpush1.xpose.msra.mxu0 0.0
      %324 = vmatprep.subr.mxu0 0.0
      %325 = vmatpush1.xpose.msra.mxu0 0.0
      %326 = vmatprep.subr.mxu0 0.0
      %327 = vmatpush1.xpose.msra.mxu0 0.0
      %328 = vmatprep.subr.mxu0 0.0
      %329 = vmatpush1.xpose.msra.mxu0 0.0
      %330 = vmatprep.subr.mxu0 0.0
      %331 = vmatpush1.xpose.msra.mxu0 0.0
      %332 = vmatprep.subr.mxu0 0.0
      %333 = vmatpush1.xpose.msra.mxu0 0.0
      %334 = vmatprep.subr.mxu0 0.0
      %335 = vmatpush1.xpose.msra.mxu0 0.0
      %336 = vmatprep.subr.mxu0 0.0
      %337 = vmatpush1.xpose.msra.mxu0 0.0
      %338 = vmatprep.subr.mxu0 0.0
      %339 = vmatpush1.xpose.msra.mxu0 0.0
      %340 = vmatprep.subr.mxu0 0.0
      %341 = vmatpush1.xpose.msra.mxu0 0.0
      %342 = vmatprep.subr.mxu0 0.0
      %343 = vmatpush1.xpose.msra.mxu0 0.0
      %344 = vmatprep.subr.mxu0 0.0
      %345 = vmatpush1.xpose.msra.mxu0 0.0
      %346 = vmatprep.subr.mxu0 0.0
      %347 = vmatpush1.xpose.msra.mxu0 0.0
      %348 = vmatprep.subr.mxu0 0.0
      %349 = vmatpush1.xpose.msra.mxu0 0.0
      %350 = vmatprep.subr.mxu0 0.0
      %351 = vmatpush1.xpose.msra.mxu0 0.0
      %352 = vmatprep.subr.mxu0 0.0
      %353 = vmatpush1.xpose.msra.mxu0 0.0
      %354 = vmatprep.subr.mxu0 0.0
      %355 = vmatpush1.xpose.msra.mxu0 0.0
      %356 = vmatprep.subr.mxu0 0.0
      %357 = vmatpush1.xpose.msra.mxu0 0.0
      %358 = vmatprep.subr.mxu0 0.0
      %359 = vmatpush1.xpose.msra.mxu0 0.0
      %360 = vmatprep.subr.mxu0 0.0
      %361 = vmatpush1.xpose.msra.mxu0 0.0
      %362 = vmatprep.subr.mxu0 0.0
      %363 = vmatpush1.xpose.msra.mxu0 0.0
      %364 = vmatprep.subr.mxu0 0.0
      %365 = vmatpush1.xpose.msra.mxu0 0.0
      %366 = vmatprep.subr.mxu0 0.0
      %367 = vmatpush1.xpose.msra.mxu0 0.0
      %368 = vmatprep.subr.mxu0 0.0
      %369 = vmatpush1.xpose.msra.mxu0 0.0
      %370 = vmatprep.subr.mxu0 0.0
      %371 = vmatpush1.xpose.msra.mxu0 0.0
      %372 = vmatprep.subr.mxu0 0.0
      %373 = vmatpush1.xpose.msra.mxu0 0.0
      %374 = vmatprep.subr.mxu0 0.0
      %375 = vmatpush1.xpose.msra.mxu0 0.0
      %376 = vmatprep.subr.mxu0 0.0
      %377 = vmatpush1.xpose.msra.mxu0 0.0
      %378 = vmatprep.subr.mxu0 0.0
      %379 = vmatpush1.xpose.msra.mxu0 0.0
      %380 = vmatprep.mubr.f32.mxu0 0.0
      %381 = vmatmul.mubr.f32.gmra.mrb[0].mxu0 %v312
      %v382 = vpop.f32.mrb[0].mxu0
      %v383 = vadd.f32 0.0, %v382
      %v384 = vpop.f32.mrb[0].mxu0
      %385 = vdwg.mxu0
      %v386 = vmul.f32 %v383, 0.35355338
      %v387 = vadd.f32 %v386, %v140
      %v388 = vsel %vm144, %v387, -inf
      %389 = vmax.xlane.f32.xlu0 %v388
      %v390 = vpop.xlane.xlu0 %389
      %v391 = vsub.f32 %v387, %v390
      %v392 = vmul.f32 %v391, 1.442695
      %v393 = vpow.pop %v392
      %v394 = vsel %vm144, %v393, 0.0
      %395 = vadd.xlane.f32.xlu0 %v394
      %v396 = vpop.xlane.xlu0 %395
      %v397 = vrcp.pop %v396
      %v398 = vmul.f32 %v393, %v397
      %399 = vrot.lane.b32.xlu0 %v139, 56
      %v400 = vpop.permute.xlu0 %399
      %v403 = vsel %vm144, %v398, 0
      %405 = vmatprep.subr.mxu0 0.0
      %406 = vmatpush1.msra.mxu0 %v400
      %407 = vmatprep.subr.mxu0 0.0
      %408 = vmatpush1.msra.mxu0 0.0
      %409 = vmatprep.subr.mxu0 0.0
      %410 = vmatpush1.msra.mxu0 0.0
      %411 = vmatprep.subr.mxu0 0.0
      %412 = vmatpush1.msra.mxu0 0.0
      %413 = vmatprep.subr.mxu0 0.0
      %414 = vmatpush1.msra.mxu0 0.0
      %415 = vmatprep.subr.mxu0 0.0
      %416 = vmatpush1.msra.mxu0 0.0
      %417 = vmatprep.subr.mxu0 0.0
      %418 = vmatpush1.msra.mxu0 0.0
      %419 = vmatprep.subr.mxu0 0.0
      %420 = vmatpush1.msra.mxu0 0.0
      %421 = vmatprep.subr.mxu0 0.0
      %422 = vmatpush1.msra.mxu0 0.0
      %423 = vmatprep.subr.mxu0 0.0
      %424 = vmatpush1.msra.mxu0 0.0
      %425 = vmatprep.subr.mxu0 0.0
      %426 = vmatpush1.msra.mxu0 0.0
      %427 = vmatprep.subr.mxu0 0.0
      %428 = vmatpush1.msra.mxu0 0.0
      %429 = vmatprep.subr.mxu0 0.0
      %430 = vmatpush1.msra.mxu0 0.0
      %431 = vmatprep.subr.mxu0 0.0
      %432 = vmatpush1.msra.mxu0 0.0
      %433 = vmatprep.subr.mxu0 0.0
      %434 = vmatpush1.msra.mxu0 0.0
      %435 = vmatprep.subr.mxu0 0.0
      %436 = vmatpush1.msra.mxu0 0.0
      %437 = vmatprep.subr.mxu0 0.0
      %438 = vmatpush1.msra.mxu0 0.0
      %439 = vmatprep.subr.mxu0 0.0
      %440 = vmatpush1.msra.mxu0 0.0
      %441 = vmatprep.subr.mxu0 0.0
      %442 = vmatpush1.msra.mxu0 0.0
      %443 = vmatprep.subr.mxu0 0.0
      %444 = vmatpush1.msra.mxu0 0.0
      %445 = vmatprep.subr.mxu0 0.0
      %446 = vmatpush1.msra.mxu0 0.0
      %447 = vmatprep.subr.mxu0 0.0
      %448 = vmatpush1.msra.mxu0 0.0
      %449 = vmatprep.subr.mxu0 0.0
      %450 = vmatpush1.msra.mxu0 0.0
      %451 = vmatprep.subr.mxu0 0.0
      %452 = vmatpush1.msra.mxu0 0.0
      %453 = vmatprep.subr.mxu0 0.0
      %454 = vmatpush1.msra.mxu0 0.0
      %455 = vmatprep.subr.mxu0 0.0
      %456 = vmatpush1.msra.mxu0 0.0
      %457 = vmatprep.subr.mxu0 0.0
      %458 = vmatpush1.msra.mxu0 0.0
      %459 = vmatprep.subr.mxu0 0.0
      %460 = vmatpush1.msra.mxu0 0.0
      %461 = vmatprep.subr.mxu0 0.0
      %462 = vmatpush1.msra.mxu0 0.0
      %463 = vmatprep.subr.mxu0 0.0
      %464 = vmatpush1.msra.mxu0 0.0
      %465 = vmatprep.subr.mxu0 0.0
      %466 = vmatpush1.msra.mxu0 0.0
      %467 = vmatprep.subr.mxu0 0.0
      %468 = vmatpush1.msra.mxu0 0.0
      %469 = vmatprep.mubr.f32.mxu0 0.0
      %470 = vmatmul.mubr.f32.gmra.mrb[0].mxu0 %v403
      %v471 = vpop.f32.mrb[0].mxu0
      %v472 = vadd.f32 0.0, %v471
      %v473 = vpop.f32.mrb[0].mxu0
      %474 = vdwg.mxu0
      %475 = vrot.lane.b32.xlu0 %v139, 112
      %v476 = vpop.permute.xlu0 %475
      %477 = vrot.lane.b32.xlu0 %v139, 80
      %v478 = vpop.permute.xlu0 %477
      %v479 = vsel %vm144, %v476, 0
      %v481 = vsel %vm144, %v478, 0
      %483 = vmatprep.subr.mxu0 0.0
      %484 = vmatpush1.xpose.msra.mxu0 %v481
      %485 = vmatprep.subr.mxu0 0.0
      %486 = vmatpush1.xpose.msra.mxu0 0.0
      %487 = vmatprep.subr.mxu0 0.0
      %488 = vmatpush1.xpose.msra.mxu0 0.0
      %489 = vmatprep.subr.mxu0 0.0
      %490 = vmatpush1.xpose.msra.mxu0 0.0
      %491 = vmatprep.subr.mxu0 0.0
      %492 = vmatpush1.xpose.msra.mxu0 0.0
      %493 = vmatprep.subr.mxu0 0.0
      %494 = vmatpush1.xpose.msra.mxu0 0.0
      %495 = vmatprep.subr.mxu0 0.0
      %496 = vmatpush1.xpose.msra.mxu0 0.0
      %497 = vmatprep.subr.mxu0 0.0
      %498 = vmatpush1.xpose.msra.mxu0 0.0
      %499 = vmatprep.subr.mxu0 0.0
      %500 = vmatpush1.xpose.msra.mxu0 0.0
      %501 = vmatprep.subr.mxu0 0.0
      %502 = vmatpush1.xpose.msra.mxu0 0.0
      %503 = vmatprep.subr.mxu0 0.0
      %504 = vmatpush1.xpose.msra.mxu0 0.0
      %505 = vmatprep.subr.mxu0 0.0
      %506 = vmatpush1.xpose.msra.mxu0 0.0
      %507 = vmatprep.subr.mxu0 0.0
      %508 = vmatpush1.xpose.msra.mxu0 0.0
      %509 = vmatprep.subr.mxu0 0.0
      %510 = vmatpush1.xpose.msra.mxu0 0.0
      %511 = vmatprep.subr.mxu0 0.0
      %512 = vmatpush1.xpose.msra.mxu0 0.0
      %513 = vmatprep.subr.mxu0 0.0
      %514 = vmatpush1.xpose.msra.mxu0 0.0
      %515 = vmatprep.subr.mxu0 0.0
      %516 = vmatpush1.xpose.msra.mxu0 0.0
      %517 = vmatprep.subr.mxu0 0.0
      %518 = vmatpush1.xpose.msra.mxu0 0.0
      %519 = vmatprep.subr.mxu0 0.0
      %520 = vmatpush1.xpose.msra.mxu0 0.0
      %521 = vmatprep.subr.mxu0 0.0
      %522 = vmatpush1.xpose.msra.mxu0 0.0
      %523 = vmatprep.subr.mxu0 0.0
      %524 = vmatpush1.xpose.msra.mxu0 0.0
      %525 = vmatprep.subr.mxu0 0.0
      %526 = vmatpush1.xpose.msra.mxu0 0.0
      %527 = vmatprep.subr.mxu0 0.0
      %528 = vmatpush1.xpose.msra.mxu0 0.0
      %529 = vmatprep.subr.mxu0 0.0
      %530 = vmatpush1.xpose.msra.mxu0 0.0
      %531 = vmatprep.subr.mxu0 0.0
      %532 = vmatpush1.xpose.msra.mxu0 0.0
      %533 = vmatprep.subr.mxu0 0.0
      %534 = vmatpush1.xpose.msra.mxu0 0.0
      %535 = vmatprep.subr.mxu0 0.0
      %536 = vmatpush1.xpose.msra.mxu0 0.0
      %537 = vmatprep.subr.mxu0 0.0
      %538 = vmatpush1.xpose.msra.mxu0 0.0
      %539 = vmatprep.subr.mxu0 0.0
      %540 = vmatpush1.xpose.msra.mxu0 0.0
      %541 = vmatprep.subr.mxu0 0.0
      %542 = vmatpush1.xpose.msra.mxu0 0.0
      %543 = vmatprep.subr.mxu0 0.0
      %544 = vmatpush1.xpose.msra.mxu0 0.0
      %545 = vmatprep.subr.mxu0 0.0
      %546 = vmatpush1.xpose.msra.mxu0 0.0
      %547 = vmatprep.mubr.f32.mxu0 0.0
      %548 = vmatmul.mubr.f32.gmra.mrb[0].mxu0 %v479
      %v549 = vpop.f32.mrb[0].mxu0
      %v550 = vadd.f32 0.0, %v549
      %v551 = vpop.f32.mrb[0].mxu0
      %552 = vdwg.mxu0
      %v553 = vmul.f32 %v550, 0.35355338
      %v554 = vadd.f32 %v553, %v140
      %v555 = vsel %vm144, %v554, -inf
      %556 = vmax.xlane.f32.xlu0 %v555
      %v557 = vpop.xlane.xlu0 %556
      %v558 = vsub.f32 %v554, %v557
      %v559 = vmul.f32 %v558, 1.442695
      %v560 = vpow.pop %v559
      %v561 = vsel %vm144, %v560, 0.0
      %562 = vadd.xlane.f32.xlu0 %v561
      %v563 = vpop.xlane.xlu0 %562
      %v564 = vrcp.pop %v563
      %v565 = vmul.f32 %v560, %v564
      %566 = vrot.lane.b32.xlu0 %v139, 48
      %v567 = vpop.permute.xlu0 %566
      %v570 = vsel %vm144, %v565, 0
      %572 = vmatprep.subr.mxu0 0.0
      %573 = vmatpush1.msra.mxu0 %v567
      %574 = vmatprep.subr.mxu0 0.0
      %575 = vmatpush1.msra.mxu0 0.0
      %576 = vmatprep.subr.mxu0 0.0
      %577 = vmatpush1.msra.mxu0 0.0
      %578 = vmatprep.subr.mxu0 0.0
      %579 = vmatpush1.msra.mxu0 0.0
      %580 = vmatprep.subr.mxu0 0.0
      %581 = vmatpush1.msra.mxu0 0.0
      %582 = vmatprep.subr.mxu0 0.0
      %583 = vmatpush1.msra.mxu0 0.0
      %584 = vmatprep.subr.mxu0 0.0
      %585 = vmatpush1.msra.mxu0 0.0
      %586 = vmatprep.subr.mxu0 0.0
      %587 = vmatpush1.msra.mxu0 0.0
      %588 = vmatprep.subr.mxu0 0.0
      %589 = vmatpush1.msra.mxu0 0.0
      %590 = vmatprep.subr.mxu0 0.0
      %591 = vmatpush1.msra.mxu0 0.0
      %592 = vmatprep.subr.mxu0 0.0
      %593 = vmatpush1.msra.mxu0 0.0
      %594 = vmatprep.subr.mxu0 0.0
      %595 = vmatpush1.msra.mxu0 0.0
      %596 = vmatprep.subr.mxu0 0.0
      %597 = vmatpush1.msra.mxu0 0.0
      %598 = vmatprep.subr.mxu0 0.0
      %599 = vmatpush1.msra.mxu0 0.0
      %600 = vmatprep.subr.mxu0 0.0
      %601 = vmatpush1.msra.mxu0 0.0
      %602 = vmatprep.subr.mxu0 0.0
      %603 = vmatpush1.msra.mxu0 0.0
      %604 = vmatprep.subr.mxu0 0.0
      %605 = vmatpush1.msra.mxu0 0.0
      %606 = vmatprep.subr.mxu0 0.0
      %607 = vmatpush1.msra.mxu0 0.0
      %608 = vmatprep.subr.mxu0 0.0
      %609 = vmatpush1.msra.mxu0 0.0
      %610 = vmatprep.subr.mxu0 0.0
      %611 = vmatpush1.msra.mxu0 0.0
      %612 = vmatprep.subr.mxu0 0.0
      %613 = vmatpush1.msra.mxu0 0.0
      %614 = vmatprep.subr.mxu0 0.0
      %615 = vmatpush1.msra.mxu0 0.0
      %616 = vmatprep.subr.mxu0 0.0
      %617 = vmatpush1.msra.mxu0 0.0
      %618 = vmatprep.subr.mxu0 0.0
      %619 = vmatpush1.msra.mxu0 0.0
      %620 = vmatprep.subr.mxu0 0.0
      %621 = vmatpush1.msra.mxu0 0.0
      %622 = vmatprep.subr.mxu0 0.0
      %623 = vmatpush1.msra.mxu0 0.0
      %624 = vmatprep.subr.mxu0 0.0
      %625 = vmatpush1.msra.mxu0 0.0
      %626 = vmatprep.subr.mxu0 0.0
      %627 = vmatpush1.msra.mxu0 0.0
      %628 = vmatprep.subr.mxu0 0.0
      %629 = vmatpush1.msra.mxu0 0.0
      %630 = vmatprep.subr.mxu0 0.0
      %631 = vmatpush1.msra.mxu0 0.0
      %632 = vmatprep.subr.mxu0 0.0
      %633 = vmatpush1.msra.mxu0 0.0
      %634 = vmatprep.subr.mxu0 0.0
      %635 = vmatpush1.msra.mxu0 0.0
      %636 = vmatprep.mubr.f32.mxu0 0.0
      %637 = vmatmul.mubr.f32.gmra.mrb[0].mxu0 %v570
      %v638 = vpop.f32.mrb[0].mxu0
      %v639 = vadd.f32 0.0, %v638
      %v640 = vpop.f32.mrb[0].mxu0
      %641 = vdwg.mxu0
      %642 = vrot.lane.b32.xlu0 %v139, 104
      %v643 = vpop.permute.xlu0 %642
      %644 = vrot.lane.b32.xlu0 %v139, 72
      %v645 = vpop.permute.xlu0 %644
      %v646 = vsel %vm144, %v643, 0
      %v648 = vsel %vm144, %v645, 0
      %650 = vmatprep.subr.mxu0 0.0
      %651 = vmatpush1.xpose.msra.mxu0 %v648
      %652 = vmatprep.subr.mxu0 0.0
      %653 = vmatpush1.xpose.msra.mxu0 0.0
      %654 = vmatprep.subr.mxu0 0.0
      %655 = vmatpush1.xpose.msra.mxu0 0.0
      %656 = vmatprep.subr.mxu0 0.0
      %657 = vmatpush1.xpose.msra.mxu0 0.0
      %658 = vmatprep.subr.mxu0 0.0
      %659 = vmatpush1.xpose.msra.mxu0 0.0
      %660 = vmatprep.subr.mxu0 0.0
      %661 = vmatpush1.xpose.msra.mxu0 0.0
      %662 = vmatprep.subr.mxu0 0.0
      %663 = vmatpush1.xpose.msra.mxu0 0.0
      %664 = vmatprep.subr.mxu0 0.0
      %665 = vmatpush1.xpose.msra.mxu0 0.0
      %666 = vmatprep.subr.mxu0 0.0
      %667 = vmatpush1.xpose.msra.mxu0 0.0
      %668 = vmatprep.subr.mxu0 0.0
      %669 = vmatpush1.xpose.msra.mxu0 0.0
      %670 = vmatprep.subr.mxu0 0.0
      %671 = vmatpush1.xpose.msra.mxu0 0.0
      %672 = vmatprep.subr.mxu0 0.0
      %673 = vmatpush1.xpose.msra.mxu0 0.0
      %674 = vmatprep.subr.mxu0 0.0
      %675 = vmatpush1.xpose.msra.mxu0 0.0
      %676 = vmatprep.subr.mxu0 0.0
      %677 = vmatpush1.xpose.msra.mxu0 0.0
      %678 = vmatprep.subr.mxu0 0.0
      %679 = vmatpush1.xpose.msra.mxu0 0.0
      %680 = vmatprep.subr.mxu0 0.0
      %681 = vmatpush1.xpose.msra.mxu0 0.0
      %682 = vmatprep.subr.mxu0 0.0
      %683 = vmatpush1.xpose.msra.mxu0 0.0
      %684 = vmatprep.subr.mxu0 0.0
      %685 = vmatpush1.xpose.msra.mxu0 0.0
      %686 = vmatprep.subr.mxu0 0.0
      %687 = vmatpush1.xpose.msra.mxu0 0.0
      %688 = vmatprep.subr.mxu0 0.0
      %689 = vmatpush1.xpose.msra.mxu0 0.0
      %690 = vmatprep.subr.mxu0 0.0
      %691 = vmatpush1.xpose.msra.mxu0 0.0
      %692 = vmatprep.subr.mxu0 0.0
      %693 = vmatpush1.xpose.msra.mxu0 0.0
      %694 = vmatprep.subr.mxu0 0.0
      %695 = vmatpush1.xpose.msra.mxu0 0.0
      %696 = vmatprep.subr.mxu0 0.0
      %697 = vmatpush1.xpose.msra.mxu0 0.0
      %698 = vmatprep.subr.mxu0 0.0
      %699 = vmatpush1.xpose.msra.mxu0 0.0
      %700 = vmatprep.subr.mxu0 0.0
      %701 = vmatpush1.xpose.msra.mxu0 0.0
      %702 = vmatprep.subr.mxu0 0.0
      %703 = vmatpush1.xpose.msra.mxu0 0.0
      %704 = vmatprep.subr.mxu0 0.0
      %705 = vmatpush1.xpose.msra.mxu0 0.0
      %706 = vmatprep.subr.mxu0 0.0
      %707 = vmatpush1.xpose.msra.mxu0 0.0
      %708 = vmatprep.subr.mxu0 0.0
      %709 = vmatpush1.xpose.msra.mxu0 0.0
      %710 = vmatprep.subr.mxu0 0.0
      %711 = vmatpush1.xpose.msra.mxu0 0.0
      %712 = vmatprep.subr.mxu0 0.0
      %713 = vmatpush1.xpose.msra.mxu0 0.0
      %714 = vmatprep.mubr.f32.mxu0 0.0
      %715 = vmatmul.mubr.f32.gmra.mrb[0].mxu0 %v646
      %v716 = vpop.f32.mrb[0].mxu0
      %v717 = vadd.f32 0.0, %v716
      %v718 = vpop.f32.mrb[0].mxu0
      %719 = vdwg.mxu0
      %v720 = vmul.f32 %v717, 0.35355338
      %v721 = vadd.f32 %v720, %v140
      %v722 = vsel %vm144, %v721, -inf
      %723 = vmax.xlane.f32.xlu0 %v722
      %v724 = vpop.xlane.xlu0 %723
      %v725 = vsub.f32 %v721, %v724
      %v726 = vmul.f32 %v725, 1.442695
      %v727 = vpow.pop %v726
      %v728 = vsel %vm144, %v727, 0.0
      %729 = vadd.xlane.f32.xlu0 %v728
      %v730 = vpop.xlane.xlu0 %729
      %v731 = vrcp.pop %v730
      %v732 = vmul.f32 %v727, %v731
      %733 = vrot.lane.b32.xlu0 %v139, 40
      %v734 = vpop.permute.xlu0 %733
      %v737 = vsel %vm144, %v732, 0
      %739 = vmatprep.subr.mxu0 0.0
      %740 = vmatpush1.msra.mxu0 %v734
      %741 = vmatprep.subr.mxu0 0.0
      %742 = vmatpush1.msra.mxu0 0.0
      %743 = vmatprep.subr.mxu0 0.0
      %744 = vmatpush1.msra.mxu0 0.0
      %745 = vmatprep.subr.mxu0 0.0
      %746 = vmatpush1.msra.mxu0 0.0
      %747 = vmatprep.subr.mxu0 0.0
      %748 = vmatpush1.msra.mxu0 0.0
      %749 = vmatprep.subr.mxu0 0.0
      %750 = vmatpush1.msra.mxu0 0.0
      %751 = vmatprep.subr.mxu0 0.0
      %752 = vmatpush1.msra.mxu0 0.0
      %753 = vmatprep.subr.mxu0 0.0
      %754 = vmatpush1.msra.mxu0 0.0
      %755 = vmatprep.subr.mxu0 0.0
      %756 = vmatpush1.msra.mxu0 0.0
      %757 = vmatprep.subr.mxu0 0.0
      %758 = vmatpush1.msra.mxu0 0.0
      %759 = vmatprep.subr.mxu0 0.0
      %760 = vmatpush1.msra.mxu0 0.0
      %761 = vmatprep.subr.mxu0 0.0
      %762 = vmatpush1.msra.mxu0 0.0
      %763 = vmatprep.subr.mxu0 0.0
      %764 = vmatpush1.msra.mxu0 0.0
      %765 = vmatprep.subr.mxu0 0.0
      %766 = vmatpush1.msra.mxu0 0.0
      %767 = vmatprep.subr.mxu0 0.0
      %768 = vmatpush1.msra.mxu0 0.0
      %769 = vmatprep.subr.mxu0 0.0
      %770 = vmatpush1.msra.mxu0 0.0
      %771 = vmatprep.subr.mxu0 0.0
      %772 = vmatpush1.msra.mxu0 0.0
      %773 = vmatprep.subr.mxu0 0.0
      %774 = vmatpush1.msra.mxu0 0.0
      %775 = vmatprep.subr.mxu0 0.0
      %776 = vmatpush1.msra.mxu0 0.0
      %777 = vmatprep.subr.mxu0 0.0
      %778 = vmatpush1.msra.mxu0 0.0
      %779 = vmatprep.subr.mxu0 0.0
      %780 = vmatpush1.msra.mxu0 0.0
      %781 = vmatprep.subr.mxu0 0.0
      %782 = vmatpush1.msra.mxu0 0.0
      %783 = vmatprep.subr.mxu0 0.0
      %784 = vmatpush1.msra.mxu0 0.0
      %785 = vmatprep.subr.mxu0 0.0
      %786 = vmatpush1.msra.mxu0 0.0
      %787 = vmatprep.subr.mxu0 0.0
      %788 = vmatpush1.msra.mxu0 0.0
      %789 = vmatprep.subr.mxu0 0.0
      %790 = vmatpush1.msra.mxu0 0.0
      %791 = vmatprep.subr.mxu0 0.0
      %792 = vmatpush1.msra.mxu0 0.0
      %793 = vmatprep.subr.mxu0 0.0
      %794 = vmatpush1.msra.mxu0 0.0
      %795 = vmatprep.subr.mxu0 0.0
      %796 = vmatpush1.msra.mxu0 0.0
      %797 = vmatprep.subr.mxu0 0.0
      %798 = vmatpush1.msra.mxu0 0.0
      %799 = vmatprep.subr.mxu0 0.0
      %800 = vmatpush1.msra.mxu0 0.0
      %801 = vmatprep.subr.mxu0 0.0
      %802 = vmatpush1.msra.mxu0 0.0
      %803 = vmatprep.mubr.f32.mxu0 0.0
      %804 = vmatmul.mubr.f32.gmra.mrb[0].mxu0 %v737
      %v805 = vpop.f32.mrb[0].mxu0
      %v806 = vadd.f32 0.0, %v805
      %v807 = vpop.f32.mrb[0].mxu0
      %808 = vdwg.mxu0
      %810 = vrot.lane.b32.xlu0 %v472, 8
      %v811 = vpop.permute.xlu0 %810
      %814 = vrot.lane.b32.xlu0 %v639, 16
      %v815 = vpop.permute.xlu0 %814
      %818 = vrot.lane.b32.xlu0 %v806, 24
      %v819 = vpop.permute.xlu0 %818
      %v821 = vsel %vm144, %v305, %v811
      %vm822 = vcmask 130048
      %v823 = vsel %vm822, %v821, %v815
      %vm824 = vcmask 195584
      %v825 = vsel %vm824, %v823, %v819
      %vm826 = vcmask 261120
      %827 = vst.msk [vmem:[%s138] sm:$0xff] %vm826, %v825
      %p828 = scmp.lt.s32.totalorder %s13, 1
      %s829 = scalar_select %p828, %s13, 1
      %s830 = smul.addr %s829, 8
      %s831 = scalar_lea.vmem %s2, %s830
      // Predicated region
      $region29: #{decoder_layer.9} parent=27 // pred_check
        %p832 = pneg %p78
      $region30: #{decoder_layer.9} parent=27 // pred_check_branch
        %834 = sbr.rel (%p832) target = $region32
      $region31: #{decoder_layer.9} parent=27 // pred_region
        _
      $region32: #{decoder_layer.9} parent=27 // pred_fallthru
        _
    $region28: #{decoder_layer.9} parent=5 // pred_fallthru
      _
    %p835 = scmp.le.s32.totalorder 2, %s8
    // Predicated region
    $region33: #{decoder_layer.9} parent=5 // pred_check
      %p836 = pneg %p835
    $region34: #{decoder_layer.9} parent=5 // pred_check_branch
      %838 = sbr.rel (%p836) target = $region36
    $region35: #{decoder_layer.9} parent=5 // pred_region
      %s839 = ssub.s32 %s8, 2
      // Predicated region
      $region37: #{decoder_layer.9} parent=35 // pred_check
        %p840 = pneg %p84
      $region38: #{decoder_layer.9} parent=35 // pred_check_branch
        %842 = sbr.rel (%p840) target = $region40
      $region39: #{decoder_layer.9} parent=35 // pred_region
        %p843 = scmp.lt.s32.totalorder %s14, 1
        %s844 = scalar_select %p843, %s14, 1
        %s845 = smul.addr %s844, 8
        %s846 = scalar_lea.vmem %s2, %s845
      $region40: #{decoder_layer.9} parent=35 // pred_fallthru
        _
    $region36: #{decoder_layer.9} parent=5 // pred_fallthru
      _
  $region6: #{decoder_layer.9} parent=0 // loop_footer
    %s12 = sadd.s32 1, %s8
  $region7: #{decoder_layer.9} parent=0 // loop_footer_branch
    %7 = sbr.rel target = $region3
  $region8: #{decoder_layer.9} parent=0 // loop_exit
    _

// kernel: decoder_layer.11
$region0: #{decoder_layer.11}
  #allocation0 [shape = 'u32[]', space=smem, size = 0x4, offset = 0x4, fixed_abs, tag = 'smem constant byte address 0x4 - core index']
  #allocation1 [shape = 'u32[144,128]{1,0:T(1,128)}', space=vmem, size = 0x12000, scoped, tag = 'internal scratch']
  #allocation2 [shape = 'f32[16,32]{1,0:T(8,128)}', space=vmem, size = 0x2000, scoped, tag = 'scratch operand']
  %s0 = inlined_call_operand.vmem [shape: f32[16,32], index: 0, kind: input, shape index: {}]
  %s1 = inlined_call_operand.vmem [shape: f32[32,32], index: 1, kind: input, shape index: {}]
  %s2 = inlined_call_operand.vmem [shape: f32[1,32], index: 2, kind: input, shape index: {}]
  %s3 = inlined_call_operand.vmem [shape: f32[16,32], index: 3, kind: output, shape index: {}]
  %s4 = sld [smem:[#allocation0]]
  $region30: #{decoder_layer.11} parent=0
    _
  %s6 = ssub.s32 1, %s4
  %s7 = scalar_select 0, %s6, %s4
  // Predicated region
  $region2: #{decoder_layer.11} parent=0 // pred_check
    _
  $region3: #{decoder_layer.11} parent=0 // pred_check_branch
    %9 = sbr.rel (0) target = $region5
  $region4: #{decoder_layer.11} parent=0 // pred_region
    _
  $region5: #{decoder_layer.11} parent=0 // pred_fallthru
    _
  // Predicated region
  $region6: #{decoder_layer.11} parent=0 // pred_check
    _
  $region7: #{decoder_layer.11} parent=0 // pred_check_branch
    %11 = sbr.rel (0) target = $region9
  $region8: #{decoder_layer.11} parent=0 // pred_region
    _
  $region9: #{decoder_layer.11} parent=0 // pred_fallthru
    _
  // Predicated region
  $region10: #{decoder_layer.11} parent=0 // pred_check
    _
  $region11: #{decoder_layer.11} parent=0 // pred_check_branch
    %13 = sbr.rel (0) target = $region13
  $region12: #{decoder_layer.11} parent=0 // pred_region
    _
  $region13: #{decoder_layer.11} parent=0 // pred_fallthru
    _
  %p14 = scmp.eq.s32.totalorder 0, 0
  // Predicated region
  $region14: #{decoder_layer.11} parent=0 // pred_check
    %p15 = pneg %p14
  $region15: #{decoder_layer.11} parent=0 // pred_check_branch
    %17 = sbr.rel (%p15) target = $region17
  $region16: #{decoder_layer.11} parent=0 // pred_region
    %vm18 = vcmask 261120
    %19 = vst.msk [vmem:[#allocation2] sm:$0xff] %vm18, 0.0
    %20 = vst.msk [vmem:[#allocation2 + $0x8] sm:$0xff] %vm18, 0.0
  $region17: #{decoder_layer.11} parent=0 // pred_fallthru
    _
  %v21 = vld [vmem:[#allocation2] sm:$0xff]
  %v22 = vld [vmem:[#allocation2 + $0x8] sm:$0xff]
  %v23 = vld [vmem:[%s0] sm:$0xff]
  %v24 = vld [vmem:[%s0 + $0x8] sm:$0xff]
  %v25 = vld [vmem:[%s1] sm:$0xff]
  %v26 = vld [vmem:[%s1 + $0x8] sm:$0xff]
  %v27 = vld [vmem:[%s1 + $0x10] sm:$0xff]
  %v28 = vld [vmem:[%s1 + $0x18] sm:$0xff]
  %vm29 = vcmask 261120
  %v31 = vsel %vm29, %v23, 0
  %v34 = vsel %vm29, %v24, 0
  %36 = vmatprep.subr.mxu0 0.0
  %37 = vmatpush1.msra.mxu0 %v25
  %38 = vmatprep.subr.mxu0 0.0
  %39 = vmatpush1.msra.mxu0 %v26
  %40 = vmatprep.subr.mxu0 0.0
  %41 = vmatpush1.msra.mxu0 %v27
  %42 = vmatprep.subr.mxu0 0.0
  %43 = vmatpush1.msra.mxu0 %v28
  %44 = vmatprep.subr.mxu0 0.0
  %45 = vmatpush1.msra.mxu0 0.0
  %46 = vmatprep.subr.mxu0 0.0
  %47 = vmatpush1.msra.mxu0 0.0
  %48 = vmatprep.subr.mxu0 0.0
  %49 = vmatpush1.msra.mxu0 0.0
  %50 = vmatprep.subr.mxu0 0.0
  %51 = vmatpush1.msra.mxu0 0.0
  %52 = vmatprep.subr.mxu0 0.0
  %53 = vmatpush1.msra.mxu0 0.0
  %54 = vmatprep.subr.mxu0 0.0
  %55 = vmatpush1.msra.mxu0 0.0
  %56 = vmatprep.subr.mxu0 0.0
  %57 = vmatpush1.msra.mxu0 0.0
  %58 = vmatprep.subr.mxu0 0.0
  %59 = vmatpush1.msra.mxu0 0.0
  %60 = vmatprep.subr.mxu0 0.0
  %61 = vmatpush1.msra.mxu0 0.0
  %62 = vmatprep.subr.mxu0 0.0
  %63 = vmatpush1.msra.mxu0 0.0
  %64 = vmatprep.subr.mxu0 0.0
  %65 = vmatpush1.msra.mxu0 0.0
  %66 = vmatprep.subr.mxu0 0.0
  %67 = vmatpush1.msra.mxu0 0.0
  %68 = vmatprep.subr.mxu0 0.0
  %69 = vmatpush1.msra.mxu0 0.0
  %70 = vmatprep.subr.mxu0 0.0
  %71 = vmatpush1.msra.mxu0 0.0
  %72 = vmatprep.subr.mxu0 0.0
  %73 = vmatpush1.msra.mxu0 0.0
  %74 = vmatprep.subr.mxu0 0.0
  %75 = vmatpush1.msra.mxu0 0.0
  %76 = vmatprep.subr.mxu0 0.0
  %77 = vmatpush1.msra.mxu0 0.0
  %78 = vmatprep.subr.mxu0 0.0
  %79 = vmatpush1.msra.mxu0 0.0
  %80 = vmatprep.subr.mxu0 0.0
  %81 = vmatpush1.msra.mxu0 0.0
  %82 = vmatprep.subr.mxu0 0.0
  %83 = vmatpush1.msra.mxu0 0.0
  %84 = vmatprep.subr.mxu0 0.0
  %85 = vmatpush1.msra.mxu0 0.0
  %86 = vmatprep.subr.mxu0 0.0
  %87 = vmatpush1.msra.mxu0 0.0
  %88 = vmatprep.subr.mxu0 0.0
  %89 = vmatpush1.msra.mxu0 0.0
  %90 = vmatprep.subr.mxu0 0.0
  %91 = vmatpush1.msra.mxu0 0.0
  %92 = vmatprep.subr.mxu0 0.0
  %93 = vmatpush1.msra.mxu0 0.0
  %94 = vmatprep.subr.mxu0 0.0
  %95 = vmatpush1.msra.mxu0 0.0
  %96 = vmatprep.subr.mxu0 0.0
  %97 = vmatpush1.msra.mxu0 0.0
  %98 = vmatprep.subr.mxu0 0.0
  %99 = vmatpush1.msra.mxu0 0.0
  %100 = vmatprep.mubr.f32.mxu0 0.0
  %101 = vmatmul.mubr.f32.gmra.mrb[0].mxu0 %v31
  %v102 = vpop.f32.mrb[0].mxu0
  %v103 = vadd.f32 0.0, %v102
  %v104 = vpop.f32.mrb[0].mxu0
  %105 = vmatprep.mubr.f32.mxu0 0.0
  %106 = vmatmul.mubr.f32.gmra.mrb[0].mxu0 %v34
  %v107 = vpop.f32.mrb[0].mxu0
  %v108 = vadd.f32 0.0, %v107
  %v109 = vpop.f32.mrb[0].mxu0
  %110 = vdwg.mxu0
  %v111 = vadd.f32 %v21, %v103
  %v112 = vadd.f32 %v22, %v108
  %113 = vst.msk [vmem:[#allocation2] sm:$0xff] %vm29, %v111
  %114 = vst.msk [vmem:[#allocation2 + $0x8] sm:$0xff] %vm29, %v112
  // Predicated region
  $region18: #{decoder_layer.11} parent=0 // pred_check
    %p115 = pneg %p14
  $region19: #{decoder_layer.11} parent=0 // pred_check_branch
    %117 = sbr.rel (%p115) target = $region21
  $region20: #{decoder_layer.11} parent=0 // pred_region
    %v118 = vld [vmem:[#allocation2] sm:$0xff]
    %v119 = vld [vmem:[#allocation2 + $0x8] sm:$0xff]
    %v120 = vld [vmem:[%s2] sm:$0x1]
    %v122 = vlaneseq
    %v123 = vshrl.u32 %v122, 7
    %v124 = vsub.s32 0, %v123
    %v125 = vrot.slane %v120, %v124
    %v127 = vadd.f32 %v118, %v125
    %v128 = vadd.f32 %v119, %v125
    %129 = vst.msk [vmem:[%s3] sm:$0xff] %vm29, %v127
    %130 = vst.msk [vmem:[%s3 + $0x8] sm:$0xff] %vm29, %v128
  $region21: #{decoder_layer.11} parent=0 // pred_fallthru
    _
  // Predicated region
  $region22: #{decoder_layer.11} parent=0 // pred_check
    _
  $region23: #{decoder_layer.11} parent=0 // pred_check_branch
    %132 = sbr.rel (0) target = $region25
  $region24: #{decoder_layer.11} parent=0 // pred_region
    _
  $region25: #{decoder_layer.11} parent=0 // pred_fallthru
    _
  // Predicated region
  $region26: #{decoder_layer.11} parent=0 // pred_check
    _
  $region27: #{decoder_layer.11} parent=0 // pred_check_branch
    %134 = sbr.rel (0) target = $region29
  $region28: #{decoder_layer.11} parent=0 // pred_region
    _
  $region29: #{decoder_layer.11} parent=0 // pred_fallthru
    _

// kernel: decoder_layer.15
$region0: #{decoder_layer.15}
  #allocation0 [shape = 'u32[]', space=smem, size = 0x4, offset = 0x4, fixed_abs, tag = 'smem constant byte address 0x4 - core index']
  #allocation1 [shape = 'u32[144,128]{1,0:T(1,128)}', space=vmem, size = 0x12000, scoped, tag = 'internal scratch']
  #allocation2 [shape = 'f32[16,32]{1,0:T(8,128)}', space=vmem, size = 0x2000, scoped, tag = 'scratch operand']
  %s0 = inlined_call_operand.vmem [shape: f32[16,32], index: 0, kind: input, shape index: {}]
  %s1 = inlined_call_operand.vmem [shape: f32[32,64], index: 1, kind: input, shape index: {}]
  %s2 = inlined_call_operand.vmem [shape: f32[1,64], index: 2, kind: input, shape index: {}]
  %s3 = inlined_call_operand.vmem [shape: f32[64,32], index: 3, kind: input, shape index: {}]
  %s4 = inlined_call_operand.vmem [shape: f32[1,32], index: 4, kind: input, shape index: {}]
  %s5 = inlined_call_operand.vmem [shape: f32[1,32], index: 5, kind: input, shape index: {}]
  %s6 = inlined_call_operand.vmem [shape: f32[1,32], index: 6, kind: input, shape index: {}]
  %s7 = inlined_call_operand.hbm [shape: f32[16,32], index: 7, kind: output, shape index: {}]
  %s8 = sld [smem:[#allocation0]]
  $region46: #{decoder_layer.15} parent=0
    _
  %s10 = ssub.s32 1, %s8
  %s11 = scalar_select 0, %s10, %s8
  $region1: #{decoder_layer.15} parent=0
    #allocation3 [shape = 'u8[8192]{0}', space=vmem, size = 0x2000, scoped, tag = 'output window, operand 0, single buffered']
    #allocation4 [shape = 's32[1]{0}', space=sflag, size = 0x4, scoped, tag = 'scoped memory for decoder_layer.15']
    %12 = vsyncpa [#allocation4], 0
    // Predicated region
    $region2: #{decoder_layer.15} parent=1 // pred_check
      _
    $region3: #{decoder_layer.15} parent=1 // pred_check_branch
      %14 = sbr.rel (0) target = $region5
    $region4: #{decoder_layer.15} parent=1 // pred_region
      _
    $region5: #{decoder_layer.15} parent=1 // pred_fallthru
      _
    // Predicated region
    $region6: #{decoder_layer.15} parent=1 // pred_check
      _
    $region7: #{decoder_layer.15} parent=1 // pred_check_branch
      %16 = sbr.rel (0) target = $region9
    $region8: #{decoder_layer.15} parent=1 // pred_region
      _
    $region9: #{decoder_layer.15} parent=1 // pred_fallthru
      _
    // Predicated region
    $region10: #{decoder_layer.15} parent=1 // pred_check
      _
    $region11: #{decoder_layer.15} parent=1 // pred_check_branch
      %18 = sbr.rel (0) target = $region13
    $region12: #{decoder_layer.15} parent=1 // pred_region
      _
    $region13: #{decoder_layer.15} parent=1 // pred_fallthru
      _
    // Predicated region
    $region14: #{decoder_layer.15} parent=1 // pred_check
      _
    $region15: #{decoder_layer.15} parent=1 // pred_check_branch
      %20 = sbr.rel (0) target = $region17
    $region16: #{decoder_layer.15} parent=1 // pred_region
      _
    $region17: #{decoder_layer.15} parent=1 // pred_fallthru
      _
    // Predicated region
    $region18: #{decoder_layer.15} parent=1 // pred_check
      _
    $region19: #{decoder_layer.15} parent=1 // pred_check_branch
      %22 = sbr.rel (0) target = $region21
    $region20: #{decoder_layer.15} parent=1 // pred_region
      _
    $region21: #{decoder_layer.15} parent=1 // pred_fallthru
      _
    // Predicated region
    $region22: #{decoder_layer.15} parent=1 // pred_check
      _
    $region23: #{decoder_layer.15} parent=1 // pred_check_branch
      %24 = sbr.rel (0) target = $region25
    $region24: #{decoder_layer.15} parent=1 // pred_region
      _
    $region25: #{decoder_layer.15} parent=1 // pred_fallthru
      _
    // Predicated region
    $region26: #{decoder_layer.15} parent=1 // pred_check
      _
    $region27: #{decoder_layer.15} parent=1 // pred_check_branch
      %26 = sbr.rel (0) target = $region29
    $region28: #{decoder_layer.15} parent=1 // pred_region
      _
    $region29: #{decoder_layer.15} parent=1 // pred_fallthru
      _
    %p27 = scmp.eq.s32.totalorder 0, 0
    // Predicated region
    $region30: #{decoder_layer.15} parent=1 // pred_check
      %p28 = pneg %p27
    $region31: #{decoder_layer.15} parent=1 // pred_check_branch
      %30 = sbr.rel (%p28) target = $region33
    $region32: #{decoder_layer.15} parent=1 // pred_region
      %vm31 = vcmask 261120
      %32 = vst.msk [vmem:[#allocation2] sm:$0xff] %vm31, 0.0
      %33 = vst.msk [vmem:[#allocation2 + $0x8] sm:$0xff] %vm31, 0.0
    $region33: #{decoder_layer.15} parent=1 // pred_fallthru
      _
    %v34 = vld [vmem:[%s0] sm:$0xff]
    %v35 = vld [vmem:[%s0 + $0x8] sm:$0xff]
    %v36 = vld [vmem:[%s1] sm:$0xff]
    %v37 = vld [vmem:[%s1 + $0x8] sm:$0xff]
    %v38 = vld [vmem:[%s1 + $0x10] sm:$0xff]
    %v39 = vld [vmem:[%s1 + $0x18] sm:$0xff]
    %v40 = vld [vmem:[%s2] sm:$0x1]
    %v42 = vlaneseq
    %v43 = vshrl.u32 %v42, 7
    %v44 = vsub.s32 0, %v43
    %v45 = vrot.slane %v40, %v44
    %vm47 = vcmask 261120
    %v49 = vsel %vm47, %v34, 0
    %v52 = vsel %vm47, %v35, 0
    %54 = vmatprep.subr.mxu0 0.0
    %55 = vmatpush1.msra.mxu0 %v36
    %56 = vmatprep.subr.mxu0 0.0
    %57 = vmatpush1.msra.mxu0 %v37
    %58 = vmatprep.subr.mxu0 0.0
    %59 = vmatpush1.msra.mxu0 %v38
    %60 = vmatprep.subr.mxu0 0.0
    %61 = vmatpush1.msra.mxu0 %v39
    %62 = vmatprep.subr.mxu0 0.0
    %63 = vmatpush1.msra.mxu0 0.0
    %64 = vmatprep.subr.mxu0 0.0
    %65 = vmatpush1.msra.mxu0 0.0
    %66 = vmatprep.subr.mxu0 0.0
    %67 = vmatpush1.msra.mxu0 0.0
    %68 = vmatprep.subr.mxu0 0.0
    %69 = vmatpush1.msra.mxu0 0.0
    %70 = vmatprep.subr.mxu0 0.0
    %71 = vmatpush1.msra.mxu0 0.0
    %72 = vmatprep.subr.mxu0 0.0
    %73 = vmatpush1.msra.mxu0 0.0
    %74 = vmatprep.subr.mxu0 0.0
    %75 = vmatpush1.msra.mxu0 0.0
    %76 = vmatprep.subr.mxu0 0.0
    %77 = vmatpush1.msra.mxu0 0.0
    %78 = vmatprep.subr.mxu0 0.0
    %79 = vmatpush1.msra.mxu0 0.0
    %80 = vmatprep.subr.mxu0 0.0
    %81 = vmatpush1.msra.mxu0 0.0
    %82 = vmatprep.subr.mxu0 0.0
    %83 = vmatpush1.msra.mxu0 0.0
    %84 = vmatprep.subr.mxu0 0.0
    %85 = vmatpush1.msra.mxu0 0.0
    %86 = vmatprep.subr.mxu0 0.0
    %87 = vmatpush1.msra.mxu0 0.0
    %88 = vmatprep.subr.mxu0 0.0
    %89 = vmatpush1.msra.mxu0 0.0
    %90 = vmatprep.subr.mxu0 0.0
    %91 = vmatpush1.msra.mxu0 0.0
    %92 = vmatprep.subr.mxu0 0.0
    %93 = vmatpush1.msra.mxu0 0.0
    %94 = vmatprep.subr.mxu0 0.0
    %95 = vmatpush1.msra.mxu0 0.0
    %96 = vmatprep.subr.mxu0 0.0
    %97 = vmatpush1.msra.mxu0 0.0
    %98 = vmatprep.subr.mxu0 0.0
    %99 = vmatpush1.msra.mxu0 0.0
    %100 = vmatprep.subr.mxu0 0.0
    %101 = vmatpush1.msra.mxu0 0.0
    %102 = vmatprep.subr.mxu0 0.0
    %103 = vmatpush1.msra.mxu0 0.0
    %104 = vmatprep.subr.mxu0 0.0
    %105 = vmatpush1.msra.mxu0 0.0
    %106 = vmatprep.subr.mxu0 0.0
    %107 = vmatpush1.msra.mxu0 0.0
    %108 = vmatprep.subr.mxu0 0.0
    %109 = vmatpush1.msra.mxu0 0.0
    %110 = vmatprep.subr.mxu0 0.0
    %111 = vmatpush1.msra.mxu0 0.0
    %112 = vmatprep.subr.mxu0 0.0
    %113 = vmatpush1.msra.mxu0 0.0
    %114 = vmatprep.subr.mxu0 0.0
    %115 = vmatpush1.msra.mxu0 0.0
    %116 = vmatprep.subr.mxu0 0.0
    %117 = vmatpush1.msra.mxu0 0.0
    %118 = vmatprep.mubr.f32.mxu0 0.0
    %119 = vmatmul.mubr.f32.gmra.mrb[0].mxu0 %v49
    %v120 = vpop.f32.mrb[0].mxu0
    %v121 = vadd.f32 %v45, %v120
    %v122 = vpop.f32.mrb[0].mxu0
    %123 = vmatprep.mubr.f32.mxu0 0.0
    %124 = vmatmul.mubr.f32.gmra.mrb[0].mxu0 %v52
    %v125 = vpop.f32.mrb[0].mxu0
    %v126 = vadd.f32 %v45, %v125
    %v127 = vpop.f32.mrb[0].mxu0
    %128 = vdwg.mxu0
    %v129 = vmax.f32 %v121, 0.0
    %v130 = vmax.f32 %v126, 0.0
    %v131 = vld [vmem:[#allocation2] sm:$0xff]
    %v132 = vld [vmem:[#allocation2 + $0x8] sm:$0xff]
    %v133 = vld [vmem:[%s3] sm:$0xff]
    %v134 = vld [vmem:[%s3 + $0x8] sm:$0xff]
    %v135 = vld [vmem:[%s3 + $0x10] sm:$0xff]
    %v136 = vld [vmem:[%s3 + $0x18] sm:$0xff]
    %v137 = vld [vmem:[%s3 + $0x20] sm:$0xff]
    %v138 = vld [vmem:[%s3 + $0x28] sm:$0xff]
    %v139 = vld [vmem:[%s3 + $0x30] sm:$0xff]
    %v140 = vld [vmem:[%s3 + $0x38] sm:$0xff]
    %vm141 = vcmask 523264
    %v143 = vsel %vm141, %v129, 0
    %v146 = vsel %vm141, %v130, 0
    %148 = vmatprep.subr.mxu0 0.0
    %149 = vmatpush1.msra.mxu0 %v133
    %150 = vmatprep.subr.mxu0 0.0
    %151 = vmatpush1.msra.mxu0 %v134
    %152 = vmatprep.subr.mxu0 0.0
    %153 = vmatpush1.msra.mxu0 %v135
    %154 = vmatprep.subr.mxu0 0.0
    %155 = vmatpush1.msra.mxu0 %v136
    %156 = vmatprep.subr.mxu0 0.0
    %157 = vmatpush1.msra.mxu0 %v137
    %158 = vmatprep.subr.mxu0 0.0
    %159 = vmatpush1.msra.mxu0 %v138
    %160 = vmatprep.subr.mxu0 0.0
    %161 = vmatpush1.msra.mxu0 %v139
    %162 = vmatprep.subr.mxu0 0.0
    %163 = vmatpush1.msra.mxu0 %v140
    %164 = vmatprep.subr.mxu0 0.0
    %165 = vmatpush1.msra.mxu0 0.0
    %166 = vmatprep.subr.mxu0 0.0
    %167 = vmatpush1.msra.mxu0 0.0
    %168 = vmatprep.subr.mxu0 0.0
    %169 = vmatpush1.msra.mxu0 0.0
    %170 = vmatprep.subr.mxu0 0.0
    %171 = vmatpush1.msra.mxu0 0.0
    %172 = vmatprep.subr.mxu0 0.0
    %173 = vmatpush1.msra.mxu0 0.0
    %174 = vmatprep.subr.mxu0 0.0
    %175 = vmatpush1.msra.mxu0 0.0
    %176 = vmatprep.subr.mxu0 0.0
    %177 = vmatpush1.msra.mxu0 0.0
    %178 = vmatprep.subr.mxu0 0.0
    %179 = vmatpush1.msra.mxu0 0.0
    %180 = vmatprep.subr.mxu0 0.0
    %181 = vmatpush1.msra.mxu0 0.0
    %182 = vmatprep.subr.mxu0 0.0
    %183 = vmatpush1.msra.mxu0 0.0
    %184 = vmatprep.subr.mxu0 0.0
    %185 = vmatpush1.msra.mxu0 0.0
    %186 = vmatprep.subr.mxu0 0.0
    %187 = vmatpush1.msra.mxu0 0.0
    %188 = vmatprep.subr.mxu0 0.0
    %189 = vmatpush1.msra.mxu0 0.0
    %190 = vmatprep.subr.mxu0 0.0
    %191 = vmatpush1.msra.mxu0 0.0
    %192 = vmatprep.subr.mxu0 0.0
    %193 = vmatpush1.msra.mxu0 0.0
    %194 = vmatprep.subr.mxu0 0.0
    %195 = vmatpush1.msra.mxu0 0.0
    %196 = vmatprep.subr.mxu0 0.0
    %197 = vmatpush1.msra.mxu0 0.0
    %198 = vmatprep.subr.mxu0 0.0
    %199 = vmatpush1.msra.mxu0 0.0
    %200 = vmatprep.subr.mxu0 0.0
    %201 = vmatpush1.msra.mxu0 0.0
    %202 = vmatprep.subr.mxu0 0.0
    %203 = vmatpush1.msra.mxu0 0.0
    %204 = vmatprep.subr.mxu0 0.0
    %205 = vmatpush1.msra.mxu0 0.0
    %206 = vmatprep.subr.mxu0 0.0
    %207 = vmatpush1.msra.mxu0 0.0
    %208 = vmatprep.subr.mxu0 0.0
    %209 = vmatpush1.msra.mxu0 0.0
    %210 = vmatprep.subr.mxu0 0.0
    %211 = vmatpush1.msra.mxu0 0.0
    %212 = vmatprep.mubr.f32.mxu0 0.0
    %213 = vmatmul.mubr.f32.gmra.mrb[0].mxu0 %v143
    %v214 = vpop.f32.mrb[0].mxu0
    %v215 = vadd.f32 0.0, %v214
    %v216 = vpop.f32.mrb[0].mxu0
    %217 = vmatprep.mubr.f32.mxu0 0.0
    %218 = vmatmul.mubr.f32.gmra.mrb[0].mxu0 %v146
    %v219 = vpop.f32.mrb[0].mxu0
    %v220 = vadd.f32 0.0, %v219
    %v221 = vpop.f32.mrb[0].mxu0
    %222 = vdwg.mxu0
    %v223 = vadd.f32 %v131, %v215
    %v224 = vadd.f32 %v132, %v220
    %225 = vst.msk [vmem:[#allocation2] sm:$0xff] %vm47, %v223
    %226 = vst.msk [vmem:[#allocation2 + $0x8] sm:$0xff] %vm47, %v224
    // Predicated region
    $region34: #{decoder_layer.15} parent=1 // pred_check
      %p227 = pneg %p27
    $region35: #{decoder_layer.15} parent=1 // pred_check_branch
      %229 = sbr.rel (%p227) target = $region37
    $region36: #{decoder_layer.15} parent=1 // pred_region
      %v230 = vld [vmem:[#allocation2] sm:$0xff]
      %v231 = vld [vmem:[#allocation2 + $0x8] sm:$0xff]
      %v232 = vld [vmem:[%s4] sm:$0x1]
      %v234 = vlaneseq
      %v235 = vshrl.u32 %v234, 7
      %v236 = vsub.s32 0, %v235
      %v237 = vrot.slane %v232, %v236
      %v239 = vadd.f32 %v230, %v237
      %v240 = vadd.f32 %v231, %v237
      %v241 = vld [vmem:[%s0] sm:$0xff]
      %v242 = vld [vmem:[%s0 + $0x8] sm:$0xff]
      %v243 = vadd.f32 %v239, %v241
      %v244 = vadd.f32 %v240, %v242
      %v245 = vsel %vm47, %v243, 0.0
      %246 = vadd.xlane.f32.xlu0 %v245
      %v247 = vpop.xlane.xlu0 %246
      %v248 = vsel %vm47, %v244, 0.0
      %249 = vadd.xlane.f32.xlu0 %v248
      %v250 = vpop.xlane.xlu0 %249
      %v251 = vrcp.pop 32.0
      %v252 = vmul.f32 %v247, %v251
      %v253 = vmul.f32 %v250, %v251
      %v254 = vsub.f32 %v243, %v252
      %v255 = vsub.f32 %v244, %v253
      %v256 = vmul.f32 %v254, %v254
      %v257 = vmul.f32 %v255, %v255
      %v258 = vsel %vm47, %v256, 0.0
      %259 = vadd.xlane.f32.xlu0 %v258
      %v260 = vpop.xlane.xlu0 %259
      %v261 = vsel %vm47, %v257, 0.0
      %262 = vadd.xlane.f32.xlu0 %v261
      %v263 = vpop.xlane.xlu0 %262
      %v264 = vmul.f32 %v260, %v251
      %v265 = vmul.f32 %v263, %v251
      %v266 = vadd.f32 %v264, 1e-05
      %v267 = vadd.f32 %v265, 1e-05
      %v268 = vrsqrt.pop %v266
      %v269 = vrsqrt.pop %v267
      %v270 = vmul.f32 %v254, %v268
      %v271 = vmul.f32 %v255, %v269
      %v272 = vld [vmem:[%s5] sm:$0x1]
      %v274 = vlaneseq
      %v275 = vshrl.u32 %v274, 7
      %v276 = vsub.s32 0, %v275
      %v277 = vrot.slane %v272, %v276
      %v279 = vmul.f32 %v270, %v277
      %v280 = vmul.f32 %v271, %v277
      %v281 = vld [vmem:[%s6] sm:$0x1]
      %v283 = vlaneseq
      %v284 = vshrl.u32 %v283, 7
      %v285 = vsub.s32 0, %v284
      %v286 = vrot.slane %v281, %v285
      %v288 = vadd.f32 %v279, %v286
      %v289 = vadd.f32 %v280, %v286
      %290 = vst.msk [vmem:[#allocation3] sm:$0xff] %vm47, %v288
      %291 = vst.msk [vmem:[#allocation3 + $0x8] sm:$0xff] %vm47, %v289
    $region37: #{decoder_layer.15} parent=1 // pred_fallthru
      _
    // Predicated region
    $region38: #{decoder_layer.15} parent=1 // pred_check
      _
    $region39: #{decoder_layer.15} parent=1 // pred_check_branch
      %293 = sbr.rel (0) target = $region41
    $region40: #{decoder_layer.15} parent=1 // pred_region
      %s295 = ssub.s32 256, 256
      %296 = vsyncadd [#allocation4], %s295
      %s297 = sshll.u32 [#allocation3], 4
      %s298 = int_to_ptr.vmem [resolvable:$true] %s297
      %303 = dma.vmem_to_hbm [thread:$0]  %s298, 256, %s7, [#allocation4], 128, 128, 8
    $region41: #{decoder_layer.15} parent=1 // pred_fallthru
      _
    // Predicated region
    $region42: #{decoder_layer.15} parent=1 // pred_check
      _
    $region43: #{decoder_layer.15} parent=1 // pred_check_branch
      %305 = sbr.rel (0) target = $region45
    $region44: #{decoder_layer.15} parent=1 // pred_region
      %306 = dma.done [#allocation4], 256
    $region45: #{decoder_layer.15} parent=1 // pred_fallthru
      _
    %307 = vsyncpa [#allocation4], 1

// kernel: decoder_layer.13
$region0: #{decoder_layer.13}
  #allocation0 [shape = 'u32[]', space=smem, size = 0x4, offset = 0x4, fixed_abs, tag = 'smem constant byte address 0x4 - core index']
  #allocation1 [shape = 'u32[144,128]{1,0:T(1,128)}', space=vmem, size = 0x12000, scoped, tag = 'internal scratch']
  %s0 = inlined_call_operand.vmem [shape: f32[2,8,32], index: 0, kind: input, shape index: {}]
  %s1 = inlined_call_operand.vmem [shape: f32[2,8,64], index: 1, kind: input, shape index: {}]
  %s2 = inlined_call_operand.vmem [shape: f32[8,8], index: 2, kind: input, shape index: {}]
  %s3 = inlined_call_operand.vmem [shape: f32[2,8,32], index: 3, kind: output, shape index: {}]
  %s4 = sld [smem:[#allocation0]]
  $region45: #{decoder_layer.13} parent=0
    _
  %s6 = ssub.s32 1, %s4
  %s7 = scalar_select 0, %s6, %s4
  loop: start=0, step=1, limit=4
  $region2: #{decoder_layer.13} parent=0 // loop_pre_header
    _
  $region3: #{decoder_layer.13} parent=0 // loop_header
    %s9 = sphi 0, %s13
    %p10 = scmp.ge.s32.totalorder %s9, 4
    %s19 = sphi 0, %s21
    %s22 = sphi 0, %s19
    %s23 = sphi 0, %s22
    %s39 = sphi 0, %s23
    %s45 = sphi 0, %s47
    %s48 = sphi 0, %s45
    %s49 = sphi 0, %s48
    %s65 = sphi 0, %s49
    %s69 = sphi 0, %s69
    %s71 = sphi 0, %s69
    %s72 = sphi 0, %s71
    %s86 = sphi 0, %s72
    %s92 = sphi 0, %s94
    %s95 = sphi 0, %s92
    %s96 = sphi 0, %s95
    %s112 = sphi 0, %s96
  $region4: #{decoder_layer.13} parent=0 // loop_header_branch
    %12 = sbr.rel (%p10) target = $region8
  $region5: #{decoder_layer.13} parent=0 // loop_body
    %s14 = ssub.s32 %s9, 1
    %s15 = ssub.s32 %s9, 2
    %s16 = sadd.s32 %s9, 1
    %s17 = ssub.s32 %s9, %s16
    %p18 = scmp.eq.s32.totalorder %s17, 0
    %s20 = sadd.s32 %s19, 1
    %s21 = scalar_select %p18, %s19, %s20
    %p24 = pneg %p18
    %p25 = scmp.eq.s32.totalorder %s9, 1
    %p26 = por %p24, %p25
    %p27 = scmp.ne.s32.totalorder %s19, %s22
    %p28 = scmp.eq.s32.totalorder %s9, 0
    %p29 = por %p27, %p28
    %p30 = scmp.ne.s32.totalorder %s19, %s22
    %p31 = scmp.eq.s32.totalorder %s14, 1
    %p32 = por %p30, %p31
    %p33 = scmp.ne.s32.totalorder %s22, %s23
    %p34 = scmp.eq.s32.totalorder %s14, 0
    %p35 = por %p33, %p34
    %p36 = scmp.ne.s32.totalorder %s22, %s23
    %p37 = scmp.eq.s32.totalorder %s15, 1
    %p38 = por %p36, %p37
    %p40 = scmp.ne.s32.totalorder %s23, %s39
    %p41 = scmp.eq.s32.totalorder %s15, 0
    %p42 = por %p40, %p41
    %s43 = ssub.s32 %s9, %s16
    %p44 = scmp.eq.s32.totalorder %s43, 0
    %s46 = sadd.s32 %s45, 1
    %s47 = scalar_select %p44, %s45, %s46
    %p50 = pneg %p44
    %p51 = scmp.eq.s32.totalorder %s9, 1
    %p52 = por %p50, %p51
    %p53 = scmp.ne.s32.totalorder %s45, %s48
    %p54 = scmp.eq.s32.totalorder %s9, 0
    %p55 = por %p53, %p54
    %p56 = scmp.ne.s32.totalorder %s45, %s48
    %p57 = scmp.eq.s32.totalorder %s14, 1
    %p58 = por %p56, %p57
    %p59 = scmp.ne.s32.totalorder %s48, %s49
    %p60 = scmp.eq.s32.totalorder %s14, 0
    %p61 = por %p59, %p60
    %p62 = scmp.ne.s32.totalorder %s48, %s49
    %p63 = scmp.eq.s32.totalorder %s15, 1
    %p64 = por %p62, %p63
    %p66 = scmp.ne.s32.totalorder %s49, %s65
    %p67 = scmp.eq.s32.totalorder %s15, 0
    %p68 = por %p66, %p67
    %s70 = sadd.s32 %s69, 1
    %p73 = scmp.eq.s32.totalorder %s9, 1
    %p74 = scmp.ne.s32.totalorder %s69, %s71
    %p75 = scmp.eq.s32.totalorder %s9, 0
    %p76 = por %p74, %p75
    %p77 = scmp.ne.s32.totalorder %s69, %s71
    %p78 = scmp.eq.s32.totalorder %s14, 1
    %p79 = por %p77, %p78
    %p80 = scmp.ne.s32.totalorder %s71, %s72
    %p81 = scmp.eq.s32.totalorder %s14, 0
    %p82 = por %p80, %p81
    %p83 = scmp.ne.s32.totalorder %s71, %s72
    %p84 = scmp.eq.s32.totalorder %s15, 1
    %p85 = por %p83, %p84
    %p87 = scmp.ne.s32.totalorder %s72, %s86
    %p88 = scmp.eq.s32.totalorder %s15, 0
    %p89 = por %p87, %p88
    %s90 = ssub.s32 %s9, %s16
    %p91 = scmp.eq.s32.totalorder %s90, 0
    %s93 = sadd.s32 %s92, 1
    %s94 = scalar_select %p91, %s92, %s93
    %p97 = pneg %p91
    %p98 = scmp.eq.s32.totalorder %s9, 1
    %p99 = por %p97, %p98
    %p100 = scmp.ne.s32.totalorder %s92, %s95
    %p101 = scmp.eq.s32.totalorder %s9, 0
    %p102 = por %p100, %p101
    %p103 = scmp.ne.s32.totalorder %s92, %s95
    %p104 = scmp.eq.s32.totalorder %s14, 1
    %p105 = por %p103, %p104
    %p106 = scmp.ne.s32.totalorder %s95, %s96
    %p107 = scmp.eq.s32.totalorder %s14, 0
    %p108 = por %p106, %p107
    %p109 = scmp.ne.s32.totalorder %s95, %s96
    %p110 = scmp.eq.s32.totalorder %s15, 1
    %p111 = por %p109, %p110
    %p113 = scmp.ne.s32.totalorder %s96, %s112
    %p114 = scmp.eq.s32.totalorder %s15, 0
    %p115 = por %p113, %p114
    %p116 = scmp.le.s32.totalorder 1, %s9
    %p117 = scmp.lt.s32.totalorder %s9, 3
    %p118 = pnand %p116, %p117
    %p119 = pneg %p118
    // Predicated region
    $region9: #{decoder_layer.13} parent=5 // pred_check
      _
    $region10: #{decoder_layer.13} parent=5 // pred_check_branch
      %121 = sbr.rel (%p118) target = $region12
    $region11: #{decoder_layer.13} parent=5 // pred_region
      %s122 = ssub.s32 %s9, 1
      // Predicated region
      $region13: #{decoder_layer.13} parent=11 // pred_check
        %p123 = pneg %p82
      $region14: #{decoder_layer.13} parent=11 // pred_check_branch
        %125 = sbr.rel (%p123) target = $region16
      $region15: #{decoder_layer.13} parent=11 // pred_region
        _
      $region16: #{decoder_layer.13} parent=11 // pred_fallthru
        _
    $region12: #{decoder_layer.13} parent=5 // pred_fallthru
      _
    %p126 = scmp.lt.s32.totalorder %s9, 2
    // Predicated region
    $region17: #{decoder_layer.13} parent=5 // pred_check
      %p127 = pneg %p126
    $region18: #{decoder_layer.13} parent=5 // pred_check_branch
      %129 = sbr.rel (%p127) target = $region20
    $region19: #{decoder_layer.13} parent=5 // pred_region
      // Predicated region
      $region21: #{decoder_layer.13} parent=19 // pred_check
        %p130 = pneg %p29
      $region22: #{decoder_layer.13} parent=19 // pred_check_branch
        %132 = sbr.rel (%p130) target = $region24
      $region23: #{decoder_layer.13} parent=19 // pred_region
        %p133 = scmp.lt.s32.totalorder %s9, 1
        %s134 = scalar_select %p133, %s9, 1
        %s135 = smul.addr %s134, 8
        %s136 = scalar_lea.vmem %s0, %s135
      $region24: #{decoder_layer.13} parent=19 // pred_fallthru
        _
      // Predicated region
      $region25: #{decoder_layer.13} parent=19 // pred_check
        %p137 = pneg %p55
      $region26: #{decoder_layer.13} parent=19 // pred_check_branch
        %139 = sbr.rel (%p137) target = $region28
      $region27: #{decoder_layer.13} parent=19 // pred_region
        %p140 = scmp.lt.s32.totalorder %s9, 1
        %s141 = scalar_select %p140, %s9, 1
        %s142 = smul.addr %s141, 8
        %s143 = scalar_lea.vmem %s1, %s142
      $region28: #{decoder_layer.13} parent=19 // pred_fallthru
        _
    $region20: #{decoder_layer.13} parent=5 // pred_fallthru
      _
    %p144 = scmp.le.s32.totalorder 1, %s9
    %p145 = scmp.lt.s32.totalorder %s9, 3
    %p146 = pnand %p144, %p145
    %p147 = pneg %p146
    // Predicated region
    $region29: #{decoder_layer.13} parent=5 // pred_check
      _
    $region30: #{decoder_layer.13} parent=5 // pred_check_branch
      %149 = sbr.rel (%p146) target = $region32
    $region31: #{decoder_layer.13} parent=5 // pred_region
      %s150 = ssub.s32 %s9, 1
      %p151 = scmp.lt.s32.totalorder %s14, 1
      %s152 = scalar_select %p151, %s14, 1
      %s153 = smul.addr %s152, 8
      %s154 = scalar_lea.vmem %s0, %s153
      %p155 = pneg %p35
      %p156 = pneg %p32
      %p157 = scmp.lt.s32.totalorder %s14, 1
      %s158 = scalar_select %p157, %s14, 1
      %s159 = smul.addr %s158, 8
      %s160 = scalar_lea.vmem %s1, %s159
      %p161 = pneg %p61
      %p162 = pneg %p58
      %p163 = pneg %p82
      %p164 = pneg %p79
      %p165 = pneg %p108
      %p166 = pneg %p105
      %p167 = scmp.lt.s32.totalorder %s14, 1
      %s168 = scalar_select %p167, %s14, 1
      %s169 = smul.addr %s168, 8
      %s170 = scalar_lea.vmem %s3, %s169
      %p171 = scmp.lt.s32.totalorder %s14, 1
      %s172 = scalar_select %p171, %s14, 1
      %s173 = smul.addr %s172, 8
      %s174 = scalar_lea.vmem %s0, %s173
      %p175 = scmp.lt.s32.totalorder %s14, 1
      %s176 = scalar_select %p175, %s14, 1
      %s177 = smul.addr %s176, 8
      %s178 = scalar_lea.vmem %s1, %s177
      %p179 = scmp.lt.s32.totalorder %s14, 1
      %s180 = scalar_select %p179, %s14, 1
      %s181 = smul.addr %s180, 8
      %s182 = scalar_lea.vmem %s3, %s181
      %v183 = vld [vmem:[%s174] sm:$0xff]
      %v184 = vld [vmem:[%s178] sm:$0xff]
      %v185 = vld [vmem:[%s2] sm:$0xff]
      %vm186 = vcmask 64512
      %v188 = vsel %vm186, %v183, 0
      %v191 = vsel %vm186, %v184, 0
      %193 = vmatprep.subr.mxu0 0.0
      %194 = vmatpush1.xpose.msra.mxu0 %v191
      %195 = vmatprep.subr.mxu0 0.0
      %196 = vmatpush1.xpose.msra.mxu0 0.0
      %197 = vmatprep.subr.mxu0 0.0
      %198 = vmatpush1.xpose.msra.mxu0 0.0
      %199 = vmatprep.subr.mxu0 0.0
      %200 = vmatpush1.xpose.msra.mxu0 0.0
      %201 = vmatprep.subr.mxu0 0.0
      %202 = vmatpush1.xpose.msra.mxu0 0.0
      %203 = vmatprep.subr.mxu0 0.0
      %204 = vmatpush1.xpose.msra.mxu0 0.0
      %205 = vmatprep.subr.mxu0 0.0
      %206 = vmatpush1.xpose.msra.mxu0 0.0
      %207 = vmatprep.subr.mxu0 0.0
      %208 = vmatpush1.xpose.msra.mxu0 0.0
      %209 = vmatprep.subr.mxu0 0.0
      %210 = vmatpush1.xpose.msra.mxu0 0.0
      %211 = vmatprep.subr.mxu0 0.0
      %212 = vmatpush1.xpose.msra.mxu0 0.0
      %213 = vmatprep.subr.mxu0 0.0
      %214 = vmatpush1.xpose.msra.mxu0 0.0
      %215 = vmatprep.subr.mxu0 0.0
      %216 = vmatpush1.xpose.msra.mxu0 0.0
      %217 = vmatprep.subr.mxu0 0.0
      %218 = vmatpush1.xpose.msra.mxu0 0.0
      %219 = vmatprep.subr.mxu0 0.0
      %220 = vmatpush1.xpose.msra.mxu0 0.0
      %221 = vmatprep.subr.mxu0 0.0
      %222 = vmatpush1.xpose.msra.mxu0 0.0
      %223 = vmatprep.subr.mxu0 0.0
      %224 = vmatpush1.xpose.msra.mxu0 0.0
      %225 = vmatprep.subr.mxu0 0.0
      %226 = vmatpush1.xpose.msra.mxu0 0.0
      %227 = vmatprep.subr.mxu0 0.0
      %228 = vmatpush1.xpose.msra.mxu0 0.0
      %229 = vmatprep.subr.mxu0 0.0
      %230 = vmatpush1.xpose.msra.mxu0 0.0
      %231 = vmatprep.subr.mxu0 0.0
      %232 = vmatpush1.xpose.msra.mxu0 0.0
      %233 = vmatprep.subr.mxu0 0.0
      %234 = vmatpush1.xpose.msra.mxu0 0.0
      %235 = vmatprep.subr.mxu0 0.0
      %236 = vmatpush1.xpose.msra.mxu0 0.0
      %237 = vmatprep.subr.mxu0 0.0
      %238 = vmatpush1.xpose.msra.mxu0 0.0
      %239 = vmatprep.subr.mxu0 0.0
      %240 = vmatpush1.xpose.msra.mxu0 0.0
      %241 = vmatprep.subr.mxu0 0.0
      %242 = vmatpush1.xpose.msra.mxu0 0.0
      %243 = vmatprep.subr.mxu0 0.0
      %244 = vmatpush1.xpose.msra.mxu0 0.0
      %245 = vmatprep.subr.mxu0 0.0
      %246 = vmatpush1.xpose.msra.mxu0 0.0
      %247 = vmatprep.subr.mxu0 0.0
      %248 = vmatpush1.xpose.msra.mxu0 0.0
      %249 = vmatprep.subr.mxu0 0.0
      %250 = vmatpush1.xpose.msra.mxu0 0.0
      %251 = vmatprep.subr.mxu0 0.0
      %252 = vmatpush1.xpose.msra.mxu0 0.0
      %253 = vmatprep.subr.mxu0 0.0
      %254 = vmatpush1.xpose.msra.mxu0 0.0
      %255 = vmatprep.subr.mxu0 0.0
      %256 = vmatpush1.xpose.msra.mxu0 0.0
      %257 = vmatprep.mubr.f32.mxu0 0.0
      %258 = vmatmul.mubr.f32.gmra.mrb[0].mxu0 %v188
      %v259 = vpop.f32.mrb[0].mxu0
      %v260 = vadd.f32 0.0, %v259
      %v261 = vpop.f32.mrb[0].mxu0
      %262 = vdwg.mxu0
      %v263 = vmul.f32 %v260, 0.35355338
      %v264 = vadd.f32 %v263, %v185
      %v265 = vsel %vm186, %v264, -inf
      %266 = vmax.xlane.f32.xlu0 %v265
      %v267 = vpop.xlane.xlu0 %266
      %v268 = vsub.f32 %v264, %v267
      %v269 = vmul.f32 %v268, 1.442695
      %v270 = vpow.pop %v269
      %v271 = vsel %vm186, %v270, 0.0
      %272 = vadd.xlane.f32.xlu0 %v271
      %v273 = vpop.xlane.xlu0 %272
      %v274 = vrcp.pop %v273
      %v275 = vmul.f32 %v270, %v274
      %276 = vrot.lane.b32.xlu0 %v184, 96
      %v277 = vpop.permute.xlu0 %276
      %v280 = vsel %vm186, %v275, 0
      %282 = vmatprep.subr.mxu0 0.0
      %283 = vmatpush1.msra.mxu0 %v277
      %284 = vmatprep.subr.mxu0 0.0
      %285 = vmatpush1.msra.mxu0 0.0
      %286 = vmatprep.subr.mxu0 0.0
      %287 = vmatpush1.msra.mxu0 0.0
      %288 = vmatprep.subr.mxu0 0.0
      %289 = vmatpush1.msra.mxu0 0.0
      %290 = vmatprep.subr.mxu0 0.0
      %291 = vmatpush1.msra.mxu0 0.0
      %292 = vmatprep.subr.mxu0 0.0
      %293 = vmatpush1.msra.mxu0 0.0
      %294 = vmatprep.subr.mxu0 0.0
      %295 = vmatpush1.msra.mxu0 0.0
      %296 = vmatprep.subr.mxu0 0.0
      %297 = vmatpush1.msra.mxu0 0.0
      %298 = vmatprep.subr.mxu0 0.0
      %299 = vmatpush1.msra.mxu0 0.0
      %300 = vmatprep.subr.mxu0 0.0
      %301 = vmatpush1.msra.mxu0 0.0
      %302 = vmatprep.subr.mxu0 0.0
      %303 = vmatpush1.msra.mxu0 0.0
      %304 = vmatprep.subr.mxu0 0.0
      %305 = vmatpush1.msra.mxu0 0.0
      %306 = vmatprep.subr.mxu0 0.0
      %307 = vmatpush1.msra.mxu0 0.0
      %308 = vmatprep.subr.mxu0 0.0
      %309 = vmatpush1.msra.mxu0 0.0
      %310 = vmatprep.subr.mxu0 0.0
      %311 = vmatpush1.msra.mxu0 0.0
      %312 = vmatprep.subr.mxu0 0.0
      %313 = vmatpush1.msra.mxu0 0.0
      %314 = vmatprep.subr.mxu0 0.0
      %315 = vmatpush1.msra.mxu0 0.0
      %316 = vmatprep.subr.mxu0 0.0
      %317 = vmatpush1.msra.mxu0 0.0
      %318 = vmatprep.subr.mxu0 0.0
      %319 = vmatpush1.msra.mxu0 0.0
      %320 = vmatprep.subr.mxu0 0.0
      %321 = vmatpush1.msra.mxu0 0.0
      %322 = vmatprep.subr.mxu0 0.0
      %323 = vmatpush1.msra.mxu0 0.0
      %324 = vmatprep.subr.mxu0 0.0
      %325 = vmatpush1.msra.mxu0 0.0
      %326 = vmatprep.subr.mxu0 0.0
      %327 = vmatpush1.msra.mxu0 0.0
      %328 = vmatprep.subr.mxu0 0.0
      %329 = vmatpush1.msra.mxu0 0.0
      %330 = vmatprep.subr.mxu0 0.0
      %331 = vmatpush1.msra.mxu0 0.0
      %332 = vmatprep.subr.mxu0 0.0
      %333 = vmatpush1.msra.mxu0 0.0
      %334 = vmatprep.subr.mxu0 0.0
      %335 = vmatpush1.msra.mxu0 0.0
      %336 = vmatprep.subr.mxu0 0.0
      %337 = vmatpush1.msra.mxu0 0.0
      %338 = vmatprep.subr.mxu0 0.0
      %339 = vmatpush1.msra.mxu0 0.0
      %340 = vmatprep.subr.mxu0 0.0
      %341 = vmatpush1.msra.mxu0 0.0
      %342 = vmatprep.subr.mxu0 0.0
      %343 = vmatpush1.msra.mxu0 0.0
      %344 = vmatprep.subr.mxu0 0.0
      %345 = vmatpush1.msra.mxu0 0.0
      %346 = vmatprep.mubr.f32.mxu0 0.0
      %347 = vmatmul.mubr.f32.gmra.mrb[0].mxu0 %v280
      %v348 = vpop.f32.mrb[0].mxu0
      %v349 = vadd.f32 0.0, %v348
      %v350 = vpop.f32.mrb[0].mxu0
      %351 = vdwg.mxu0
      %352 = vrot.lane.b32.xlu0 %v183, 120
      %v353 = vpop.permute.xlu0 %352
      %354 = vrot.lane.b32.xlu0 %v184, 120
      %v355 = vpop.permute.xlu0 %354
      %v356 = vsel %vm186, %v353, 0
      %v358 = vsel %vm186, %v355, 0
      %360 = vmatprep.subr.mxu0 0.0
      %361 = vmatpush1.xpose.msra.mxu0 %v358
      %362 = vmatprep.subr.mxu0 0.0
      %363 = vmatpush1.xpose.msra.mxu0 0.0
      %364 = vmatprep.subr.mxu0 0.0
      %365 = vmatpush1.xpose.msra.mxu0 0.0
      %366 = vmatprep.subr.mxu0 0.0
      %367 = vmatpush1.xpose.msra.mxu0 0.0
      %368 = vmatprep.subr.mxu0 0.0
      %369 = vmatpush1.xpose.msra.mxu0 0.0
      %370 = vmatprep.subr.mxu0 0.0
      %371 = vmatpush1.xpose.msra.mxu0 0.0
      %372 = vmatprep.subr.mxu0 0.0
      %373 = vmatpush1.xpose.msra.mxu0 0.0
      %374 = vmatprep.subr.mxu0 0.0
      %375 = vmatpush1.xpose.msra.mxu0 0.0
      %376 = vmatprep.subr.mxu0 0.0
      %377 = vmatpush1.xpose.msra.mxu0 0.0
      %378 = vmatprep.subr.mxu0 0.0
      %379 = vmatpush1.xpose.msra.mxu0 0.0
      %380 = vmatprep.subr.mxu0 0.0
      %381 = vmatpush1.xpose.msra.mxu0 0.0
      %382 = vmatprep.subr.mxu0 0.0
      %383 = vmatpush1.xpose.msra.mxu0 0.0
      %384 = vmatprep.subr.mxu0 0.0
      %385 = vmatpush1.xpose.msra.mxu0 0.0
      %386 = vmatprep.subr.mxu0 0.0
      %387 = vmatpush1.xpose.msra.mxu0 0.0
      %388 = vmatprep.subr.mxu0 0.0
      %389 = vmatpush1.xpose.msra.mxu0 0.0
      %390 = vmatprep.subr.mxu0 0.0
      %391 = vmatpush1.xpose.msra.mxu0 0.0
      %392 = vmatprep.subr.mxu0 0.0
      %393 = vmatpush1.xpose.msra.mxu0 0.0
      %394 = vmatprep.subr.mxu0 0.0
      %395 = vmatpush1.xpose.msra.mxu0 0.0
      %396 = vmatprep.subr.mxu0 0.0
      %397 = vmatpush1.xpose.msra.mxu0 0.0
      %398 = vmatprep.subr.mxu0 0.0
      %399 = vmatpush1.xpose.msra.mxu0 0.0
      %400 = vmatprep.subr.mxu0 0.0
      %401 = vmatpush1.xpose.msra.mxu0 0.0
      %402 = vmatprep.subr.mxu0 0.0
      %403 = vmatpush1.xpose.msra.mxu0 0.0
      %404 = vmatprep.subr.mxu0 0.0
      %405 = vmatpush1.xpose.msra.mxu0 0.0
      %406 = vmatprep.subr.mxu0 0.0
      %407 = vmatpush1.xpose.msra.mxu0 0.0
      %408 = vmatprep.subr.mxu0 0.0
      %409 = vmatpush1.xpose.msra.mxu0 0.0
      %410 = vmatprep.subr.mxu0 0.0
      %411 = vmatpush1.xpose.msra.mxu0 0.0
      %412 = vmatprep.subr.mxu0 0.0
      %413 = vmatpush1.xpose.msra.mxu0 0.0
      %414 = vmatprep.subr.mxu0 0.0
      %415 = vmatpush1.xpose.msra.mxu0 0.0
      %416 = vmatprep.subr.mxu0 0.0
      %417 = vmatpush1.xpose.msra.mxu0 0.0
      %418 = vmatprep.subr.mxu0 0.0
      %419 = vmatpush1.xpose.msra.mxu0 0.0
      %420 = vmatprep.subr.mxu0 0.0
      %421 = vmatpush1.xpose.msra.mxu0 0.0
      %422 = vmatprep.subr.mxu0 0.0
      %423 = vmatpush1.xpose.msra.mxu0 0.0
      %424 = vmatprep.mubr.f32.mxu0 0.0
      %425 = vmatmul.mubr.f32.gmra.mrb[0].mxu0 %v356
      %v426 = vpop.f32.mrb[0].mxu0
      %v427 = vadd.f32 0.0, %v426
      %v428 = vpop.f32.mrb[0].mxu0
      %429 = vdwg.mxu0
      %v430 = vmul.f32 %v427, 0.35355338
      %v431 = vadd.f32 %v430, %v185
      %v432 = vsel %vm186, %v431, -inf
      %433 = vmax.xlane.f32.xlu0 %v432
      %v434 = vpop.xlane.xlu0 %433
      %v435 = vsub.f32 %v431, %v434
      %v436 = vmul.f32 %v435, 1.442695
      %v437 = vpow.pop %v436
      %v438 = vsel %vm186, %v437, 0.0
      %439 = vadd.xlane.f32.xlu0 %v438
      %v440 = vpop.xlane.xlu0 %439
      %v441 = vrcp.pop %v440
      %v442 = vmul.f32 %v437, %v441
      %443 = vrot.lane.b32.xlu0 %v184, 88
      %v444 = vpop.permute.xlu0 %443
      %v447 = vsel %vm186, %v442, 0
      %449 = vmatprep.subr.mxu0 0.0
      %450 = vmatpush1.msra.mxu0 %v444
      %451 = vmatprep.subr.mxu0 0.0
      %452 = vmatpush1.msra.mxu0 0.0
      %453 = vmatprep.subr.mxu0 0.0
      %454 = vmatpush1.msra.mxu0 0.0
      %455 = vmatprep.subr.mxu0 0.0
      %456 = vmatpush1.msra.mxu0 0.0
      %457 = vmatprep.subr.mxu0 0.0
      %458 = vmatpush1.msra.mxu0 0.0
      %459 = vmatprep.subr.mxu0 0.0
      %460 = vmatpush1.msra.mxu0 0.0
      %461 = vmatprep.subr.mxu0 0.0
      %462 = vmatpush1.msra.mxu0 0.0
      %463 = vmatprep.subr.mxu0 0.0
      %464 = vmatpush1.msra.mxu0 0.0
      %465 = vmatprep.subr.mxu0 0.0
      %466 = vmatpush1.msra.mxu0 0.0
      %467 = vmatprep.subr.mxu0 0.0
      %468 = vmatpush1.msra.mxu0 0.0
      %469 = vmatprep.subr.mxu0 0.0
      %470 = vmatpush1.msra.mxu0 0.0
      %471 = vmatprep.subr.mxu0 0.0
      %472 = vmatpush1.msra.mxu0 0.0
      %473 = vmatprep.subr.mxu0 0.0
      %474 = vmatpush1.msra.mxu0 0.0
      %475 = vmatprep.subr.mxu0 0.0
      %476 = vmatpush1.msra.mxu0 0.0
      %477 = vmatprep.subr.mxu0 0.0
      %478 = vmatpush1.msra.mxu0 0.0
      %479 = vmatprep.subr.mxu0 0.0
      %480 = vmatpush1.msra.mxu0 0.0
      %481 = vmatprep.subr.mxu0 0.0
      %482 = vmatpush1.msra.mxu0 0.0
      %483 = vmatprep.subr.mxu0 0.0
      %484 = vmatpush1.msra.mxu0 0.0
      %485 = vmatprep.subr.mxu0 0.0
      %486 = vmatpush1.msra.mxu0 0.0
      %487 = vmatprep.subr.mxu0 0.0
      %488 = vmatpush1.msra.mxu0 0.0
      %489 = vmatprep.subr.mxu0 0.0
      %490 = vmatpush1.msra.mxu0 0.0
      %491 = vmatprep.subr.mxu0 0.0
      %492 = vmatpush1.msra.mxu0 0.0
      %493 = vmatprep.subr.mxu0 0.0
      %494 = vmatpush1.msra.mxu0 0.0
      %495 = vmatprep.subr.mxu0 0.0
      %496 = vmatpush1.msra.mxu0 0.0
      %497 = vmatprep.subr.mxu0 0.0
      %498 = vmatpush1.msra.mxu0 0.0
      %499 = vmatprep.subr.mxu0 0.0
      %500 = vmatpush1.msra.mxu0 0.0
      %501 = vmatprep.subr.mxu0 0.0
      %502 = vmatpush1.msra.mxu0 0.0
      %503 = vmatprep.subr.mxu0 0.0
      %504 = vmatpush1.msra.mxu0 0.0
      %505 = vmatprep.subr.mxu0 0.0
      %506 = vmatpush1.msra.mxu0 0.0
      %507 = vmatprep.subr.mxu0 0.0
      %508 = vmatpush1.msra.mxu0 0.0
      %509 = vmatprep.subr.mxu0 0.0
      %510 = vmatpush1.msra.mxu0 0.0
      %511 = vmatprep.subr.mxu0 0.0
      %512 = vmatpush1.msra.mxu0 0.0
      %513 = vmatprep.mubr.f32.mxu0 0.0
      %514 = vmatmul.mubr.f32.gmra.mrb[0].mxu0 %v447
      %v515 = vpop.f32.mrb[0].mxu0
      %v516 = vadd.f32 0.0, %v515
      %v517 = vpop.f32.mrb[0].mxu0
      %518 = vdwg.mxu0
      %519 = vrot.lane.b32.xlu0 %v183, 112
      %v520 = vpop.permute.xlu0 %519
      %521 = vrot.lane.b32.xlu0 %v184, 112
      %v522 = vpop.permute.xlu0 %521
      %v523 = vsel %vm186, %v520, 0
      %v525 = vsel %vm186, %v522, 0
      %527 = vmatprep.subr.mxu0 0.0
      %528 = vmatpush1.xpose.msra.mxu0 %v525
      %529 = vmatprep.subr.mxu0 0.0
      %530 = vmatpush1.xpose.msra.mxu0 0.0
      %531 = vmatprep.subr.mxu0 0.0
      %532 = vmatpush1.xpose.msra.mxu0 0.0
      %533 = vmatprep.subr.mxu0 0.0
      %534 = vmatpush1.xpose.msra.mxu0 0.0
      %535 = vmatprep.subr.mxu0 0.0
      %536 = vmatpush1.xpose.msra.mxu0 0.0
      %537 = vmatprep.subr.mxu0 0.0
      %538 = vmatpush1.xpose.msra.mxu0 0.0
      %539 = vmatprep.subr.mxu0 0.0
      %540 = vmatpush1.xpose.msra.mxu0 0.0
      %541 = vmatprep.subr.mxu0 0.0
      %542 = vmatpush1.xpose.msra.mxu0 0.0
      %543 = vmatprep.subr.mxu0 0.0
      %544 = vmatpush1.xpose.msra.mxu0 0.0
      %545 = vmatprep.subr.mxu0 0.0
      %546 = vmatpush1.xpose.msra.mxu0 0.0
      %547 = vmatprep.subr.mxu0 0.0
      %548 = vmatpush1.xpose.msra.mxu0 0.0
      %549 = vmatprep.subr.mxu0 0.0
      %550 = vmatpush1.xpose.msra.mxu0 0.0
      %551 = vmatprep.subr.mxu0 0.0
      %552 = vmatpush1.xpose.msra.mxu0 0.0
      %553 = vmatprep.subr.mxu0 0.0
      %554 = vmatpush1.xpose.msra.mxu0 0.0
      %555 = vmatprep.subr.mxu0 0.0
      %556 = vmatpush1.xpose.msra.mxu0 0.0
      %557 = vmatprep.subr.mxu0 0.0
      %558 = vmatpush1.xpose.msra.mxu0 0.0
      %559 = vmatprep.subr.mxu0 0.0
      %560 = vmatpush1.xpose.msra.mxu0 0.0
      %561 = vmatprep.subr.mxu0 0.0
      %562 = vmatpush1.xpose.msra.mxu0 0.0
      %563 = vmatprep.subr.mxu0 0.0
      %564 = vmatpush1.xpose.msra.mxu0 0.0
      %565 = vmatprep.subr.mxu0 0.0
      %566 = vmatpush1.xpose.msra.mxu0 0.0
      %567 = vmatprep.subr.mxu0 0.0
      %568 = vmatpush1.xpose.msra.mxu0 0.0
      %569 = vmatprep.subr.mxu0 0.0
      %570 = vmatpush1.xpose.msra.mxu0 0.0
      %571 = vmatprep.subr.mxu0 0.0
      %572 = vmatpush1.xpose.msra.mxu0 0.0
      %573 = vmatprep.subr.mxu0 0.0
      %574 = vmatpush1.xpose.msra.mxu0 0.0
      %575 = vmatprep.subr.mxu0 0.0
      %576 = vmatpush1.xpose.msra.mxu0 0.0
      %577 = vmatprep.subr.mxu0 0.0
      %578 = vmatpush1.xpose.msra.mxu0 0.0
      %579 = vmatprep.subr.mxu0 0.0
      %580 = vmatpush1.xpose.msra.mxu0 0.0
      %581 = vmatprep.subr.mxu0 0.0
      %582 = vmatpush1.xpose.msra.mxu0 0.0
      %583 = vmatprep.subr.mxu0 0.0
      %584 = vmatpush1.xpose.msra.mxu0 0.0
      %585 = vmatprep.subr.mxu0 0.0
      %586 = vmatpush1.xpose.msra.mxu0 0.0
      %587 = vmatprep.subr.mxu0 0.0
      %588 = vmatpush1.xpose.msra.mxu0 0.0
      %589 = vmatprep.subr.mxu0 0.0
      %590 = vmatpush1.xpose.msra.mxu0 0.0
      %591 = vmatprep.mubr.f32.mxu0 0.0
      %592 = vmatmul.mubr.f32.gmra.mrb[0].mxu0 %v523
      %v593 = vpop.f32.mrb[0].mxu0
      %v594 = vadd.f32 0.0, %v593
      %v595 = vpop.f32.mrb[0].mxu0
      %596 = vdwg.mxu0
      %v597 = vmul.f32 %v594, 0.35355338
      %v598 = vadd.f32 %v597, %v185
      %v599 = vsel %vm186, %v598, -inf
      %600 = vmax.xlane.f32.xlu0 %v599
      %v601 = vpop.xlane.xlu0 %600
      %v602 = vsub.f32 %v598, %v601
      %v603 = vmul.f32 %v602, 1.442695
      %v604 = vpow.pop %v603
      %v605 = vsel %vm186, %v604, 0.0
      %606 = vadd.xlane.f32.xlu0 %v605
      %v607 = vpop.xlane.xlu0 %606
      %v608 = vrcp.pop %v607
      %v609 = vmul.f32 %v604, %v608
      %610 = vrot.lane.b32.xlu0 %v184, 80
      %v611 = vpop.permute.xlu0 %610
      %v614 = vsel %vm186, %v609, 0
      %616 = vmatprep.subr.mxu0 0.0
      %617 = vmatpush1.msra.mxu0 %v611
      %618 = vmatprep.subr.mxu0 0.0
      %619 = vmatpush1.msra.mxu0 0.0
      %620 = vmatprep.subr.mxu0 0.0
      %621 = vmatpush1.msra.mxu0 0.0
      %622 = vmatprep.subr.mxu0 0.0
      %623 = vmatpush1.msra.mxu0 0.0
      %624 = vmatprep.subr.mxu0 0.0
      %625 = vmatpush1.msra.mxu0 0.0
      %626 = vmatprep.subr.mxu0 0.0
      %627 = vmatpush1.msra.mxu0 0.0
      %628 = vmatprep.subr.mxu0 0.0
      %629 = vmatpush1.msra.mxu0 0.0
      %630 = vmatprep.subr.mxu0 0.0
      %631 = vmatpush1.msra.mxu0 0.0
      %632 = vmatprep.subr.mxu0 0.0
      %633 = vmatpush1.msra.mxu0 0.0
      %634 = vmatprep.subr.mxu0 0.0
      %635 = vmatpush1.msra.mxu0 0.0
      %636 = vmatprep.subr.mxu0 0.0
      %637 = vmatpush1.msra.mxu0 0.0
      %638 = vmatprep.subr.mxu0 0.0
      %639 = vmatpush1.msra.mxu0 0.0
      %640 = vmatprep.subr.mxu0 0.0
      %641 = vmatpush1.msra.mxu0 0.0
      %642 = vmatprep.subr.mxu0 0.0
      %643 = vmatpush1.msra.mxu0 0.0
      %644 = vmatprep.subr.mxu0 0.0
      %645 = vmatpush1.msra.mxu0 0.0
      %646 = vmatprep.subr.mxu0 0.0
      %647 = vmatpush1.msra.mxu0 0.0
      %648 = vmatprep.subr.mxu0 0.0
      %649 = vmatpush1.msra.mxu0 0.0
      %650 = vmatprep.subr.mxu0 0.0
      %651 = vmatpush1.msra.mxu0 0.0
      %652 = vmatprep.subr.mxu0 0.0
      %653 = vmatpush1.msra.mxu0 0.0
      %654 = vmatprep.subr.mxu0 0.0
      %655 = vmatpush1.msra.mxu0 0.0
      %656 = vmatprep.subr.mxu0 0.0
      %657 = vmatpush1.msra.mxu0 0.0
      %658 = vmatprep.subr.mxu0 0.0
      %659 = vmatpush1.msra.mxu0 0.0
      %660 = vmatprep.subr.mxu0 0.0
      %661 = vmatpush1.msra.mxu0 0.0
      %662 = vmatprep.subr.mxu0 0.0
      %663 = vmatpush1.msra.mxu0 0.0
      %664 = vmatprep.subr.mxu0 0.0
      %665 = vmatpush1.msra.mxu0 0.0
      %666 = vmatprep.subr.mxu0 0.0
      %667 = vmatpush1.msra.mxu0 0.0
      %668 = vmatprep.subr.mxu0 0.0
      %669 = vmatpush1.msra.mxu0 0.0
      %670 = vmatprep.subr.mxu0 0.0
      %671 = vmatpush1.msra.mxu0 0.0
      %672 = vmatprep.subr.mxu0 0.0
      %673 = vmatpush1.msra.mxu0 0.0
      %674 = vmatprep.subr.mxu0 0.0
      %675 = vmatpush1.msra.mxu0 0.0
      %676 = vmatprep.subr.mxu0 0.0
      %677 = vmatpush1.msra.mxu0 0.0
      %678 = vmatprep.subr.mxu0 0.0
      %679 = vmatpush1.msra.mxu0 0.0
      %680 = vmatprep.mubr.f32.mxu0 0.0
      %681 = vmatmul.mubr.f32.gmra.mrb[0].mxu0 %v614
      %v682 = vpop.f32.mrb[0].mxu0
      %v683 = vadd.f32 0.0, %v682
      %v684 = vpop.f32.mrb[0].mxu0
      %685 = vdwg.mxu0
      %686 = vrot.lane.b32.xlu0 %v183, 104
      %v687 = vpop.permute.xlu0 %686
      %688 = vrot.lane.b32.xlu0 %v184, 104
      %v689 = vpop.permute.xlu0 %688
      %v690 = vsel %vm186, %v687, 0
      %v692 = vsel %vm186, %v689, 0
      %694 = vmatprep.subr.mxu0 0.0
      %695 = vmatpush1.xpose.msra.mxu0 %v692
      %696 = vmatprep.subr.mxu0 0.0
      %697 = vmatpush1.xpose.msra.mxu0 0.0
      %698 = vmatprep.subr.mxu0 0.0
      %699 = vmatpush1.xpose.msra.mxu0 0.0
      %700 = vmatprep.subr.mxu0 0.0
      %701 = vmatpush1.xpose.msra.mxu0 0.0
      %702 = vmatprep.subr.mxu0 0.0
      %703 = vmatpush1.xpose.msra.mxu0 0.0
      %704 = vmatprep.subr.mxu0 0.0
      %705 = vmatpush1.xpose.msra.mxu0 0.0
      %706 = vmatprep.subr.mxu0 0.0
      %707 = vmatpush1.xpose.msra.mxu0 0.0
      %708 = vmatprep.subr.mxu0 0.0
      %709 = vmatpush1.xpose.msra.mxu0 0.0
      %710 = vmatprep.subr.mxu0 0.0
      %711 = vmatpush1.xpose.msra.mxu0 0.0
      %712 = vmatprep.subr.mxu0 0.0
      %713 = vmatpush1.xpose.msra.mxu0 0.0
      %714 = vmatprep.subr.mxu0 0.0
      %715 = vmatpush1.xpose.msra.mxu0 0.0
      %716 = vmatprep.subr.mxu0 0.0
      %717 = vmatpush1.xpose.msra.mxu0 0.0
      %718 = vmatprep.subr.mxu0 0.0
      %719 = vmatpush1.xpose.msra.mxu0 0.0
      %720 = vmatprep.subr.mxu0 0.0
      %721 = vmatpush1.xpose.msra.mxu0 0.0
      %722 = vmatprep.subr.mxu0 0.0
      %723 = vmatpush1.xpose.msra.mxu0 0.0
      %724 = vmatprep.subr.mxu0 0.0
      %725 = vmatpush1.xpose.msra.mxu0 0.0
      %726 = vmatprep.subr.mxu0 0.0
      %727 = vmatpush1.xpose.msra.mxu0 0.0
      %728 = vmatprep.subr.mxu0 0.0
      %729 = vmatpush1.xpose.msra.mxu0 0.0
      %730 = vmatprep.subr.mxu0 0.0
      %731 = vmatpush1.xpose.msra.mxu0 0.0
      %732 = vmatprep.subr.mxu0 0.0
      %733 = vmatpush1.xpose.msra.mxu0 0.0
      %734 = vmatprep.subr.mxu0 0.0
      %735 = vmatpush1.xpose.msra.mxu0 0.0
      %736 = vmatprep.subr.mxu0 0.0
      %737 = vmatpush1.xpose.msra.mxu0 0.0
      %738 = vmatprep.subr.mxu0 0.0
      %739 = vmatpush1.xpose.msra.mxu0 0.0
      %740 = vmatprep.subr.mxu0 0.0
      %741 = vmatpush1.xpose.msra.mxu0 0.0
      %742 = vmatprep.subr.mxu0 0.0
      %743 = vmatpush1.xpose.msra.mxu0 0.0
      %744 = vmatprep.subr.mxu0 0.0
      %745 = vmatpush1.xpose.msra.mxu0 0.0
      %746 = vmatprep.subr.mxu0 0.0
      %747 = vmatpush1.xpose.msra.mxu0 0.0
      %748 = vmatprep.subr.mxu0 0.0
      %749 = vmatpush1.xpose.msra.mxu0 0.0
      %750 = vmatprep.subr.mxu0 0.0
      %751 = vmatpush1.xpose.msra.mxu0 0.0
      %752 = vmatprep.subr.mxu0 0.0
      %753 = vmatpush1.xpose.msra.mxu0 0.0
      %754 = vmatprep.subr.mxu0 0.0
      %755 = vmatpush1.xpose.msra.mxu0 0.0
      %756 = vmatprep.subr.mxu0 0.0
      %757 = vmatpush1.xpose.msra.mxu0 0.0
      %758 = vmatprep.mubr.f32.mxu0 0.0
      %759 = vmatmul.mubr.f32.gmra.mrb[0].mxu0 %v690
      %v760 = vpop.f32.mrb[0].mxu0
      %v761 = vadd.f32 0.0, %v760
      %v762 = vpop.f32.mrb[0].mxu0
      %763 = vdwg.mxu0
      %v764 = vmul.f32 %v761, 0.35355338
      %v765 = vadd.f32 %v764, %v185
      %v766 = vsel %vm186, %v765, -inf
      %767 = vmax.xlane.f32.xlu0 %v766
      %v768 = vpop.xlane.xlu0 %767
      %v769 = vsub.f32 %v765, %v768
      %v770 = vmul.f32 %v769, 1.442695
      %v771 = vpow.pop %v770
      %v772 = vsel %vm186, %v771, 0.0
      %773 = vadd.xlane.f32.xlu0 %v772
      %v774 = vpop.xlane.xlu0 %773
      %v775 = vrcp.pop %v774
      %v776 = vmul.f32 %v771, %v775
      %777 = vrot.lane.b32.xlu0 %v184, 72
      %v778 = vpop.permute.xlu0 %777
      %v781 = vsel %vm186, %v776, 0
      %783 = vmatprep.subr.mxu0 0.0
      %784 = vmatpush1.msra.mxu0 %v778
      %785 = vmatprep.subr.mxu0 0.0
      %786 = vmatpush1.msra.mxu0 0.0
      %787 = vmatprep.subr.mxu0 0.0
      %788 = vmatpush1.msra.mxu0 0.0
      %789 = vmatprep.subr.mxu0 0.0
      %790 = vmatpush1.msra.mxu0 0.0
      %791 = vmatprep.subr.mxu0 0.0
      %792 = vmatpush1.msra.mxu0 0.0
      %793 = vmatprep.subr.mxu0 0.0
      %794 = vmatpush1.msra.mxu0 0.0
      %795 = vmatprep.subr.mxu0 0.0
      %796 = vmatpush1.msra.mxu0 0.0
      %797 = vmatprep.subr.mxu0 0.0
      %798 = vmatpush1.msra.mxu0 0.0
      %799 = vmatprep.subr.mxu0 0.0
      %800 = vmatpush1.msra.mxu0 0.0
      %801 = vmatprep.subr.mxu0 0.0
      %802 = vmatpush1.msra.mxu0 0.0
      %803 = vmatprep.subr.mxu0 0.0
      %804 = vmatpush1.msra.mxu0 0.0
      %805 = vmatprep.subr.mxu0 0.0
      %806 = vmatpush1.msra.mxu0 0.0
      %807 = vmatprep.subr.mxu0 0.0
      %808 = vmatpush1.msra.mxu0 0.0
      %809 = vmatprep.subr.mxu0 0.0
      %810 = vmatpush1.msra.mxu0 0.0
      %811 = vmatprep.subr.mxu0 0.0
      %812 = vmatpush1.msra.mxu0 0.0
      %813 = vmatprep.subr.mxu0 0.0
      %814 = vmatpush1.msra.mxu0 0.0
      %815 = vmatprep.subr.mxu0 0.0
      %816 = vmatpush1.msra.mxu0 0.0
      %817 = vmatprep.subr.mxu0 0.0
      %818 = vmatpush1.msra.mxu0 0.0
      %819 = vmatprep.subr.mxu0 0.0
      %820 = vmatpush1.msra.mxu0 0.0
      %821 = vmatprep.subr.mxu0 0.0
      %822 = vmatpush1.msra.mxu0 0.0
      %823 = vmatprep.subr.mxu0 0.0
      %824 = vmatpush1.msra.mxu0 0.0
      %825 = vmatprep.subr.mxu0 0.0
      %826 = vmatpush1.msra.mxu0 0.0
      %827 = vmatprep.subr.mxu0 0.0
      %828 = vmatpush1.msra.mxu0 0.0
      %829 = vmatprep.subr.mxu0 0.0
      %830 = vmatpush1.msra.mxu0 0.0
      %831 = vmatprep.subr.mxu0 0.0
      %832 = vmatpush1.msra.mxu0 0.0
      %833 = vmatprep.subr.mxu0 0.0
      %834 = vmatpush1.msra.mxu0 0.0
      %835 = vmatprep.subr.mxu0 0.0
      %836 = vmatpush1.msra.mxu0 0.0
      %837 = vmatprep.subr.mxu0 0.0
      %838 = vmatpush1.msra.mxu0 0.0
      %839 = vmatprep.subr.mxu0 0.0
      %840 = vmatpush1.msra.mxu0 0.0
      %841 = vmatprep.subr.mxu0 0.0
      %842 = vmatpush1.msra.mxu0 0.0
      %843 = vmatprep.subr.mxu0 0.0
      %844 = vmatpush1.msra.mxu0 0.0
      %845 = vmatprep.subr.mxu0 0.0
      %846 = vmatpush1.msra.mxu0 0.0
      %847 = vmatprep.mubr.f32.mxu0 0.0
      %848 = vmatmul.mubr.f32.gmra.mrb[0].mxu0 %v781
      %v849 = vpop.f32.mrb[0].mxu0
      %v850 = vadd.f32 0.0, %v849
      %v851 = vpop.f32.mrb[0].mxu0
      %852 = vdwg.mxu0
      %854 = vrot.lane.b32.xlu0 %v516, 8
      %v855 = vpop.permute.xlu0 %854
      %858 = vrot.lane.b32.xlu0 %v683, 16
      %v859 = vpop.permute.xlu0 %858
      %862 = vrot.lane.b32.xlu0 %v850, 24
      %v863 = vpop.permute.xlu0 %862
      %v865 = vsel %vm186, %v349, %v855
      %vm866 = vcmask 130048
      %v867 = vsel %vm866, %v865, %v859
      %vm868 = vcmask 195584
      %v869 = vsel %vm868, %v867, %v863
      %vm870 = vcmask 261120
      %871 = vst.msk [vmem:[%s182] sm:$0xff] %vm870, %v869
      %p872 = scmp.lt.s32.totalorder %s14, 1
      %s873 = scalar_select %p872, %s14, 1
      %s874 = smul.addr %s873, 8
      %s875 = scalar_lea.vmem %s3, %s874
      // Predicated region
      $region33: #{decoder_layer.13} parent=31 // pred_check
        %p876 = pneg %p105
      $region34: #{decoder_layer.13} parent=31 // pred_check_branch
        %878 = sbr.rel (%p876) target = $region36
      $region35: #{decoder_layer.13} parent=31 // pred_region
        _
      $region36: #{decoder_layer.13} parent=31 // pred_fallthru
        _
    $region32: #{decoder_layer.13} parent=5 // pred_fallthru
      _
    %p879 = scmp.le.s32.totalorder 2, %s9
    // Predicated region
    $region37: #{decoder_layer.13} parent=5 // pred_check
      %p880 = pneg %p879
    $region38: #{decoder_layer.13} parent=5 // pred_check_branch
      %882 = sbr.rel (%p880) target = $region40
    $region39: #{decoder_layer.13} parent=5 // pred_region
      %s883 = ssub.s32 %s9, 2
      // Predicated region
      $region41: #{decoder_layer.13} parent=39 // pred_check
        %p884 = pneg %p111
      $region42: #{decoder_layer.13} parent=39 // pred_check_branch
        %886 = sbr.rel (%p884) target = $region44
      $region43: #{decoder_layer.13} parent=39 // pred_region
        %p887 = scmp.lt.s32.totalorder %s15, 1
        %s888 = scalar_select %p887, %s15, 1
        %s889 = smul.addr %s888, 8
        %s890 = scalar_lea.vmem %s3, %s889
      $region44: #{decoder_layer.13} parent=39 // pred_fallthru
        _
    $region40: #{decoder_layer.13} parent=5 // pred_fallthru
      _
  $region6: #{decoder_layer.13} parent=0 // loop_footer
    %s13 = sadd.s32 1, %s9
  $region7: #{decoder_layer.13} parent=0 // loop_footer_branch
    %8 = sbr.rel target = $region3
  $region8: #{decoder_layer.13} parent=0 // loop_exit
    _

</llo_original>
